<compile_context>
chip_gen: v7x
topology: tpu7x:2x2x1
jax: 0.10.0
libtpu: 0.0.40
codegen_flags: <defaults>
</compile_context>

<pallas_src>
import numpy as np
import jax
import jax.numpy as jnp
from jax import lax
from jax.experimental import pallas as pl
from jax.experimental.pallas import tpu as pltpu


# Matmul precision for the 6 in-kernel dots.  HIGHEST is kept so the fused
# kernel still matches the f32 reference at rtol/atol=2e-3; with a relaxed
# tolerance this can be dropped to lax.Precision.DEFAULT (1 MXU pass) --
# the kernel is dispatch/HBM bound at these sizes, so it is not the
# bottleneck either way.
MATMUL_PRECISION = lax.Precision.HIGHEST


# ----------------------------- in-kernel helpers -----------------------------

def _im2col(x, K, W_seg):
    """Build the (K*Cin, L) im2col stack for a zero-padded 'same' Conv1d.

    x is (Cin, L) with L = B*W_seg: B independent length-W_seg segments laid
    back to back along the lane axis.  Each tap is a lane roll of the INPUT
    plus a per-segment edge mask, so zero padding never leaks across batch
    segments.
    """
    Cin, L = x.shape
    P = K // 2
    col = lax.broadcasted_iota(jnp.int32, (Cin, L), 1) % W_seg
    pieces = []
    for t in range(K):                       # K is small & static
        s = t - P                            # input offset of this tap
        if s == 0:
            pieces.append(x)
        else:
            shifted = pltpu.roll(x, (-s) % L, 1)     # shifted[:, l] = x[:, l+s]
            valid = jnp.logical_and(col + s >= 0, col + s < W_seg)
            pieces.append(jnp.where(valid, shifted, 0.0))
    return jnp.concatenate(pieces, axis=0)   # rows ordered (tap, cin)


def _conv_layer(x, w_ref, b_ref, K, W_seg):
    """'same' Conv1d over the B concatenated segments as ONE MXU matmul."""
    cols = _im2col(x, K, W_seg)                                   # (K*Cin, L)
    y = jnp.dot(w_ref[...], cols, preferred_element_type=jnp.float32,
                precision=MATMUL_PRECISION)                       # (Cout, L)
    return y + b_ref[...]                    # (Cout,1) broadcast over lanes


def _freqflow_kernel(ph_ref, am_ref,
                     w1p_ref, b1p_ref, w2p_ref, b2p_ref,
                     w1a_ref, b1a_ref, w2a_ref, b2a_ref,
                     dft_ref, out_ref):
    B, F, W = ph_ref.shape
    K = w1p_ref.shape[1] // F                # w1 packed as (MID, K*F)

    # Fold the batch into the lane axis -> all matmuls below cover the whole
    # batch in a single instruction stream with 256 output lanes.
    ph = jnp.concatenate([ph_ref[b] for b in range(B)], axis=-1)  # (F, B*W)
    am = jnp.concatenate([am_ref[b] for b in range(B)], axis=-1)  # (F, B*W)

    def branch(x, w1, b1, w2, b2):
        h = jnp.maximum(_conv_layer(x, w1, b1, K, W), 0.0)        # ReLU
        return _conv_layer(h, w2, b2, K, W)

    rp = branch(ph, w1p_ref, b1p_ref, w2p_ref, b2p_ref)           # (F, B*W)
    ra = branch(am, w1a_ref, b1a_ref, w2a_ref, b2a_ref)           # (F, B*W)

    # make_complex: cos/sin run in-kernel on the EUP (fused, no HBM trip).
    R = ra * jnp.cos(rp)                     # real part of refined spectrum
    I = ra * jnp.sin(rp)                     # imag part

    dft = dft_ref[...]                       # (2W, 2W) = [[cos, sin],[-sin, cos]]
    inv_w = jnp.float32(1.0 / W)             # ifft norm='backward' scaling
    for b in range(B):                       # B is small & static
        lo = b * W
        lhs = jnp.concatenate([R[:, lo:lo + W], I[:, lo:lo + W]], axis=-1)
        y = jnp.dot(lhs, dft, preferred_element_type=jnp.float32,
                    precision=MATMUL_PRECISION)                   # (F, 2W)
        re = y[:, :W] * inv_w
        im = y[:, W:] * inv_w
        out_ref[b] = jnp.sqrt(re * re + im * im)                  # lane-dense store


# ------------------------------ pallas wrapper --------------------------------

def _full_spec(shape):
    nd = len(shape)
    return pl.BlockSpec(shape, lambda i, _nd=nd: (0,) * _nd)


_WEIGHT_NAMES = ("w1p", "b1p", "w2p", "b2p", "w1a", "b1a", "w2a", "b2a")


def frequency_flow_pallas(phase, amplitude, kp, dft):
    B, F, W = phase.shape
    return pl.pallas_call(
        _freqflow_kernel,
        out_shape=jax.ShapeDtypeStruct((B, F, W), jnp.float32),
        grid=(1,),                           # whole problem in one grid step
        in_specs=[_full_spec((B, F, W)), _full_spec((B, F, W))]
                 + [_full_spec(tuple(kp[n].shape)) for n in _WEIGHT_NAMES]
                 + [_full_spec(tuple(dft.shape))],
        out_specs=_full_spec((B, F, W)),
    )(phase, amplitude, *[kp[n] for n in _WEIGHT_NAMES], dft)


def frequency_flow_forward(x, kernel_params, dft):
    # TODO(synk): forward torch.fft.fft / torch.angle / torch.abs stay in JAX
    # (no Pallas FFT / atan2); everything downstream runs in one fused kernel.
    freq = jnp.fft.fft(x.astype(jnp.float32), axis=2)
    phase = jnp.angle(freq).astype(jnp.float32)
    amplitude = jnp.abs(freq).astype(jnp.float32)
    return frequency_flow_pallas(phase, amplitude, kernel_params, dft)


# ----------------------------- params / constants -----------------------------

def init_params(key, feature_num, mid_channel, kernel_size):
    """PyTorch-layout Conv1d params: weight (Cout, Cin, K), bias (Cout,)."""
    def conv_init(k, cout, cin, ks):
        kw, kb = jax.random.split(k)
        bound = 1.0 / np.sqrt(cin * ks)
        w = jax.random.uniform(kw, (cout, cin, ks), jnp.float32, -bound, bound)
        b = jax.random.uniform(kb, (cout,), jnp.float32, -bound, bound)
        return w, b

    k1, k2, k3, k4 = jax.random.split(key, 4)
    w1p, b1p = conv_init(k1, mid_channel, feature_num, kernel_size)
    w2p, b2p = conv_init(k2, feature_num, mid_channel, kernel_size)
    w1a, b1a = conv_init(k3, mid_channel, feature_num, kernel_size)
    w2a, b2a = conv_init(k4, feature_num, mid_channel, kernel_size)
    return dict(w1p=w1p, b1p=b1p, w2p=w2p, b2p=b2p,
                w1a=w1a, b1a=b1a, w2a=w2a, b2a=b2a)


def pack_params(p):
    """(Cout, Cin, K) -> (Cout, K*Cin) im2col weight; bias -> (Cout, 1)."""
    out = {}
    for n in ("w1p", "w2p", "w1a", "w2a"):
        w = p[n]
        cout, cin, k = w.shape
        out[n] = jnp.transpose(w, (0, 2, 1)).reshape(cout, k * cin)
    for n in ("b1p", "b2p", "b1a", "b2a"):
        out[n] = p[n].reshape(-1, 1)
    return out


def make_idft_mat(W):
    """Combined (2W, 2W) inverse-DFT matrix [[cos, sin], [-sin, cos]].

    [R | I] @ M gives [re*W | im*W] for ifft with norm='backward'.
    """
    k = np.arange(W, dtype=np.float64)
    theta = 2.0 * np.pi * (np.outer(k, k) % W) / W
    c, s = np.cos(theta), np.sin(theta)
    top = np.concatenate([c, s], axis=1)
    bot = np.concatenate([-s, c], axis=1)
    return jnp.asarray(np.concatenate([top, bot], axis=0), jnp.float32)


# --------------------------------- reference ----------------------------------

def reference_forward(x, params, kernel_size):
    P = kernel_size // 2

    def conv(inp, w, b):
        y = lax.conv_general_dilated(inp, w, (1,), [(P, P)],
                                     dimension_numbers=("NCH", "OIH", "NCH"),
                                     precision=lax.Precision.HIGHEST)
        return y + b.reshape(1, -1, 1)

    freq = jnp.fft.fft(x, axis=2)
    phase = jnp.angle(freq)
    amp = jnp.abs(freq)
    rp = conv(jax.nn.relu(conv(phase, params["w1p"], params["b1p"])),
              params["w2p"], params["b2p"])
    ra = conv(jax.nn.relu(conv(amp, params["w1a"], params["b1a"])),
              params["w2a"], params["b2a"])
    spec = lax.complex(ra * jnp.cos(rp), ra * jnp.sin(rp))
    return jnp.abs(jnp.fft.ifft(spec, axis=2))


# ------------------------------------ main -------------------------------------

if __name__ == "__main__":
    B, F, W = 2, 8, 128          # batch, feature_num, window_size
    MID, K = 16, 3               # mid_channel, kernel_size (odd -> 'same' conv)

    key = jax.random.PRNGKey(0)
    kx, kp = jax.random.split(key)
    x = jax.random.normal(kx, (B, F, W), jnp.float32)
    params = init_params(kp, F, MID, K)
    kparams = pack_params(params)
    dft = make_idft_mat(W)

    out = jax.block_until_ready(frequency_flow_forward(x, kparams, dft))
    ref = jax.block_until_ready(reference_forward(x, params, K))

    assert out.shape == (B, F, W) and out.dtype == jnp.float32
    if not np.allclose(np.asarray(out), np.asarray(ref), rtol=2e-3, atol=2e-3):
        max_err = float(jnp.max(jnp.abs(out - ref)))
        raise AssertionError(f"mismatch vs reference, max abs err = {max_err}")
    print("KERNEL_OK")
</pallas_src>

<mosaic_0001>
module attributes {stable_mosaic.version = 11 : i64} {
  func.func @_freqflow_kernel(%arg0: i32, %arg1: memref<2x8x128xf32, #tpu.memory_space<vmem>>, %arg2: memref<2x8x128xf32, #tpu.memory_space<vmem>>, %arg3: memref<16x24xf32, #tpu.memory_space<vmem>>, %arg4: memref<16x1xf32, #tpu.memory_space<vmem>>, %arg5: memref<8x48xf32, #tpu.memory_space<vmem>>, %arg6: memref<8x1xf32, #tpu.memory_space<vmem>>, %arg7: memref<16x24xf32, #tpu.memory_space<vmem>>, %arg8: memref<16x1xf32, #tpu.memory_space<vmem>>, %arg9: memref<8x48xf32, #tpu.memory_space<vmem>>, %arg10: memref<8x1xf32, #tpu.memory_space<vmem>>, %arg11: memref<256x256xf32, #tpu.memory_space<vmem>>, %arg12: memref<2x8x128xf32, #tpu.memory_space<vmem>>) attributes {dimension_semantics = [#tpu.dimension_semantics<arbitrary>], iteration_bounds = array<i64: 1>, scalar_prefetch = 0 : i64, scratch_operands = 0 : i64, tpu.core_type = #tpu.core_type<tc>, window_params = [{pipeline_mode = #tpu.pipeline_mode<synchronous>, transform_indices = @transform_0, window_bounds = array<i64: 2, 8, 128>}, {pipeline_mode = #tpu.pipeline_mode<synchronous>, transform_indices = @transform_1, window_bounds = array<i64: 2, 8, 128>}, {pipeline_mode = #tpu.pipeline_mode<synchronous>, transform_indices = @transform_2, window_bounds = array<i64: 16, 24>}, {pipeline_mode = #tpu.pipeline_mode<synchronous>, transform_indices = @transform_3, window_bounds = array<i64: 16, 1>}, {pipeline_mode = #tpu.pipeline_mode<synchronous>, transform_indices = @transform_4, window_bounds = array<i64: 8, 48>}, {pipeline_mode = #tpu.pipeline_mode<synchronous>, transform_indices = @transform_5, window_bounds = array<i64: 8, 1>}, {pipeline_mode = #tpu.pipeline_mode<synchronous>, transform_indices = @transform_6, window_bounds = array<i64: 16, 24>}, {pipeline_mode = #tpu.pipeline_mode<synchronous>, transform_indices = @transform_7, window_bounds = array<i64: 16, 1>}, {pipeline_mode = #tpu.pipeline_mode<synchronous>, transform_indices = @transform_8, window_bounds = array<i64: 8, 48>}, {pipeline_mode = #tpu.pipeline_mode<synchronous>, transform_indices = @transform_9, window_bounds = array<i64: 8, 1>}, {pipeline_mode = #tpu.pipeline_mode<synchronous>, transform_indices = @transform_10, window_bounds = array<i64: 256, 256>}, {pipeline_mode = #tpu.pipeline_mode<synchronous>, transform_indices = @transform_11, window_bounds = array<i64: 2, 8, 128>}]} {
    %c0 = arith.constant 0 : index
    %c0_0 = arith.constant 0 : index
    %c0_1 = arith.constant 0 : index
    %0 = vector.load %arg1[%c0, %c0_0, %c0_1] : memref<2x8x128xf32, #tpu.memory_space<vmem>>, vector<1x8x128xf32>
    %1 = vector.shape_cast %0 : vector<1x8x128xf32> to vector<8x128xf32>
    %c1 = arith.constant 1 : index
    %c0_2 = arith.constant 0 : index
    %c0_3 = arith.constant 0 : index
    %2 = vector.load %arg1[%c1, %c0_2, %c0_3] : memref<2x8x128xf32, #tpu.memory_space<vmem>>, vector<1x8x128xf32>
    %3 = vector.shape_cast %2 : vector<1x8x128xf32> to vector<8x128xf32>
    %4 = tpu.concatenate %1, %3 in 1 : vector<8x128xf32>, vector<8x128xf32> -> vector<8x256xf32>
    %c0_4 = arith.constant 0 : index
    %c0_5 = arith.constant 0 : index
    %c0_6 = arith.constant 0 : index
    %5 = vector.load %arg2[%c0_4, %c0_5, %c0_6] : memref<2x8x128xf32, #tpu.memory_space<vmem>>, vector<1x8x128xf32>
    %6 = vector.shape_cast %5 : vector<1x8x128xf32> to vector<8x128xf32>
    %c1_7 = arith.constant 1 : index
    %c0_8 = arith.constant 0 : index
    %c0_9 = arith.constant 0 : index
    %7 = vector.load %arg2[%c1_7, %c0_8, %c0_9] : memref<2x8x128xf32, #tpu.memory_space<vmem>>, vector<1x8x128xf32>
    %8 = vector.shape_cast %7 : vector<1x8x128xf32> to vector<8x128xf32>
    %9 = tpu.concatenate %6, %8 in 1 : vector<8x128xf32>, vector<8x128xf32> -> vector<8x256xf32>
    %10 = tpu.iota {dimensions = array<i32: 1>} : vector<8x256xi32>
    %c128_i32 = arith.constant 128 : i32
    %c0_i32 = arith.constant 0 : i32
    %11 = arith.cmpi eq, %c128_i32, %c0_i32 : i32
    %c1_i32 = arith.constant 1 : i32
    %12 = arith.select %11, %c1_i32, %c128_i32 : i32
    %13 = vector.broadcast %12 : i32 to vector<8x256xi32>
    %14 = arith.remsi %10, %13 : vector<8x256xi32>
    %c0_i32_10 = arith.constant 0 : i32
    %15 = vector.broadcast %c0_i32_10 : i32 to vector<8x256xi32>
    %16 = arith.cmpi ne, %14, %15 : vector<8x256xi32>
    %c0_i32_11 = arith.constant 0 : i32
    %17 = vector.broadcast %c0_i32_11 : i32 to vector<8x256xi32>
    %18 = arith.cmpi slt, %14, %17 : vector<8x256xi32>
    %c0_i32_12 = arith.constant 0 : i32
    %19 = arith.cmpi slt, %12, %c0_i32_12 : i32
    %20 = vector.broadcast %19 : i1 to vector<8x256xi1>
    %21 = vector.broadcast %20 : vector<8x256xi1> to vector<8x256xi1>
    %22 = arith.xori %18, %21 : vector<8x256xi1>
    %23 = arith.andi %22, %16 : vector<8x256xi1>
    %24 = vector.broadcast %12 : i32 to vector<8x256xi32>
    %25 = arith.addi %14, %24 : vector<8x256xi32>
    %26 = arith.select %23, %25, %14 : vector<8x256xi1>, vector<8x256xi32>
    %c1_i32_13 = arith.constant 1 : i32
    %27 = tpu.dynamic_rotate %4 by %c1_i32_13 dim 1 : vector<8x256xf32>, i32 -> vector<8x256xf32>
    %c-1_i32 = arith.constant -1 : i32
    %28 = vector.broadcast %c-1_i32 : i32 to vector<8x256xi32>
    %29 = arith.addi %26, %28 : vector<8x256xi32>
    %c0_i32_14 = arith.constant 0 : i32
    %30 = vector.broadcast %c0_i32_14 : i32 to vector<8x256xi32>
    %31 = arith.cmpi sge, %29, %30 : vector<8x256xi32>
    %c-1_i32_15 = arith.constant -1 : i32
    %32 = vector.broadcast %c-1_i32_15 : i32 to vector<8x256xi32>
    %33 = arith.addi %26, %32 : vector<8x256xi32>
    %c128_i32_16 = arith.constant 128 : i32
    %34 = vector.broadcast %c128_i32_16 : i32 to vector<8x256xi32>
    %35 = arith.cmpi slt, %33, %34 : vector<8x256xi32>
    %36 = arith.andi %31, %35 : vector<8x256xi1>
    %cst = arith.constant 0.000000e+00 : f32
    %37 = vector.broadcast %cst : f32 to vector<8x256xf32>
    %38 = arith.select %36, %27, %37 : vector<8x256xi1>, vector<8x256xf32>
    %c255_i32 = arith.constant 255 : i32
    %39 = tpu.dynamic_rotate %4 by %c255_i32 dim 1 : vector<8x256xf32>, i32 -> vector<8x256xf32>
    %c1_i32_17 = arith.constant 1 : i32
    %40 = vector.broadcast %c1_i32_17 : i32 to vector<8x256xi32>
    %41 = arith.addi %26, %40 : vector<8x256xi32>
    %c0_i32_18 = arith.constant 0 : i32
    %42 = vector.broadcast %c0_i32_18 : i32 to vector<8x256xi32>
    %43 = arith.cmpi sge, %41, %42 : vector<8x256xi32>
    %c1_i32_19 = arith.constant 1 : i32
    %44 = vector.broadcast %c1_i32_19 : i32 to vector<8x256xi32>
    %45 = arith.addi %26, %44 : vector<8x256xi32>
    %c128_i32_20 = arith.constant 128 : i32
    %46 = vector.broadcast %c128_i32_20 : i32 to vector<8x256xi32>
    %47 = arith.cmpi slt, %45, %46 : vector<8x256xi32>
    %48 = arith.andi %43, %47 : vector<8x256xi1>
    %cst_21 = arith.constant 0.000000e+00 : f32
    %49 = vector.broadcast %cst_21 : f32 to vector<8x256xf32>
    %50 = arith.select %48, %39, %49 : vector<8x256xi1>, vector<8x256xf32>
    %51 = tpu.concatenate %38, %4, %50 in 0 : vector<8x256xf32>, vector<8x256xf32>, vector<8x256xf32> -> vector<24x256xf32>
    %c0_22 = arith.constant 0 : index
    %c0_23 = arith.constant 0 : index
    %52 = vector.load %arg3[%c0_22, %c0_23] : memref<16x24xf32, #tpu.memory_space<vmem>>, vector<16x24xf32>
    %cst_24 = arith.constant dense<0.000000e+00> : vector<16x256xf32>
    %53 = tpu.matmul %52, %51, %cst_24 {dimension_numbers = #tpu.dot_dimension_numbers<[1], [0], [0], [1], [0, 0, 1, 1], [], []>, precision = #tpu.contract_precision<fp32>} : vector<16x24xf32>, vector<24x256xf32>, vector<16x256xf32> -> vector<16x256xf32>
    %c0_25 = arith.constant 0 : index
    %c0_26 = arith.constant 0 : index
    %54 = vector.load %arg4[%c0_25, %c0_26] : memref<16x1xf32, #tpu.memory_space<vmem>>, vector<16x1xf32>
    %55 = vector.broadcast %54 : vector<16x1xf32> to vector<16x256xf32>
    %56 = arith.addf %53, %55 : vector<16x256xf32>
    %cst_27 = arith.constant 0.000000e+00 : f32
    %57 = vector.broadcast %cst_27 : f32 to vector<16x256xf32>
    %58 = arith.maximumf %56, %57 : vector<16x256xf32>
    %59 = tpu.iota {dimensions = array<i32: 1>} : vector<16x256xi32>
    %c128_i32_28 = arith.constant 128 : i32
    %c0_i32_29 = arith.constant 0 : i32
    %60 = arith.cmpi eq, %c128_i32_28, %c0_i32_29 : i32
    %c1_i32_30 = arith.constant 1 : i32
    %61 = arith.select %60, %c1_i32_30, %c128_i32_28 : i32
    %62 = vector.broadcast %61 : i32 to vector<16x256xi32>
    %63 = arith.remsi %59, %62 : vector<16x256xi32>
    %c0_i32_31 = arith.constant 0 : i32
    %64 = vector.broadcast %c0_i32_31 : i32 to vector<16x256xi32>
    %65 = arith.cmpi ne, %63, %64 : vector<16x256xi32>
    %c0_i32_32 = arith.constant 0 : i32
    %66 = vector.broadcast %c0_i32_32 : i32 to vector<16x256xi32>
    %67 = arith.cmpi slt, %63, %66 : vector<16x256xi32>
    %c0_i32_33 = arith.constant 0 : i32
    %68 = arith.cmpi slt, %61, %c0_i32_33 : i32
    %69 = vector.broadcast %68 : i1 to vector<16x256xi1>
    %70 = vector.broadcast %69 : vector<16x256xi1> to vector<16x256xi1>
    %71 = arith.xori %67, %70 : vector<16x256xi1>
    %72 = arith.andi %71, %65 : vector<16x256xi1>
    %73 = vector.broadcast %61 : i32 to vector<16x256xi32>
    %74 = arith.addi %63, %73 : vector<16x256xi32>
    %75 = arith.select %72, %74, %63 : vector<16x256xi1>, vector<16x256xi32>
    %c1_i32_34 = arith.constant 1 : i32
    %76 = tpu.dynamic_rotate %58 by %c1_i32_34 dim 1 : vector<16x256xf32>, i32 -> vector<16x256xf32>
    %c-1_i32_35 = arith.constant -1 : i32
    %77 = vector.broadcast %c-1_i32_35 : i32 to vector<16x256xi32>
    %78 = arith.addi %75, %77 : vector<16x256xi32>
    %c0_i32_36 = arith.constant 0 : i32
    %79 = vector.broadcast %c0_i32_36 : i32 to vector<16x256xi32>
    %80 = arith.cmpi sge, %78, %79 : vector<16x256xi32>
    %c-1_i32_37 = arith.constant -1 : i32
    %81 = vector.broadcast %c-1_i32_37 : i32 to vector<16x256xi32>
    %82 = arith.addi %75, %81 : vector<16x256xi32>
    %c128_i32_38 = arith.constant 128 : i32
    %83 = vector.broadcast %c128_i32_38 : i32 to vector<16x256xi32>
    %84 = arith.cmpi slt, %82, %83 : vector<16x256xi32>
    %85 = arith.andi %80, %84 : vector<16x256xi1>
    %cst_39 = arith.constant 0.000000e+00 : f32
    %86 = vector.broadcast %cst_39 : f32 to vector<16x256xf32>
    %87 = arith.select %85, %76, %86 : vector<16x256xi1>, vector<16x256xf32>
    %c255_i32_40 = arith.constant 255 : i32
    %88 = tpu.dynamic_rotate %58 by %c255_i32_40 dim 1 : vector<16x256xf32>, i32 -> vector<16x256xf32>
    %c1_i32_41 = arith.constant 1 : i32
    %89 = vector.broadcast %c1_i32_41 : i32 to vector<16x256xi32>
    %90 = arith.addi %75, %89 : vector<16x256xi32>
    %c0_i32_42 = arith.constant 0 : i32
    %91 = vector.broadcast %c0_i32_42 : i32 to vector<16x256xi32>
    %92 = arith.cmpi sge, %90, %91 : vector<16x256xi32>
    %c1_i32_43 = arith.constant 1 : i32
    %93 = vector.broadcast %c1_i32_43 : i32 to vector<16x256xi32>
    %94 = arith.addi %75, %93 : vector<16x256xi32>
    %c128_i32_44 = arith.constant 128 : i32
    %95 = vector.broadcast %c128_i32_44 : i32 to vector<16x256xi32>
    %96 = arith.cmpi slt, %94, %95 : vector<16x256xi32>
    %97 = arith.andi %92, %96 : vector<16x256xi1>
    %cst_45 = arith.constant 0.000000e+00 : f32
    %98 = vector.broadcast %cst_45 : f32 to vector<16x256xf32>
    %99 = arith.select %97, %88, %98 : vector<16x256xi1>, vector<16x256xf32>
    %100 = tpu.concatenate %87, %58, %99 in 0 : vector<16x256xf32>, vector<16x256xf32>, vector<16x256xf32> -> vector<48x256xf32>
    %c0_46 = arith.constant 0 : index
    %c0_47 = arith.constant 0 : index
    %101 = vector.load %arg5[%c0_46, %c0_47] : memref<8x48xf32, #tpu.memory_space<vmem>>, vector<8x48xf32>
    %cst_48 = arith.constant dense<0.000000e+00> : vector<8x256xf32>
    %102 = tpu.matmul %101, %100, %cst_48 {dimension_numbers = #tpu.dot_dimension_numbers<[1], [0], [0], [1], [0, 0, 1, 1], [], []>, precision = #tpu.contract_precision<fp32>} : vector<8x48xf32>, vector<48x256xf32>, vector<8x256xf32> -> vector<8x256xf32>
    %c0_49 = arith.constant 0 : index
    %c0_50 = arith.constant 0 : index
    %103 = vector.load %arg6[%c0_49, %c0_50] : memref<8x1xf32, #tpu.memory_space<vmem>>, vector<8x1xf32>
    %104 = vector.broadcast %103 : vector<8x1xf32> to vector<8x256xf32>
    %105 = arith.addf %102, %104 : vector<8x256xf32>
    %106 = tpu.iota {dimensions = array<i32: 1>} : vector<8x256xi32>
    %c128_i32_51 = arith.constant 128 : i32
    %c0_i32_52 = arith.constant 0 : i32
    %107 = arith.cmpi eq, %c128_i32_51, %c0_i32_52 : i32
    %c1_i32_53 = arith.constant 1 : i32
    %108 = arith.select %107, %c1_i32_53, %c128_i32_51 : i32
    %109 = vector.broadcast %108 : i32 to vector<8x256xi32>
    %110 = arith.remsi %106, %109 : vector<8x256xi32>
    %c0_i32_54 = arith.constant 0 : i32
    %111 = vector.broadcast %c0_i32_54 : i32 to vector<8x256xi32>
    %112 = arith.cmpi ne, %110, %111 : vector<8x256xi32>
    %c0_i32_55 = arith.constant 0 : i32
    %113 = vector.broadcast %c0_i32_55 : i32 to vector<8x256xi32>
    %114 = arith.cmpi slt, %110, %113 : vector<8x256xi32>
    %c0_i32_56 = arith.constant 0 : i32
    %115 = arith.cmpi slt, %108, %c0_i32_56 : i32
    %116 = vector.broadcast %115 : i1 to vector<8x256xi1>
    %117 = vector.broadcast %116 : vector<8x256xi1> to vector<8x256xi1>
    %118 = arith.xori %114, %117 : vector<8x256xi1>
    %119 = arith.andi %118, %112 : vector<8x256xi1>
    %120 = vector.broadcast %108 : i32 to vector<8x256xi32>
    %121 = arith.addi %110, %120 : vector<8x256xi32>
    %122 = arith.select %119, %121, %110 : vector<8x256xi1>, vector<8x256xi32>
    %c1_i32_57 = arith.constant 1 : i32
    %123 = tpu.dynamic_rotate %9 by %c1_i32_57 dim 1 : vector<8x256xf32>, i32 -> vector<8x256xf32>
    %c-1_i32_58 = arith.constant -1 : i32
    %124 = vector.broadcast %c-1_i32_58 : i32 to vector<8x256xi32>
    %125 = arith.addi %122, %124 : vector<8x256xi32>
    %c0_i32_59 = arith.constant 0 : i32
    %126 = vector.broadcast %c0_i32_59 : i32 to vector<8x256xi32>
    %127 = arith.cmpi sge, %125, %126 : vector<8x256xi32>
    %c-1_i32_60 = arith.constant -1 : i32
    %128 = vector.broadcast %c-1_i32_60 : i32 to vector<8x256xi32>
    %129 = arith.addi %122, %128 : vector<8x256xi32>
    %c128_i32_61 = arith.constant 128 : i32
    %130 = vector.broadcast %c128_i32_61 : i32 to vector<8x256xi32>
    %131 = arith.cmpi slt, %129, %130 : vector<8x256xi32>
    %132 = arith.andi %127, %131 : vector<8x256xi1>
    %cst_62 = arith.constant 0.000000e+00 : f32
    %133 = vector.broadcast %cst_62 : f32 to vector<8x256xf32>
    %134 = arith.select %132, %123, %133 : vector<8x256xi1>, vector<8x256xf32>
    %c255_i32_63 = arith.constant 255 : i32
    %135 = tpu.dynamic_rotate %9 by %c255_i32_63 dim 1 : vector<8x256xf32>, i32 -> vector<8x256xf32>
    %c1_i32_64 = arith.constant 1 : i32
    %136 = vector.broadcast %c1_i32_64 : i32 to vector<8x256xi32>
    %137 = arith.addi %122, %136 : vector<8x256xi32>
    %c0_i32_65 = arith.constant 0 : i32
    %138 = vector.broadcast %c0_i32_65 : i32 to vector<8x256xi32>
    %139 = arith.cmpi sge, %137, %138 : vector<8x256xi32>
    %c1_i32_66 = arith.constant 1 : i32
    %140 = vector.broadcast %c1_i32_66 : i32 to vector<8x256xi32>
    %141 = arith.addi %122, %140 : vector<8x256xi32>
    %c128_i32_67 = arith.constant 128 : i32
    %142 = vector.broadcast %c128_i32_67 : i32 to vector<8x256xi32>
    %143 = arith.cmpi slt, %141, %142 : vector<8x256xi32>
    %144 = arith.andi %139, %143 : vector<8x256xi1>
    %cst_68 = arith.constant 0.000000e+00 : f32
    %145 = vector.broadcast %cst_68 : f32 to vector<8x256xf32>
    %146 = arith.select %144, %135, %145 : vector<8x256xi1>, vector<8x256xf32>
    %147 = tpu.concatenate %134, %9, %146 in 0 : vector<8x256xf32>, vector<8x256xf32>, vector<8x256xf32> -> vector<24x256xf32>
    %c0_69 = arith.constant 0 : index
    %c0_70 = arith.constant 0 : index
    %148 = vector.load %arg7[%c0_69, %c0_70] : memref<16x24xf32, #tpu.memory_space<vmem>>, vector<16x24xf32>
    %cst_71 = arith.constant dense<0.000000e+00> : vector<16x256xf32>
    %149 = tpu.matmul %148, %147, %cst_71 {dimension_numbers = #tpu.dot_dimension_numbers<[1], [0], [0], [1], [0, 0, 1, 1], [], []>, precision = #tpu.contract_precision<fp32>} : vector<16x24xf32>, vector<24x256xf32>, vector<16x256xf32> -> vector<16x256xf32>
    %c0_72 = arith.constant 0 : index
    %c0_73 = arith.constant 0 : index
    %150 = vector.load %arg8[%c0_72, %c0_73] : memref<16x1xf32, #tpu.memory_space<vmem>>, vector<16x1xf32>
    %151 = vector.broadcast %150 : vector<16x1xf32> to vector<16x256xf32>
    %152 = arith.addf %149, %151 : vector<16x256xf32>
    %cst_74 = arith.constant 0.000000e+00 : f32
    %153 = vector.broadcast %cst_74 : f32 to vector<16x256xf32>
    %154 = arith.maximumf %152, %153 : vector<16x256xf32>
    %155 = tpu.iota {dimensions = array<i32: 1>} : vector<16x256xi32>
    %c128_i32_75 = arith.constant 128 : i32
    %c0_i32_76 = arith.constant 0 : i32
    %156 = arith.cmpi eq, %c128_i32_75, %c0_i32_76 : i32
    %c1_i32_77 = arith.constant 1 : i32
    %157 = arith.select %156, %c1_i32_77, %c128_i32_75 : i32
    %158 = vector.broadcast %157 : i32 to vector<16x256xi32>
    %159 = arith.remsi %155, %158 : vector<16x256xi32>
    %c0_i32_78 = arith.constant 0 : i32
    %160 = vector.broadcast %c0_i32_78 : i32 to vector<16x256xi32>
    %161 = arith.cmpi ne, %159, %160 : vector<16x256xi32>
    %c0_i32_79 = arith.constant 0 : i32
    %162 = vector.broadcast %c0_i32_79 : i32 to vector<16x256xi32>
    %163 = arith.cmpi slt, %159, %162 : vector<16x256xi32>
    %c0_i32_80 = arith.constant 0 : i32
    %164 = arith.cmpi slt, %157, %c0_i32_80 : i32
    %165 = vector.broadcast %164 : i1 to vector<16x256xi1>
    %166 = vector.broadcast %165 : vector<16x256xi1> to vector<16x256xi1>
    %167 = arith.xori %163, %166 : vector<16x256xi1>
    %168 = arith.andi %167, %161 : vector<16x256xi1>
    %169 = vector.broadcast %157 : i32 to vector<16x256xi32>
    %170 = arith.addi %159, %169 : vector<16x256xi32>
    %171 = arith.select %168, %170, %159 : vector<16x256xi1>, vector<16x256xi32>
    %c1_i32_81 = arith.constant 1 : i32
    %172 = tpu.dynamic_rotate %154 by %c1_i32_81 dim 1 : vector<16x256xf32>, i32 -> vector<16x256xf32>
    %c-1_i32_82 = arith.constant -1 : i32
    %173 = vector.broadcast %c-1_i32_82 : i32 to vector<16x256xi32>
    %174 = arith.addi %171, %173 : vector<16x256xi32>
    %c0_i32_83 = arith.constant 0 : i32
    %175 = vector.broadcast %c0_i32_83 : i32 to vector<16x256xi32>
    %176 = arith.cmpi sge, %174, %175 : vector<16x256xi32>
    %c-1_i32_84 = arith.constant -1 : i32
    %177 = vector.broadcast %c-1_i32_84 : i32 to vector<16x256xi32>
    %178 = arith.addi %171, %177 : vector<16x256xi32>
    %c128_i32_85 = arith.constant 128 : i32
    %179 = vector.broadcast %c128_i32_85 : i32 to vector<16x256xi32>
    %180 = arith.cmpi slt, %178, %179 : vector<16x256xi32>
    %181 = arith.andi %176, %180 : vector<16x256xi1>
    %cst_86 = arith.constant 0.000000e+00 : f32
    %182 = vector.broadcast %cst_86 : f32 to vector<16x256xf32>
    %183 = arith.select %181, %172, %182 : vector<16x256xi1>, vector<16x256xf32>
    %c255_i32_87 = arith.constant 255 : i32
    %184 = tpu.dynamic_rotate %154 by %c255_i32_87 dim 1 : vector<16x256xf32>, i32 -> vector<16x256xf32>
    %c1_i32_88 = arith.constant 1 : i32
    %185 = vector.broadcast %c1_i32_88 : i32 to vector<16x256xi32>
    %186 = arith.addi %171, %185 : vector<16x256xi32>
    %c0_i32_89 = arith.constant 0 : i32
    %187 = vector.broadcast %c0_i32_89 : i32 to vector<16x256xi32>
    %188 = arith.cmpi sge, %186, %187 : vector<16x256xi32>
    %c1_i32_90 = arith.constant 1 : i32
    %189 = vector.broadcast %c1_i32_90 : i32 to vector<16x256xi32>
    %190 = arith.addi %171, %189 : vector<16x256xi32>
    %c128_i32_91 = arith.constant 128 : i32
    %191 = vector.broadcast %c128_i32_91 : i32 to vector<16x256xi32>
    %192 = arith.cmpi slt, %190, %191 : vector<16x256xi32>
    %193 = arith.andi %188, %192 : vector<16x256xi1>
    %cst_92 = arith.constant 0.000000e+00 : f32
    %194 = vector.broadcast %cst_92 : f32 to vector<16x256xf32>
    %195 = arith.select %193, %184, %194 : vector<16x256xi1>, vector<16x256xf32>
    %196 = tpu.concatenate %183, %154, %195 in 0 : vector<16x256xf32>, vector<16x256xf32>, vector<16x256xf32> -> vector<48x256xf32>
    %c0_93 = arith.constant 0 : index
    %c0_94 = arith.constant 0 : index
    %197 = vector.load %arg9[%c0_93, %c0_94] : memref<8x48xf32, #tpu.memory_space<vmem>>, vector<8x48xf32>
    %cst_95 = arith.constant dense<0.000000e+00> : vector<8x256xf32>
    %198 = tpu.matmul %197, %196, %cst_95 {dimension_numbers = #tpu.dot_dimension_numbers<[1], [0], [0], [1], [0, 0, 1, 1], [], []>, precision = #tpu.contract_precision<fp32>} : vector<8x48xf32>, vector<48x256xf32>, vector<8x256xf32> -> vector<8x256xf32>
    %c0_96 = arith.constant 0 : index
    %c0_97 = arith.constant 0 : index
    %199 = vector.load %arg10[%c0_96, %c0_97] : memref<8x1xf32, #tpu.memory_space<vmem>>, vector<8x1xf32>
    %200 = vector.broadcast %199 : vector<8x1xf32> to vector<8x256xf32>
    %201 = arith.addf %198, %200 : vector<8x256xf32>
    %202 = math.cos %105 : vector<8x256xf32>
    %203 = arith.mulf %201, %202 : vector<8x256xf32>
    %204 = math.sin %105 : vector<8x256xf32>
    %205 = arith.mulf %201, %204 : vector<8x256xf32>
    %c0_98 = arith.constant 0 : index
    %c0_99 = arith.constant 0 : index
    %206 = vector.load %arg11[%c0_98, %c0_99] : memref<256x256xf32, #tpu.memory_space<vmem>>, vector<256x256xf32>
    %207 = vector.extract_strided_slice %203 {offsets = [0, 0], sizes = [8, 128], strides = [1, 1]} : vector<8x256xf32> to vector<8x128xf32>
    %208 = vector.extract_strided_slice %205 {offsets = [0, 0], sizes = [8, 128], strides = [1, 1]} : vector<8x256xf32> to vector<8x128xf32>
    %209 = tpu.concatenate %207, %208 in 1 : vector<8x128xf32>, vector<8x128xf32> -> vector<8x256xf32>
    %cst_100 = arith.constant dense<0.000000e+00> : vector<8x256xf32>
    %210 = tpu.matmul %209, %206, %cst_100 {dimension_numbers = #tpu.dot_dimension_numbers<[1], [0], [0], [1], [0, 0, 1, 1], [], []>, precision = #tpu.contract_precision<fp32>} : vector<8x256xf32>, vector<256x256xf32>, vector<8x256xf32> -> vector<8x256xf32>
    %211 = vector.extract_strided_slice %210 {offsets = [0, 0], sizes = [8, 128], strides = [1, 1]} : vector<8x256xf32> to vector<8x128xf32>
    %cst_101 = arith.constant 7.812500e-03 : f32
    %212 = vector.broadcast %cst_101 : f32 to vector<8x128xf32>
    %213 = arith.mulf %211, %212 : vector<8x128xf32>
    %214 = vector.extract_strided_slice %210 {offsets = [0, 128], sizes = [8, 128], strides = [1, 1]} : vector<8x256xf32> to vector<8x128xf32>
    %cst_102 = arith.constant 7.812500e-03 : f32
    %215 = vector.broadcast %cst_102 : f32 to vector<8x128xf32>
    %216 = arith.mulf %214, %215 : vector<8x128xf32>
    %217 = arith.mulf %213, %213 : vector<8x128xf32>
    %218 = arith.mulf %216, %216 : vector<8x128xf32>
    %219 = arith.addf %217, %218 : vector<8x128xf32>
    %220 = math.sqrt %219 : vector<8x128xf32>
    %c0_103 = arith.constant 0 : index
    %c0_104 = arith.constant 0 : index
    %c0_105 = arith.constant 0 : index
    %221 = vector.load %arg12[%c0_103, %c0_104, %c0_105] : memref<2x8x128xf32, #tpu.memory_space<vmem>>, vector<1x8x128xf32>
    %222 = vector.shape_cast %221 : vector<1x8x128xf32> to vector<8x128xf32>
    %223 = vector.shape_cast %220 : vector<8x128xf32> to vector<1x8x128xf32>
    tpu.vector_store %arg12[%c0_103, %c0_104, %c0_105], %223 {strides = array<i32>} : memref<2x8x128xf32, #tpu.memory_space<vmem>>, vector<1x8x128xf32>,
    %224 = vector.extract_strided_slice %203 {offsets = [0, 128], sizes = [8, 128], strides = [1, 1]} : vector<8x256xf32> to vector<8x128xf32>
    %225 = vector.extract_strided_slice %205 {offsets = [0, 128], sizes = [8, 128], strides = [1, 1]} : vector<8x256xf32> to vector<8x128xf32>
    %226 = tpu.concatenate %224, %225 in 1 : vector<8x128xf32>, vector<8x128xf32> -> vector<8x256xf32>
    %cst_106 = arith.constant dense<0.000000e+00> : vector<8x256xf32>
    %227 = tpu.matmul %226, %206, %cst_106 {dimension_numbers = #tpu.dot_dimension_numbers<[1], [0], [0], [1], [0, 0, 1, 1], [], []>, precision = #tpu.contract_precision<fp32>} : vector<8x256xf32>, vector<256x256xf32>, vector<8x256xf32> -> vector<8x256xf32>
    %228 = vector.extract_strided_slice %227 {offsets = [0, 0], sizes = [8, 128], strides = [1, 1]} : vector<8x256xf32> to vector<8x128xf32>
    %cst_107 = arith.constant 7.812500e-03 : f32
    %229 = vector.broadcast %cst_107 : f32 to vector<8x128xf32>
    %230 = arith.mulf %228, %229 : vector<8x128xf32>
    %231 = vector.extract_strided_slice %227 {offsets = [0, 128], sizes = [8, 128], strides = [1, 1]} : vector<8x256xf32> to vector<8x128xf32>
    %cst_108 = arith.constant 7.812500e-03 : f32
    %232 = vector.broadcast %cst_108 : f32 to vector<8x128xf32>
    %233 = arith.mulf %231, %232 : vector<8x128xf32>
    %234 = arith.mulf %230, %230 : vector<8x128xf32>
    %235 = arith.mulf %233, %233 : vector<8x128xf32>
    %236 = arith.addf %234, %235 : vector<8x128xf32>
    %237 = math.sqrt %236 : vector<8x128xf32>
    %c1_109 = arith.constant 1 : index
    %c0_110 = arith.constant 0 : index
    %c0_111 = arith.constant 0 : index
    %238 = vector.load %arg12[%c1_109, %c0_110, %c0_111] : memref<2x8x128xf32, #tpu.memory_space<vmem>>, vector<1x8x128xf32>
    %239 = vector.shape_cast %238 : vector<1x8x128xf32> to vector<8x128xf32>
    %240 = vector.shape_cast %237 : vector<8x128xf32> to vector<1x8x128xf32>
    tpu.vector_store %arg12[%c1_109, %c0_110, %c0_111], %240 {strides = array<i32>} : memref<2x8x128xf32, #tpu.memory_space<vmem>>, vector<1x8x128xf32>,
    return
  }
  func.func @transform_0(%arg0: i32) -> (i32, i32, i32) {
    %c0_i32 = arith.constant 0 : i32
    %c0_i32_0 = arith.constant 0 : i32
    %c0_i32_1 = arith.constant 0 : i32
    %c0_i32_2 = arith.constant 0 : i32
    return %c0_i32, %c0_i32_0, %c0_i32_1 : i32, i32, i32
  }
  func.func @transform_1(%arg0: i32) -> (i32, i32, i32) {
    %c0_i32 = arith.constant 0 : i32
    %c0_i32_0 = arith.constant 0 : i32
    %c0_i32_1 = arith.constant 0 : i32
    %c0_i32_2 = arith.constant 0 : i32
    return %c0_i32, %c0_i32_0, %c0_i32_1 : i32, i32, i32
  }
  func.func @transform_2(%arg0: i32) -> (i32, i32) {
    %c0_i32 = arith.constant 0 : i32
    %c0_i32_0 = arith.constant 0 : i32
    %c0_i32_1 = arith.constant 0 : i32
    return %c0_i32, %c0_i32_0 : i32, i32
  }
  func.func @transform_3(%arg0: i32) -> (i32, i32) {
    %c0_i32 = arith.constant 0 : i32
    %c0_i32_0 = arith.constant 0 : i32
    %c0_i32_1 = arith.constant 0 : i32
    return %c0_i32, %c0_i32_0 : i32, i32
  }
  func.func @transform_4(%arg0: i32) -> (i32, i32) {
    %c0_i32 = arith.constant 0 : i32
    %c0_i32_0 = arith.constant 0 : i32
    %c0_i32_1 = arith.constant 0 : i32
    return %c0_i32, %c0_i32_0 : i32, i32
  }
  func.func @transform_5(%arg0: i32) -> (i32, i32) {
    %c0_i32 = arith.constant 0 : i32
    %c0_i32_0 = arith.constant 0 : i32
    %c0_i32_1 = arith.constant 0 : i32
    return %c0_i32, %c0_i32_0 : i32, i32
  }
  func.func @transform_6(%arg0: i32) -> (i32, i32) {
    %c0_i32 = arith.constant 0 : i32
    %c0_i32_0 = arith.constant 0 : i32
    %c0_i32_1 = arith.constant 0 : i32
    return %c0_i32, %c0_i32_0 : i32, i32
  }
  func.func @transform_7(%arg0: i32) -> (i32, i32) {
    %c0_i32 = arith.constant 0 : i32
    %c0_i32_0 = arith.constant 0 : i32
    %c0_i32_1 = arith.constant 0 : i32
    return %c0_i32, %c0_i32_0 : i32, i32
  }
  func.func @transform_8(%arg0: i32) -> (i32, i32) {
    %c0_i32 = arith.constant 0 : i32
    %c0_i32_0 = arith.constant 0 : i32
    %c0_i32_1 = arith.constant 0 : i32
    return %c0_i32, %c0_i32_0 : i32, i32
  }
  func.func @transform_9(%arg0: i32) -> (i32, i32) {
    %c0_i32 = arith.constant 0 : i32
    %c0_i32_0 = arith.constant 0 : i32
    %c0_i32_1 = arith.constant 0 : i32
    return %c0_i32, %c0_i32_0 : i32, i32
  }
  func.func @transform_10(%arg0: i32) -> (i32, i32) {
    %c0_i32 = arith.constant 0 : i32
    %c0_i32_0 = arith.constant 0 : i32
    %c0_i32_1 = arith.constant 0 : i32
    return %c0_i32, %c0_i32_0 : i32, i32
  }
  func.func @transform_11(%arg0: i32) -> (i32, i32, i32) {
    %c0_i32 = arith.constant 0 : i32
    %c0_i32_0 = arith.constant 0 : i32
    %c0_i32_1 = arith.constant 0 : i32
    %c0_i32_2 = arith.constant 0 : i32
    return %c0_i32, %c0_i32_0, %c0_i32_1 : i32, i32, i32
  }
}

</mosaic_0001>

<llo_original>
// kernel: tpu_custom_call.1
$region0: #{tpu_custom_call.1}
  #allocation0 [shape = 'u32[]', space=smem, size = 0x4, offset = 0x4, fixed_abs, tag = 'smem constant byte address 0x4 - core index']
  #allocation1 [shape = 'u32[144,128]{1,0:T(1,128)}', space=vmem, size = 0x12000, scoped, tag = 'internal scratch']
  %s0 = inlined_call_operand.vmem [shape: f32[2,8,128], index: 0, kind: input, shape index: {}]
  %s1 = inlined_call_operand.vmem [shape: f32[2,8,128], index: 1, kind: input, shape index: {}]
  %s2 = inlined_call_operand.vmem [shape: f32[16,24], index: 2, kind: input, shape index: {}]
  %s3 = inlined_call_operand.vmem [shape: f32[16,1], index: 3, kind: input, shape index: {}]
  %s4 = inlined_call_operand.hbm [shape: f32[8,48], index: 4, kind: input, shape index: {}]
  %s5 = inlined_call_operand.vmem [shape: f32[8,1], index: 5, kind: input, shape index: {}]
  %s6 = inlined_call_operand.vmem [shape: f32[16,24], index: 6, kind: input, shape index: {}]
  %s7 = inlined_call_operand.vmem [shape: f32[16,1], index: 7, kind: input, shape index: {}]
  %s8 = inlined_call_operand.vmem [shape: f32[8,48], index: 8, kind: input, shape index: {}]
  %s9 = inlined_call_operand.vmem [shape: f32[8,1], index: 9, kind: input, shape index: {}]
  %s10 = inlined_call_operand.hbm [shape: f32[256,256], index: 10, kind: input, shape index: {}]
  %s11 = inlined_call_operand.hbm [shape: f32[2,8,128], index: 11, kind: output, shape index: {}]
  %s12 = sld [smem:[#allocation0]]
  $region62: #{tpu_custom_call.1} parent=0
    _
  %s14 = ssub.s32 1, %s12
  %s15 = scalar_select 0, %s14, %s12
  $region1: #{tpu_custom_call.1} parent=0
    #allocation2 [shape = 'u8[4096]{0}', space=vmem, size = 0x1000, scoped, tag = 'input window, operand 4, single buffered']
    #allocation3 [shape = 's32[1]{0}', space=sflag, size = 0x4, scoped, tag = 'scoped memory for tpu_custom_call.1']
    #allocation4 [shape = 's32[1]{0}', space=sflag, size = 0x4, scoped, tag = 'scoped memory for tpu_custom_call.1']
    #allocation5 [shape = 'u8[262144]{0}', space=vmem, size = 0x40000, scoped, tag = 'input window, operand 10, single buffered']
    #allocation6 [shape = 's32[1]{0}', space=sflag, size = 0x4, scoped, tag = 'scoped memory for tpu_custom_call.1']
    #allocation7 [shape = 'u8[8192]{0}', space=vmem, size = 0x2000, scoped, tag = 'output window, operand 0, single buffered']
    %16 = vsyncpa [#allocation3], 0
    %17 = vsyncpa [#allocation6], 0
    %18 = vsyncpa [#allocation4], 0
    // Predicated region
    $region2: #{tpu_custom_call.1} parent=1 // pred_check
      _
    $region3: #{tpu_custom_call.1} parent=1 // pred_check_branch
      %20 = sbr.rel (0) target = $region5
    $region4: #{tpu_custom_call.1} parent=1 // pred_region
      _
    $region5: #{tpu_custom_call.1} parent=1 // pred_fallthru
      _
    // Predicated region
    $region6: #{tpu_custom_call.1} parent=1 // pred_check
      _
    $region7: #{tpu_custom_call.1} parent=1 // pred_check_branch
      %22 = sbr.rel (0) target = $region9
    $region8: #{tpu_custom_call.1} parent=1 // pred_region
      _
    $region9: #{tpu_custom_call.1} parent=1 // pred_fallthru
      _
    // Predicated region
    $region10: #{tpu_custom_call.1} parent=1 // pred_check
      _
    $region11: #{tpu_custom_call.1} parent=1 // pred_check_branch
      %24 = sbr.rel (0) target = $region13
    $region12: #{tpu_custom_call.1} parent=1 // pred_region
      _
    $region13: #{tpu_custom_call.1} parent=1 // pred_fallthru
      _
    // Predicated region
    $region14: #{tpu_custom_call.1} parent=1 // pred_check
      _
    $region15: #{tpu_custom_call.1} parent=1 // pred_check_branch
      %26 = sbr.rel (0) target = $region17
    $region16: #{tpu_custom_call.1} parent=1 // pred_region
      _
    $region17: #{tpu_custom_call.1} parent=1 // pred_fallthru
      _
    // Predicated region
    $region18: #{tpu_custom_call.1} parent=1 // pred_check
      _
    $region19: #{tpu_custom_call.1} parent=1 // pred_check_branch
      %28 = sbr.rel (0) target = $region21
    $region20: #{tpu_custom_call.1} parent=1 // pred_region
      %s30 = ssub.s32 128, 128
      %31 = vsyncadd [#allocation3], %s30
      %s33 = sshll.u32 [#allocation2], 4
      %s34 = int_to_ptr.vmem [resolvable:$true] %s33
      %36 = dma.hbm_to_vmem [thread:$0]  %s4, 128, %s34, [#allocation3]
    $region21: #{tpu_custom_call.1} parent=1 // pred_fallthru
      _
    // Predicated region
    $region22: #{tpu_custom_call.1} parent=1 // pred_check
      _
    $region23: #{tpu_custom_call.1} parent=1 // pred_check_branch
      %38 = sbr.rel (0) target = $region25
    $region24: #{tpu_custom_call.1} parent=1 // pred_region
      _
    $region25: #{tpu_custom_call.1} parent=1 // pred_fallthru
      _
    // Predicated region
    $region26: #{tpu_custom_call.1} parent=1 // pred_check
      _
    $region27: #{tpu_custom_call.1} parent=1 // pred_check_branch
      %40 = sbr.rel (0) target = $region29
    $region28: #{tpu_custom_call.1} parent=1 // pred_region
      _
    $region29: #{tpu_custom_call.1} parent=1 // pred_fallthru
      _
    // Predicated region
    $region30: #{tpu_custom_call.1} parent=1 // pred_check
      _
    $region31: #{tpu_custom_call.1} parent=1 // pred_check_branch
      %42 = sbr.rel (0) target = $region33
    $region32: #{tpu_custom_call.1} parent=1 // pred_region
      _
    $region33: #{tpu_custom_call.1} parent=1 // pred_fallthru
      _
    // Predicated region
    $region34: #{tpu_custom_call.1} parent=1 // pred_check
      _
    $region35: #{tpu_custom_call.1} parent=1 // pred_check_branch
      %44 = sbr.rel (0) target = $region37
    $region36: #{tpu_custom_call.1} parent=1 // pred_region
      _
    $region37: #{tpu_custom_call.1} parent=1 // pred_fallthru
      _
    // Predicated region
    $region38: #{tpu_custom_call.1} parent=1 // pred_check
      _
    $region39: #{tpu_custom_call.1} parent=1 // pred_check_branch
      %46 = sbr.rel (0) target = $region41
    $region40: #{tpu_custom_call.1} parent=1 // pred_region
      _
    $region41: #{tpu_custom_call.1} parent=1 // pred_fallthru
      _
    // Predicated region
    $region42: #{tpu_custom_call.1} parent=1 // pred_check
      _
    $region43: #{tpu_custom_call.1} parent=1 // pred_check_branch
      %48 = sbr.rel (0) target = $region45
    $region44: #{tpu_custom_call.1} parent=1 // pred_region
      %s50 = ssub.s32 8192, 8192
      %51 = vsyncadd [#allocation6], %s50
      %s52 = sshll.u32 [#allocation5], 4
      %s53 = int_to_ptr.vmem [resolvable:$true] %s52
      %58 = dma.hbm_to_vmem [thread:$0]  %s10, 8192, %s53, [#allocation6], 256, 256, 16
    $region45: #{tpu_custom_call.1} parent=1 // pred_fallthru
      _
    // Predicated region
    $region46: #{tpu_custom_call.1} parent=1 // pred_check
      _
    $region47: #{tpu_custom_call.1} parent=1 // pred_check_branch
      %60 = sbr.rel (0) target = $region49
    $region48: #{tpu_custom_call.1} parent=1 // pred_region
      %61 = dma.done [#allocation3], 128
    $region49: #{tpu_custom_call.1} parent=1 // pred_fallthru
      _
    // Predicated region
    $region50: #{tpu_custom_call.1} parent=1 // pred_check
      _
    $region51: #{tpu_custom_call.1} parent=1 // pred_check_branch
      %63 = sbr.rel (0) target = $region53
    $region52: #{tpu_custom_call.1} parent=1 // pred_region
      %64 = dma.done [#allocation6], 8192
    $region53: #{tpu_custom_call.1} parent=1 // pred_fallthru
      _
    %v65 = vld [vmem:[%s0] sm:$0xff]
    %s66 = scalar_lea.vmem %s0, 8
    %v67 = vld [vmem:[%s66] sm:$0xff]
    %v68 = vld [vmem:[%s1] sm:$0xff]
    %s69 = scalar_lea.vmem %s1, 8
    %v70 = vld [vmem:[%s69] sm:$0xff]
    %v71 = vlaneseq
    %v72 = vand.u32 %v71, 127
    %v73 = vadd.s32 %v72, 128
    %vm74 = vcmp.lt.s32.totalorder %v72, 0
    %v75 = vsub.s32 0, %v72
    %v76 = vsel %vm74, %v75, %v72
    %v77 = vshrl.u32 %v76, 7
    %v78 = vand.u32 %v76, 127
    %v79 = vsub.s32 0, %v78
    %v80 = vsel %vm74, %v79, %v78
    %vm81 = vcmp.lt.s32.totalorder %v73, 0
    %v82 = vsub.s32 0, %v73
    %v83 = vsel %vm81, %v82, %v73
    %v84 = vshrl.u32 %v83, 7
    %v85 = vand.u32 %v83, 127
    %v86 = vsub.s32 0, %v85
    %v87 = vsel %vm81, %v86, %v85
    %vm88 = vcmp.ne.s32.totalorder %v80, 0
    %vm89 = vcmp.ne.s32.totalorder %v87, 0
    %vm90 = vcmp.lt.s32.totalorder %v80, 0
    %vm91 = vcmp.lt.s32.totalorder %v87, 0
    %vm92 = vmand %vm90, %vm88
    %vm93 = vmand %vm91, %vm89
    %v94 = vadd.s32 %v80, 128
    %v95 = vadd.s32 %v87, 128
    %v96 = vsel %vm92, %v94, %v80
    %v97 = vsel %vm93, %v95, %v87
    %98 = vrot.lane.b32.xlu0 %v65, 1
    %v99 = vpop.permute.xlu0 %98
    %100 = vrot.lane.b32.xlu0 %v67, 1
    %v101 = vpop.permute.xlu0 %100
    %vm102 = vcmp.lt.s32.totalorder %v72, 1
    %v103 = vsel %vm102, %v99, %v101
    %v104 = vsel %vm102, %v101, %v99
    %v105 = vadd.s32 %v96, 4294967295
    %v106 = vadd.s32 %v97, 4294967295
    %vm107 = vcmp.ge.s32.totalorder %v105, 0
    %vm108 = vcmp.ge.s32.totalorder %v106, 0
    %vm109 = vcmp.lt.s32.totalorder %v105, 128
    %vm110 = vcmp.lt.s32.totalorder %v106, 128
    %vm111 = vmand %vm107, %vm109
    %vm112 = vmand %vm108, %vm110
    %v113 = vsel %vm111, %v104, 0.0
    %v114 = vsel %vm112, %v103, 0.0
    %115 = vrot.lane.b32.xlu0 %v65, 127
    %v116 = vpop.permute.xlu0 %115
    %117 = vrot.lane.b32.xlu0 %v67, 127
    %v118 = vpop.permute.xlu0 %117
    %vm119 = vcmp.lt.s32.totalorder %v72, 127
    %v120 = vsel %vm119, %v116, %v118
    %v121 = vsel %vm119, %v118, %v116
    %v122 = vadd.s32 %v96, 1
    %v123 = vadd.s32 %v97, 1
    %vm124 = vcmp.ge.s32.totalorder %v122, 0
    %vm125 = vcmp.ge.s32.totalorder %v123, 0
    %vm126 = vcmp.lt.s32.totalorder %v122, 128
    %vm127 = vcmp.lt.s32.totalorder %v123, 128
    %vm128 = vmand %vm124, %vm126
    %vm129 = vmand %vm125, %vm127
    %v130 = vsel %vm128, %v120, 0.0
    %v131 = vsel %vm129, %v121, 0.0
    %v132 = vld [vmem:[%s2] sm:$0xff]
    %v133 = vld [vmem:[%s2 + $0x8] sm:$0xff]
    %v134 = vld [vmem:[%s3] sm:$0xff]
    %v135 = vld [vmem:[%s3 + $0x8] sm:$0xff]
    %137 = vset.pattern.permute.xlu0 0
    %138 = vperm.xlu0 %137, %v134
    %v139 = vpop.permute.xlu0 %138
    %142 = vset.pattern.permute.xlu0 0
    %143 = vperm.xlu0 %142, %v135
    %v144 = vpop.permute.xlu0 %143
    %vm146 = vcmask 195584
    %v148 = vsel %vm146, %v132, 0
    %v151 = vsel %vm146, %v133, 0
    %v153 = vand.u32 %v114, 4294901760
    %154 = vmatprep.subr.mxu0 %v153
    %v155 = vand.u32 %v113, 4294901760
    %156 = vmatpush1.msra.mxu0 %v155
    %v157 = vand.u32 %v67, 4294901760
    %158 = vmatprep.subr.mxu0 %v157
    %v159 = vand.u32 %v65, 4294901760
    %160 = vmatpush1.msra.mxu0 %v159
    %v161 = vand.u32 %v131, 4294901760
    %162 = vmatprep.subr.mxu0 %v161
    %v163 = vand.u32 %v130, 4294901760
    %164 = vmatpush1.msra.mxu0 %v163
    %165 = vmatprep.subr.mxu0 0.0
    %166 = vmatpush1.msra.mxu0 0.0
    %167 = vmatprep.subr.mxu0 0.0
    %168 = vmatpush1.msra.mxu0 0.0
    %169 = vmatprep.subr.mxu0 0.0
    %170 = vmatpush1.msra.mxu0 0.0
    %171 = vmatprep.subr.mxu0 0.0
    %172 = vmatpush1.msra.mxu0 0.0
    %173 = vmatprep.subr.mxu0 0.0
    %174 = vmatpush1.msra.mxu0 0.0
    %175 = vmatprep.subr.mxu0 0.0
    %176 = vmatpush1.msra.mxu0 0.0
    %177 = vmatprep.subr.mxu0 0.0
    %178 = vmatpush1.msra.mxu0 0.0
    %179 = vmatprep.subr.mxu0 0.0
    %180 = vmatpush1.msra.mxu0 0.0
    %181 = vmatprep.subr.mxu0 0.0
    %182 = vmatpush1.msra.mxu0 0.0
    %183 = vmatprep.subr.mxu0 0.0
    %184 = vmatpush1.msra.mxu0 0.0
    %185 = vmatprep.subr.mxu0 0.0
    %186 = vmatpush1.msra.mxu0 0.0
    %187 = vmatprep.subr.mxu0 0.0
    %188 = vmatpush1.msra.mxu0 0.0
    %189 = vmatprep.subr.mxu0 0.0
    %190 = vmatpush1.msra.mxu0 0.0
    %191 = vmatprep.subr.mxu0 0.0
    %192 = vmatpush1.msra.mxu0 0.0
    %193 = vmatprep.subr.mxu0 0.0
    %194 = vmatpush1.msra.mxu0 0.0
    %195 = vmatprep.subr.mxu0 0.0
    %196 = vmatpush1.msra.mxu0 0.0
    %197 = vmatprep.subr.mxu0 0.0
    %198 = vmatpush1.msra.mxu0 0.0
    %199 = vmatprep.subr.mxu0 0.0
    %200 = vmatpush1.msra.mxu0 0.0
    %201 = vmatprep.subr.mxu0 0.0
    %202 = vmatpush1.msra.mxu0 0.0
    %203 = vmatprep.subr.mxu0 0.0
    %204 = vmatpush1.msra.mxu0 0.0
    %205 = vmatprep.subr.mxu0 0.0
    %206 = vmatpush1.msra.mxu0 0.0
    %207 = vmatprep.subr.mxu0 0.0
    %208 = vmatpush1.msra.mxu0 0.0
    %209 = vmatprep.subr.mxu0 0.0
    %210 = vmatpush1.msra.mxu0 0.0
    %211 = vmatprep.subr.mxu0 0.0
    %212 = vmatpush1.msra.mxu0 0.0
    %213 = vmatprep.subr.mxu0 0.0
    %214 = vmatpush1.msra.mxu0 0.0
    %215 = vmatprep.subr.mxu0 0.0
    %216 = vmatpush1.msra.mxu0 0.0
    %217 = vmatprep.subr.mxu0 0.0
    %218 = vmatpush1.msra.mxu0 0.0
    %219 = vmatprep.subr.mxu0 0.0
    %220 = vmatpush1.msra.mxu0 0.0
    %221 = vmatprep.subr.mxu0 0.0
    %222 = vmatpush1.msra.mxu0 0.0
    %223 = vmatprep.mubr.f32.mxu0 0.0
    %v224 = vand.u32 %v148, 4294901760
    %v225 = vsub.f32 %v148, %v224
    %v226 = vand.u32 %v225, 4294901760
    %v227 = vsub.f32 %v225, %v226
    %v228 = vand.u32 %v227, 4294901760
    %229 = vmatmul.mubr.f32.gmra.mrb[0].mxu0 %v228
    %v230 = vpop.f32.mrb[0].mxu0
    %v231 = vadd.f32 %v139, %v230
    %v232 = vpop.f32.mrb[0].mxu0
    %v233 = vadd.f32 %v139, %v232
    %234 = vmatprep.mubr.f32.mxu0 0.0
    %v235 = vand.u32 %v151, 4294901760
    %v236 = vsub.f32 %v151, %v235
    %v237 = vand.u32 %v236, 4294901760
    %v238 = vsub.f32 %v236, %v237
    %v239 = vand.u32 %v238, 4294901760
    %240 = vmatmul.mubr.f32.gmra.mrb[0].mxu0 %v239
    %v241 = vpop.f32.mrb[0].mxu0
    %v242 = vadd.f32 %v144, %v241
    %v243 = vpop.f32.mrb[0].mxu0
    %v244 = vadd.f32 %v144, %v243
    %245 = vdwg.mxu0
    %v246 = vand.u32 %v114, 4294901760
    %v247 = vsub.f32 %v114, %v246
    %v248 = vand.u32 %v247, 4294901760
    %v249 = vsub.f32 %v247, %v248
    %v250 = vand.u32 %v249, 4294901760
    %251 = vmatprep.subr.mxu0 %v250
    %v252 = vand.u32 %v113, 4294901760
    %v253 = vsub.f32 %v113, %v252
    %v254 = vand.u32 %v253, 4294901760
    %v255 = vsub.f32 %v253, %v254
    %v256 = vand.u32 %v255, 4294901760
    %257 = vmatpush1.msra.mxu0 %v256
    %v258 = vand.u32 %v67, 4294901760
    %v259 = vsub.f32 %v67, %v258
    %v260 = vand.u32 %v259, 4294901760
    %v261 = vsub.f32 %v259, %v260
    %v262 = vand.u32 %v261, 4294901760
    %263 = vmatprep.subr.mxu0 %v262
    %v264 = vand.u32 %v65, 4294901760
    %v265 = vsub.f32 %v65, %v264
    %v266 = vand.u32 %v265, 4294901760
    %v267 = vsub.f32 %v265, %v266
    %v268 = vand.u32 %v267, 4294901760
    %269 = vmatpush1.msra.mxu0 %v268
    %v270 = vand.u32 %v131, 4294901760
    %v271 = vsub.f32 %v131, %v270
    %v272 = vand.u32 %v271, 4294901760
    %v273 = vsub.f32 %v271, %v272
    %v274 = vand.u32 %v273, 4294901760
    %275 = vmatprep.subr.mxu0 %v274
    %v276 = vand.u32 %v130, 4294901760
    %v277 = vsub.f32 %v130, %v276
    %v278 = vand.u32 %v277, 4294901760
    %v279 = vsub.f32 %v277, %v278
    %v280 = vand.u32 %v279, 4294901760
    %281 = vmatpush1.msra.mxu0 %v280
    %282 = vmatprep.subr.mxu0 0.0
    %283 = vmatpush1.msra.mxu0 0.0
    %284 = vmatprep.subr.mxu0 0.0
    %285 = vmatpush1.msra.mxu0 0.0
    %286 = vmatprep.subr.mxu0 0.0
    %287 = vmatpush1.msra.mxu0 0.0
    %288 = vmatprep.subr.mxu0 0.0
    %289 = vmatpush1.msra.mxu0 0.0
    %290 = vmatprep.subr.mxu0 0.0
    %291 = vmatpush1.msra.mxu0 0.0
    %292 = vmatprep.subr.mxu0 0.0
    %293 = vmatpush1.msra.mxu0 0.0
    %294 = vmatprep.subr.mxu0 0.0
    %295 = vmatpush1.msra.mxu0 0.0
    %296 = vmatprep.subr.mxu0 0.0
    %297 = vmatpush1.msra.mxu0 0.0
    %298 = vmatprep.subr.mxu0 0.0
    %299 = vmatpush1.msra.mxu0 0.0
    %300 = vmatprep.subr.mxu0 0.0
    %301 = vmatpush1.msra.mxu0 0.0
    %302 = vmatprep.subr.mxu0 0.0
    %303 = vmatpush1.msra.mxu0 0.0
    %304 = vmatprep.subr.mxu0 0.0
    %305 = vmatpush1.msra.mxu0 0.0
    %306 = vmatprep.subr.mxu0 0.0
    %307 = vmatpush1.msra.mxu0 0.0
    %308 = vmatprep.subr.mxu0 0.0
    %309 = vmatpush1.msra.mxu0 0.0
    %310 = vmatprep.subr.mxu0 0.0
    %311 = vmatpush1.msra.mxu0 0.0
    %312 = vmatprep.subr.mxu0 0.0
    %313 = vmatpush1.msra.mxu0 0.0
    %314 = vmatprep.subr.mxu0 0.0
    %315 = vmatpush1.msra.mxu0 0.0
    %316 = vmatprep.subr.mxu0 0.0
    %317 = vmatpush1.msra.mxu0 0.0
    %318 = vmatprep.subr.mxu0 0.0
    %319 = vmatpush1.msra.mxu0 0.0
    %320 = vmatprep.subr.mxu0 0.0
    %321 = vmatpush1.msra.mxu0 0.0
    %322 = vmatprep.subr.mxu0 0.0
    %323 = vmatpush1.msra.mxu0 0.0
    %324 = vmatprep.subr.mxu0 0.0
    %325 = vmatpush1.msra.mxu0 0.0
    %326 = vmatprep.subr.mxu0 0.0
    %327 = vmatpush1.msra.mxu0 0.0
    %328 = vmatprep.subr.mxu0 0.0
    %329 = vmatpush1.msra.mxu0 0.0
    %330 = vmatprep.subr.mxu0 0.0
    %331 = vmatpush1.msra.mxu0 0.0
    %332 = vmatprep.subr.mxu0 0.0
    %333 = vmatpush1.msra.mxu0 0.0
    %334 = vmatprep.subr.mxu0 0.0
    %335 = vmatpush1.msra.mxu0 0.0
    %336 = vmatprep.subr.mxu0 0.0
    %337 = vmatpush1.msra.mxu0 0.0
    %338 = vmatprep.subr.mxu0 0.0
    %339 = vmatpush1.msra.mxu0 0.0
    %340 = vmatprep.mubr.f32.mxu0 0.0
    %v341 = vand.u32 %v148, 4294901760
    %342 = vmatmul.mubr.f32.gmra.mrb[0].mxu0 %v341
    %v343 = vpop.f32.mrb[0].mxu0
    %v344 = vadd.f32 %v231, %v343
    %v345 = vpop.f32.mrb[0].mxu0
    %v346 = vadd.f32 %v233, %v345
    %347 = vmatprep.mubr.f32.mxu0 0.0
    %v348 = vand.u32 %v151, 4294901760
    %349 = vmatmul.mubr.f32.gmra.mrb[0].mxu0 %v348
    %v350 = vpop.f32.mrb[0].mxu0
    %v351 = vadd.f32 %v242, %v350
    %v352 = vpop.f32.mrb[0].mxu0
    %v353 = vadd.f32 %v244, %v352
    %354 = vdwg.mxu0
    %v355 = vand.u32 %v114, 4294901760
    %v356 = vsub.f32 %v114, %v355
    %357 = vmatprep.subr.mxu0 %v356
    %v358 = vand.u32 %v113, 4294901760
    %v359 = vsub.f32 %v113, %v358
    %360 = vmatpush1.msra.mxu0 %v359
    %v361 = vand.u32 %v67, 4294901760
    %v362 = vsub.f32 %v67, %v361
    %363 = vmatprep.subr.mxu0 %v362
    %v364 = vand.u32 %v65, 4294901760
    %v365 = vsub.f32 %v65, %v364
    %366 = vmatpush1.msra.mxu0 %v365
    %v367 = vand.u32 %v131, 4294901760
    %v368 = vsub.f32 %v131, %v367
    %369 = vmatprep.subr.mxu0 %v368
    %v370 = vand.u32 %v130, 4294901760
    %v371 = vsub.f32 %v130, %v370
    %372 = vmatpush1.msra.mxu0 %v371
    %373 = vmatprep.subr.mxu0 0.0
    %374 = vmatpush1.msra.mxu0 0.0
    %375 = vmatprep.subr.mxu0 0.0
    %376 = vmatpush1.msra.mxu0 0.0
    %377 = vmatprep.subr.mxu0 0.0
    %378 = vmatpush1.msra.mxu0 0.0
    %379 = vmatprep.subr.mxu0 0.0
    %380 = vmatpush1.msra.mxu0 0.0
    %381 = vmatprep.subr.mxu0 0.0
    %382 = vmatpush1.msra.mxu0 0.0
    %383 = vmatprep.subr.mxu0 0.0
    %384 = vmatpush1.msra.mxu0 0.0
    %385 = vmatprep.subr.mxu0 0.0
    %386 = vmatpush1.msra.mxu0 0.0
    %387 = vmatprep.subr.mxu0 0.0
    %388 = vmatpush1.msra.mxu0 0.0
    %389 = vmatprep.subr.mxu0 0.0
    %390 = vmatpush1.msra.mxu0 0.0
    %391 = vmatprep.subr.mxu0 0.0
    %392 = vmatpush1.msra.mxu0 0.0
    %393 = vmatprep.subr.mxu0 0.0
    %394 = vmatpush1.msra.mxu0 0.0
    %395 = vmatprep.subr.mxu0 0.0
    %396 = vmatpush1.msra.mxu0 0.0
    %397 = vmatprep.subr.mxu0 0.0
    %398 = vmatpush1.msra.mxu0 0.0
    %399 = vmatprep.subr.mxu0 0.0
    %400 = vmatpush1.msra.mxu0 0.0
    %401 = vmatprep.subr.mxu0 0.0
    %402 = vmatpush1.msra.mxu0 0.0
    %403 = vmatprep.subr.mxu0 0.0
    %404 = vmatpush1.msra.mxu0 0.0
    %405 = vmatprep.subr.mxu0 0.0
    %406 = vmatpush1.msra.mxu0 0.0
    %407 = vmatprep.subr.mxu0 0.0
    %408 = vmatpush1.msra.mxu0 0.0
    %409 = vmatprep.subr.mxu0 0.0
    %410 = vmatpush1.msra.mxu0 0.0
    %411 = vmatprep.subr.mxu0 0.0
    %412 = vmatpush1.msra.mxu0 0.0
    %413 = vmatprep.subr.mxu0 0.0
    %414 = vmatpush1.msra.mxu0 0.0
    %415 = vmatprep.subr.mxu0 0.0
    %416 = vmatpush1.msra.mxu0 0.0
    %417 = vmatprep.subr.mxu0 0.0
    %418 = vmatpush1.msra.mxu0 0.0
    %419 = vmatprep.subr.mxu0 0.0
    %420 = vmatpush1.msra.mxu0 0.0
    %421 = vmatprep.subr.mxu0 0.0
    %422 = vmatpush1.msra.mxu0 0.0
    %423 = vmatprep.subr.mxu0 0.0
    %424 = vmatpush1.msra.mxu0 0.0
    %425 = vmatprep.subr.mxu0 0.0
    %426 = vmatpush1.msra.mxu0 0.0
    %427 = vmatprep.subr.mxu0 0.0
    %428 = vmatpush1.msra.mxu0 0.0
    %429 = vmatprep.subr.mxu0 0.0
    %430 = vmatpush1.msra.mxu0 0.0
    %431 = vmatprep.mubr.f32.mxu0 0.0
    %v432 = vand.u32 %v148, 4294901760
    %v433 = vsub.f32 %v148, %v432
    %434 = vmatmul.mubr.f32.gmra.mrb[0].mxu0 %v433
    %v435 = vpop.f32.mrb[0].mxu0
    %v436 = vadd.f32 %v344, %v435
    %v437 = vpop.f32.mrb[0].mxu0
    %v438 = vadd.f32 %v346, %v437
    %439 = vmatprep.mubr.f32.mxu0 0.0
    %v440 = vand.u32 %v151, 4294901760
    %v441 = vsub.f32 %v151, %v440
    %442 = vmatmul.mubr.f32.gmra.mrb[0].mxu0 %v441
    %v443 = vpop.f32.mrb[0].mxu0
    %v444 = vadd.f32 %v351, %v443
    %v445 = vpop.f32.mrb[0].mxu0
    %v446 = vadd.f32 %v353, %v445
    %447 = vdwg.mxu0
    %v448 = vand.u32 %v114, 4294901760
    %449 = vmatprep.subr.mxu0 %v448
    %v450 = vand.u32 %v113, 4294901760
    %451 = vmatpush1.msra.mxu0 %v450
    %v452 = vand.u32 %v67, 4294901760
    %453 = vmatprep.subr.mxu0 %v452
    %v454 = vand.u32 %v65, 4294901760
    %455 = vmatpush1.msra.mxu0 %v454
    %v456 = vand.u32 %v131, 4294901760
    %457 = vmatprep.subr.mxu0 %v456
    %v458 = vand.u32 %v130, 4294901760
    %459 = vmatpush1.msra.mxu0 %v458
    %460 = vmatprep.subr.mxu0 0.0
    %461 = vmatpush1.msra.mxu0 0.0
    %462 = vmatprep.subr.mxu0 0.0
    %463 = vmatpush1.msra.mxu0 0.0
    %464 = vmatprep.subr.mxu0 0.0
    %465 = vmatpush1.msra.mxu0 0.0
    %466 = vmatprep.subr.mxu0 0.0
    %467 = vmatpush1.msra.mxu0 0.0
    %468 = vmatprep.subr.mxu0 0.0
    %469 = vmatpush1.msra.mxu0 0.0
    %470 = vmatprep.subr.mxu0 0.0
    %471 = vmatpush1.msra.mxu0 0.0
    %472 = vmatprep.subr.mxu0 0.0
    %473 = vmatpush1.msra.mxu0 0.0
    %474 = vmatprep.subr.mxu0 0.0
    %475 = vmatpush1.msra.mxu0 0.0
    %476 = vmatprep.subr.mxu0 0.0
    %477 = vmatpush1.msra.mxu0 0.0
    %478 = vmatprep.subr.mxu0 0.0
    %479 = vmatpush1.msra.mxu0 0.0
    %480 = vmatprep.subr.mxu0 0.0
    %481 = vmatpush1.msra.mxu0 0.0
    %482 = vmatprep.subr.mxu0 0.0
    %483 = vmatpush1.msra.mxu0 0.0
    %484 = vmatprep.subr.mxu0 0.0
    %485 = vmatpush1.msra.mxu0 0.0
    %486 = vmatprep.subr.mxu0 0.0
    %487 = vmatpush1.msra.mxu0 0.0
    %488 = vmatprep.subr.mxu0 0.0
    %489 = vmatpush1.msra.mxu0 0.0
    %490 = vmatprep.subr.mxu0 0.0
    %491 = vmatpush1.msra.mxu0 0.0
    %492 = vmatprep.subr.mxu0 0.0
    %493 = vmatpush1.msra.mxu0 0.0
    %494 = vmatprep.subr.mxu0 0.0
    %495 = vmatpush1.msra.mxu0 0.0
    %496 = vmatprep.subr.mxu0 0.0
    %497 = vmatpush1.msra.mxu0 0.0
    %498 = vmatprep.subr.mxu0 0.0
    %499 = vmatpush1.msra.mxu0 0.0
    %500 = vmatprep.subr.mxu0 0.0
    %501 = vmatpush1.msra.mxu0 0.0
    %502 = vmatprep.subr.mxu0 0.0
    %503 = vmatpush1.msra.mxu0 0.0
    %504 = vmatprep.subr.mxu0 0.0
    %505 = vmatpush1.msra.mxu0 0.0
    %506 = vmatprep.subr.mxu0 0.0
    %507 = vmatpush1.msra.mxu0 0.0
    %508 = vmatprep.subr.mxu0 0.0
    %509 = vmatpush1.msra.mxu0 0.0
    %510 = vmatprep.subr.mxu0 0.0
    %511 = vmatpush1.msra.mxu0 0.0
    %512 = vmatprep.subr.mxu0 0.0
    %513 = vmatpush1.msra.mxu0 0.0
    %514 = vmatprep.subr.mxu0 0.0
    %515 = vmatpush1.msra.mxu0 0.0
    %516 = vmatprep.subr.mxu0 0.0
    %517 = vmatpush1.msra.mxu0 0.0
    %518 = vmatprep.mubr.f32.mxu0 0.0
    %v519 = vand.u32 %v148, 4294901760
    %v520 = vsub.f32 %v148, %v519
    %v521 = vand.u32 %v520, 4294901760
    %522 = vmatmul.mubr.f32.gmra.mrb[0].mxu0 %v521
    %v523 = vpop.f32.mrb[0].mxu0
    %v524 = vadd.f32 %v436, %v523
    %v525 = vpop.f32.mrb[0].mxu0
    %v526 = vadd.f32 %v438, %v525
    %527 = vmatprep.mubr.f32.mxu0 0.0
    %v528 = vand.u32 %v151, 4294901760
    %v529 = vsub.f32 %v151, %v528
    %v530 = vand.u32 %v529, 4294901760
    %531 = vmatmul.mubr.f32.gmra.mrb[0].mxu0 %v530
    %v532 = vpop.f32.mrb[0].mxu0
    %v533 = vadd.f32 %v444, %v532
    %v534 = vpop.f32.mrb[0].mxu0
    %v535 = vadd.f32 %v446, %v534
    %536 = vdwg.mxu0
    %v537 = vand.u32 %v114, 4294901760
    %v538 = vsub.f32 %v114, %v537
    %v539 = vand.u32 %v538, 4294901760
    %540 = vmatprep.subr.mxu0 %v539
    %v541 = vand.u32 %v113, 4294901760
    %v542 = vsub.f32 %v113, %v541
    %v543 = vand.u32 %v542, 4294901760
    %544 = vmatpush1.msra.mxu0 %v543
    %v545 = vand.u32 %v67, 4294901760
    %v546 = vsub.f32 %v67, %v545
    %v547 = vand.u32 %v546, 4294901760
    %548 = vmatprep.subr.mxu0 %v547
    %v549 = vand.u32 %v65, 4294901760
    %v550 = vsub.f32 %v65, %v549
    %v551 = vand.u32 %v550, 4294901760
    %552 = vmatpush1.msra.mxu0 %v551
    %v553 = vand.u32 %v131, 4294901760
    %v554 = vsub.f32 %v131, %v553
    %v555 = vand.u32 %v554, 4294901760
    %556 = vmatprep.subr.mxu0 %v555
    %v557 = vand.u32 %v130, 4294901760
    %v558 = vsub.f32 %v130, %v557
    %v559 = vand.u32 %v558, 4294901760
    %560 = vmatpush1.msra.mxu0 %v559
    %561 = vmatprep.subr.mxu0 0.0
    %562 = vmatpush1.msra.mxu0 0.0
    %563 = vmatprep.subr.mxu0 0.0
    %564 = vmatpush1.msra.mxu0 0.0
    %565 = vmatprep.subr.mxu0 0.0
    %566 = vmatpush1.msra.mxu0 0.0
    %567 = vmatprep.subr.mxu0 0.0
    %568 = vmatpush1.msra.mxu0 0.0
    %569 = vmatprep.subr.mxu0 0.0
    %570 = vmatpush1.msra.mxu0 0.0
    %571 = vmatprep.subr.mxu0 0.0
    %572 = vmatpush1.msra.mxu0 0.0
    %573 = vmatprep.subr.mxu0 0.0
    %574 = vmatpush1.msra.mxu0 0.0
    %575 = vmatprep.subr.mxu0 0.0
    %576 = vmatpush1.msra.mxu0 0.0
    %577 = vmatprep.subr.mxu0 0.0
    %578 = vmatpush1.msra.mxu0 0.0
    %579 = vmatprep.subr.mxu0 0.0
    %580 = vmatpush1.msra.mxu0 0.0
    %581 = vmatprep.subr.mxu0 0.0
    %582 = vmatpush1.msra.mxu0 0.0
    %583 = vmatprep.subr.mxu0 0.0
    %584 = vmatpush1.msra.mxu0 0.0
    %585 = vmatprep.subr.mxu0 0.0
    %586 = vmatpush1.msra.mxu0 0.0
    %587 = vmatprep.subr.mxu0 0.0
    %588 = vmatpush1.msra.mxu0 0.0
    %589 = vmatprep.subr.mxu0 0.0
    %590 = vmatpush1.msra.mxu0 0.0
    %591 = vmatprep.subr.mxu0 0.0
    %592 = vmatpush1.msra.mxu0 0.0
    %593 = vmatprep.subr.mxu0 0.0
    %594 = vmatpush1.msra.mxu0 0.0
    %595 = vmatprep.subr.mxu0 0.0
    %596 = vmatpush1.msra.mxu0 0.0
    %597 = vmatprep.subr.mxu0 0.0
    %598 = vmatpush1.msra.mxu0 0.0
    %599 = vmatprep.subr.mxu0 0.0
    %600 = vmatpush1.msra.mxu0 0.0
    %601 = vmatprep.subr.mxu0 0.0
    %602 = vmatpush1.msra.mxu0 0.0
    %603 = vmatprep.subr.mxu0 0.0
    %604 = vmatpush1.msra.mxu0 0.0
    %605 = vmatprep.subr.mxu0 0.0
    %606 = vmatpush1.msra.mxu0 0.0
    %607 = vmatprep.subr.mxu0 0.0
    %608 = vmatpush1.msra.mxu0 0.0
    %609 = vmatprep.subr.mxu0 0.0
    %610 = vmatpush1.msra.mxu0 0.0
    %611 = vmatprep.subr.mxu0 0.0
    %612 = vmatpush1.msra.mxu0 0.0
    %613 = vmatprep.subr.mxu0 0.0
    %614 = vmatpush1.msra.mxu0 0.0
    %615 = vmatprep.subr.mxu0 0.0
    %616 = vmatpush1.msra.mxu0 0.0
    %617 = vmatprep.subr.mxu0 0.0
    %618 = vmatpush1.msra.mxu0 0.0
    %619 = vmatprep.mubr.f32.mxu0 0.0
    %v620 = vand.u32 %v148, 4294901760
    %621 = vmatmul.mubr.f32.gmra.mrb[0].mxu0 %v620
    %v622 = vpop.f32.mrb[0].mxu0
    %v623 = vadd.f32 %v524, %v622
    %v624 = vpop.f32.mrb[0].mxu0
    %v625 = vadd.f32 %v526, %v624
    %626 = vmatprep.mubr.f32.mxu0 0.0
    %v627 = vand.u32 %v151, 4294901760
    %628 = vmatmul.mubr.f32.gmra.mrb[0].mxu0 %v627
    %v629 = vpop.f32.mrb[0].mxu0
    %v630 = vadd.f32 %v533, %v629
    %v631 = vpop.f32.mrb[0].mxu0
    %v632 = vadd.f32 %v535, %v631
    %633 = vdwg.mxu0
    %v634 = vand.u32 %v114, 4294901760
    %635 = vmatprep.subr.mxu0 %v634
    %v636 = vand.u32 %v113, 4294901760
    %637 = vmatpush1.msra.mxu0 %v636
    %v638 = vand.u32 %v67, 4294901760
    %639 = vmatprep.subr.mxu0 %v638
    %v640 = vand.u32 %v65, 4294901760
    %641 = vmatpush1.msra.mxu0 %v640
    %v642 = vand.u32 %v131, 4294901760
    %643 = vmatprep.subr.mxu0 %v642
    %v644 = vand.u32 %v130, 4294901760
    %645 = vmatpush1.msra.mxu0 %v644
    %646 = vmatprep.subr.mxu0 0.0
    %647 = vmatpush1.msra.mxu0 0.0
    %648 = vmatprep.subr.mxu0 0.0
    %649 = vmatpush1.msra.mxu0 0.0
    %650 = vmatprep.subr.mxu0 0.0
    %651 = vmatpush1.msra.mxu0 0.0
    %652 = vmatprep.subr.mxu0 0.0
    %653 = vmatpush1.msra.mxu0 0.0
    %654 = vmatprep.subr.mxu0 0.0
    %655 = vmatpush1.msra.mxu0 0.0
    %656 = vmatprep.subr.mxu0 0.0
    %657 = vmatpush1.msra.mxu0 0.0
    %658 = vmatprep.subr.mxu0 0.0
    %659 = vmatpush1.msra.mxu0 0.0
    %660 = vmatprep.subr.mxu0 0.0
    %661 = vmatpush1.msra.mxu0 0.0
    %662 = vmatprep.subr.mxu0 0.0
    %663 = vmatpush1.msra.mxu0 0.0
    %664 = vmatprep.subr.mxu0 0.0
    %665 = vmatpush1.msra.mxu0 0.0
    %666 = vmatprep.subr.mxu0 0.0
    %667 = vmatpush1.msra.mxu0 0.0
    %668 = vmatprep.subr.mxu0 0.0
    %669 = vmatpush1.msra.mxu0 0.0
    %670 = vmatprep.subr.mxu0 0.0
    %671 = vmatpush1.msra.mxu0 0.0
    %672 = vmatprep.subr.mxu0 0.0
    %673 = vmatpush1.msra.mxu0 0.0
    %674 = vmatprep.subr.mxu0 0.0
    %675 = vmatpush1.msra.mxu0 0.0
    %676 = vmatprep.subr.mxu0 0.0
    %677 = vmatpush1.msra.mxu0 0.0
    %678 = vmatprep.subr.mxu0 0.0
    %679 = vmatpush1.msra.mxu0 0.0
    %680 = vmatprep.subr.mxu0 0.0
    %681 = vmatpush1.msra.mxu0 0.0
    %682 = vmatprep.subr.mxu0 0.0
    %683 = vmatpush1.msra.mxu0 0.0
    %684 = vmatprep.subr.mxu0 0.0
    %685 = vmatpush1.msra.mxu0 0.0
    %686 = vmatprep.subr.mxu0 0.0
    %687 = vmatpush1.msra.mxu0 0.0
    %688 = vmatprep.subr.mxu0 0.0
    %689 = vmatpush1.msra.mxu0 0.0
    %690 = vmatprep.subr.mxu0 0.0
    %691 = vmatpush1.msra.mxu0 0.0
    %692 = vmatprep.subr.mxu0 0.0
    %693 = vmatpush1.msra.mxu0 0.0
    %694 = vmatprep.subr.mxu0 0.0
    %695 = vmatpush1.msra.mxu0 0.0
    %696 = vmatprep.subr.mxu0 0.0
    %697 = vmatpush1.msra.mxu0 0.0
    %698 = vmatprep.subr.mxu0 0.0
    %699 = vmatpush1.msra.mxu0 0.0
    %700 = vmatprep.subr.mxu0 0.0
    %701 = vmatpush1.msra.mxu0 0.0
    %702 = vmatprep.subr.mxu0 0.0
    %703 = vmatpush1.msra.mxu0 0.0
    %704 = vmatprep.mubr.f32.mxu0 0.0
    %v705 = vand.u32 %v148, 4294901760
    %706 = vmatmul.mubr.f32.gmra.mrb[0].mxu0 %v705
    %v707 = vpop.f32.mrb[0].mxu0
    %v708 = vadd.f32 %v623, %v707
    %v709 = vpop.f32.mrb[0].mxu0
    %v710 = vadd.f32 %v625, %v709
    %711 = vmatprep.mubr.f32.mxu0 0.0
    %v712 = vand.u32 %v151, 4294901760
    %713 = vmatmul.mubr.f32.gmra.mrb[0].mxu0 %v712
    %v714 = vpop.f32.mrb[0].mxu0
    %v715 = vadd.f32 %v630, %v714
    %v716 = vpop.f32.mrb[0].mxu0
    %v717 = vadd.f32 %v632, %v716
    %718 = vdwg.mxu0
    %v719 = vmax.f32 %v708, 0.0
    %v720 = vmax.f32 %v710, 0.0
    %v721 = vmax.f32 %v715, 0.0
    %v722 = vmax.f32 %v717, 0.0
    %723 = vrot.lane.b32.xlu0 %v719, 1
    %v724 = vpop.permute.xlu0 %723
    %725 = vrot.lane.b32.xlu0 %v721, 1
    %v726 = vpop.permute.xlu0 %725
    %727 = vrot.lane.b32.xlu0 %v720, 1
    %v728 = vpop.permute.xlu0 %727
    %729 = vrot.lane.b32.xlu0 %v722, 1
    %v730 = vpop.permute.xlu0 %729
    %v731 = vsel %vm102, %v724, %v728
    %v732 = vsel %vm102, %v726, %v730
    %v733 = vsel %vm102, %v728, %v724
    %v734 = vsel %vm102, %v730, %v726
    %v735 = vsel %vm111, %v733, 0.0
    %v736 = vsel %vm112, %v731, 0.0
    %v737 = vsel %vm111, %v734, 0.0
    %v738 = vsel %vm112, %v732, 0.0
    %739 = vrot.lane.b32.xlu0 %v719, 127
    %v740 = vpop.permute.xlu0 %739
    %741 = vrot.lane.b32.xlu0 %v721, 127
    %v742 = vpop.permute.xlu0 %741
    %743 = vrot.lane.b32.xlu0 %v720, 127
    %v744 = vpop.permute.xlu0 %743
    %745 = vrot.lane.b32.xlu0 %v722, 127
    %v746 = vpop.permute.xlu0 %745
    %v747 = vsel %vm119, %v740, %v744
    %v748 = vsel %vm119, %v742, %v746
    %v749 = vsel %vm119, %v744, %v740
    %v750 = vsel %vm119, %v746, %v742
    %v751 = vsel %vm128, %v747, 0.0
    %v752 = vsel %vm129, %v749, 0.0
    %v753 = vsel %vm128, %v748, 0.0
    %v754 = vsel %vm129, %v750, 0.0
    %v755 = vld [vmem:[#allocation2] sm:$0xff]
    %v756 = vld [vmem:[%s5] sm:$0xff]
    %758 = vset.pattern.permute.xlu0 0
    %759 = vperm.xlu0 %758, %v756
    %v760 = vpop.permute.xlu0 %759
    %vm762 = vcmask 392192
    %v764 = vsel %vm762, %v755, 0
    %v766 = vand.u32 %v736, 4294901760
    %767 = vmatprep.subr.mxu0 %v766
    %v768 = vand.u32 %v735, 4294901760
    %769 = vmatpush1.msra.mxu0 %v768
    %v770 = vand.u32 %v738, 4294901760
    %771 = vmatprep.subr.mxu0 %v770
    %v772 = vand.u32 %v737, 4294901760
    %773 = vmatpush1.msra.mxu0 %v772
    %v774 = vand.u32 %v720, 4294901760
    %775 = vmatprep.subr.mxu0 %v774
    %v776 = vand.u32 %v719, 4294901760
    %777 = vmatpush1.msra.mxu0 %v776
    %v778 = vand.u32 %v722, 4294901760
    %779 = vmatprep.subr.mxu0 %v778
    %v780 = vand.u32 %v721, 4294901760
    %781 = vmatpush1.msra.mxu0 %v780
    %v782 = vand.u32 %v752, 4294901760
    %783 = vmatprep.subr.mxu0 %v782
    %v784 = vand.u32 %v751, 4294901760
    %785 = vmatpush1.msra.mxu0 %v784
    %v786 = vand.u32 %v754, 4294901760
    %787 = vmatprep.subr.mxu0 %v786
    %v788 = vand.u32 %v753, 4294901760
    %789 = vmatpush1.msra.mxu0 %v788
    %790 = vmatprep.subr.mxu0 0.0
    %791 = vmatpush1.msra.mxu0 0.0
    %792 = vmatprep.subr.mxu0 0.0
    %793 = vmatpush1.msra.mxu0 0.0
    %794 = vmatprep.subr.mxu0 0.0
    %795 = vmatpush1.msra.mxu0 0.0
    %796 = vmatprep.subr.mxu0 0.0
    %797 = vmatpush1.msra.mxu0 0.0
    %798 = vmatprep.subr.mxu0 0.0
    %799 = vmatpush1.msra.mxu0 0.0
    %800 = vmatprep.subr.mxu0 0.0
    %801 = vmatpush1.msra.mxu0 0.0
    %802 = vmatprep.subr.mxu0 0.0
    %803 = vmatpush1.msra.mxu0 0.0
    %804 = vmatprep.subr.mxu0 0.0
    %805 = vmatpush1.msra.mxu0 0.0
    %806 = vmatprep.subr.mxu0 0.0
    %807 = vmatpush1.msra.mxu0 0.0
    %808 = vmatprep.subr.mxu0 0.0
    %809 = vmatpush1.msra.mxu0 0.0
    %810 = vmatprep.subr.mxu0 0.0
    %811 = vmatpush1.msra.mxu0 0.0
    %812 = vmatprep.subr.mxu0 0.0
    %813 = vmatpush1.msra.mxu0 0.0
    %814 = vmatprep.subr.mxu0 0.0
    %815 = vmatpush1.msra.mxu0 0.0
    %816 = vmatprep.subr.mxu0 0.0
    %817 = vmatpush1.msra.mxu0 0.0
    %818 = vmatprep.subr.mxu0 0.0
    %819 = vmatpush1.msra.mxu0 0.0
    %820 = vmatprep.subr.mxu0 0.0
    %821 = vmatpush1.msra.mxu0 0.0
    %822 = vmatprep.subr.mxu0 0.0
    %823 = vmatpush1.msra.mxu0 0.0
    %824 = vmatprep.subr.mxu0 0.0
    %825 = vmatpush1.msra.mxu0 0.0
    %826 = vmatprep.subr.mxu0 0.0
    %827 = vmatpush1.msra.mxu0 0.0
    %828 = vmatprep.subr.mxu0 0.0
    %829 = vmatpush1.msra.mxu0 0.0
    %830 = vmatprep.subr.mxu0 0.0
    %831 = vmatpush1.msra.mxu0 0.0
    %832 = vmatprep.subr.mxu0 0.0
    %833 = vmatpush1.msra.mxu0 0.0
    %834 = vmatprep.subr.mxu0 0.0
    %835 = vmatpush1.msra.mxu0 0.0
    %836 = vmatprep.subr.mxu0 0.0
    %837 = vmatpush1.msra.mxu0 0.0
    %838 = vmatprep.subr.mxu0 0.0
    %839 = vmatpush1.msra.mxu0 0.0
    %840 = vmatprep.subr.mxu0 0.0
    %841 = vmatpush1.msra.mxu0 0.0
    %842 = vmatprep.mubr.f32.mxu0 0.0
    %v843 = vand.u32 %v764, 4294901760
    %v844 = vsub.f32 %v764, %v843
    %v845 = vand.u32 %v844, 4294901760
    %v846 = vsub.f32 %v844, %v845
    %v847 = vand.u32 %v846, 4294901760
    %848 = vmatmul.mubr.f32.gmra.mrb[0].mxu0 %v847
    %v849 = vpop.f32.mrb[0].mxu0
    %v850 = vadd.f32 %v760, %v849
    %v851 = vpop.f32.mrb[0].mxu0
    %v852 = vadd.f32 %v760, %v851
    %853 = vdwg.mxu0
    %v854 = vand.u32 %v736, 4294901760
    %v855 = vsub.f32 %v736, %v854
    %v856 = vand.u32 %v855, 4294901760
    %v857 = vsub.f32 %v855, %v856
    %v858 = vand.u32 %v857, 4294901760
    %859 = vmatprep.subr.mxu0 %v858
    %v860 = vand.u32 %v735, 4294901760
    %v861 = vsub.f32 %v735, %v860
    %v862 = vand.u32 %v861, 4294901760
    %v863 = vsub.f32 %v861, %v862
    %v864 = vand.u32 %v863, 4294901760
    %865 = vmatpush1.msra.mxu0 %v864
    %v866 = vand.u32 %v738, 4294901760
    %v867 = vsub.f32 %v738, %v866
    %v868 = vand.u32 %v867, 4294901760
    %v869 = vsub.f32 %v867, %v868
    %v870 = vand.u32 %v869, 4294901760
    %871 = vmatprep.subr.mxu0 %v870
    %v872 = vand.u32 %v737, 4294901760
    %v873 = vsub.f32 %v737, %v872
    %v874 = vand.u32 %v873, 4294901760
    %v875 = vsub.f32 %v873, %v874
    %v876 = vand.u32 %v875, 4294901760
    %877 = vmatpush1.msra.mxu0 %v876
    %v878 = vand.u32 %v720, 4294901760
    %v879 = vsub.f32 %v720, %v878
    %v880 = vand.u32 %v879, 4294901760
    %v881 = vsub.f32 %v879, %v880
    %v882 = vand.u32 %v881, 4294901760
    %883 = vmatprep.subr.mxu0 %v882
    %v884 = vand.u32 %v719, 4294901760
    %v885 = vsub.f32 %v719, %v884
    %v886 = vand.u32 %v885, 4294901760
    %v887 = vsub.f32 %v885, %v886
    %v888 = vand.u32 %v887, 4294901760
    %889 = vmatpush1.msra.mxu0 %v888
    %v890 = vand.u32 %v722, 4294901760
    %v891 = vsub.f32 %v722, %v890
    %v892 = vand.u32 %v891, 4294901760
    %v893 = vsub.f32 %v891, %v892
    %v894 = vand.u32 %v893, 4294901760
    %895 = vmatprep.subr.mxu0 %v894
    %v896 = vand.u32 %v721, 4294901760
    %v897 = vsub.f32 %v721, %v896
    %v898 = vand.u32 %v897, 4294901760
    %v899 = vsub.f32 %v897, %v898
    %v900 = vand.u32 %v899, 4294901760
    %901 = vmatpush1.msra.mxu0 %v900
    %v902 = vand.u32 %v752, 4294901760
    %v903 = vsub.f32 %v752, %v902
    %v904 = vand.u32 %v903, 4294901760
    %v905 = vsub.f32 %v903, %v904
    %v906 = vand.u32 %v905, 4294901760
    %907 = vmatprep.subr.mxu0 %v906
    %v908 = vand.u32 %v751, 4294901760
    %v909 = vsub.f32 %v751, %v908
    %v910 = vand.u32 %v909, 4294901760
    %v911 = vsub.f32 %v909, %v910
    %v912 = vand.u32 %v911, 4294901760
    %913 = vmatpush1.msra.mxu0 %v912
    %v914 = vand.u32 %v754, 4294901760
    %v915 = vsub.f32 %v754, %v914
    %v916 = vand.u32 %v915, 4294901760
    %v917 = vsub.f32 %v915, %v916
    %v918 = vand.u32 %v917, 4294901760
    %919 = vmatprep.subr.mxu0 %v918
    %v920 = vand.u32 %v753, 4294901760
    %v921 = vsub.f32 %v753, %v920
    %v922 = vand.u32 %v921, 4294901760
    %v923 = vsub.f32 %v921, %v922
    %v924 = vand.u32 %v923, 4294901760
    %925 = vmatpush1.msra.mxu0 %v924
    %926 = vmatprep.subr.mxu0 0.0
    %927 = vmatpush1.msra.mxu0 0.0
    %928 = vmatprep.subr.mxu0 0.0
    %929 = vmatpush1.msra.mxu0 0.0
    %930 = vmatprep.subr.mxu0 0.0
    %931 = vmatpush1.msra.mxu0 0.0
    %932 = vmatprep.subr.mxu0 0.0
    %933 = vmatpush1.msra.mxu0 0.0
    %934 = vmatprep.subr.mxu0 0.0
    %935 = vmatpush1.msra.mxu0 0.0
    %936 = vmatprep.subr.mxu0 0.0
    %937 = vmatpush1.msra.mxu0 0.0
    %938 = vmatprep.subr.mxu0 0.0
    %939 = vmatpush1.msra.mxu0 0.0
    %940 = vmatprep.subr.mxu0 0.0
    %941 = vmatpush1.msra.mxu0 0.0
    %942 = vmatprep.subr.mxu0 0.0
    %943 = vmatpush1.msra.mxu0 0.0
    %944 = vmatprep.subr.mxu0 0.0
    %945 = vmatpush1.msra.mxu0 0.0
    %946 = vmatprep.subr.mxu0 0.0
    %947 = vmatpush1.msra.mxu0 0.0
    %948 = vmatprep.subr.mxu0 0.0
    %949 = vmatpush1.msra.mxu0 0.0
    %950 = vmatprep.subr.mxu0 0.0
    %951 = vmatpush1.msra.mxu0 0.0
    %952 = vmatprep.subr.mxu0 0.0
    %953 = vmatpush1.msra.mxu0 0.0
    %954 = vmatprep.subr.mxu0 0.0
    %955 = vmatpush1.msra.mxu0 0.0
    %956 = vmatprep.subr.mxu0 0.0
    %957 = vmatpush1.msra.mxu0 0.0
    %958 = vmatprep.subr.mxu0 0.0
    %959 = vmatpush1.msra.mxu0 0.0
    %960 = vmatprep.subr.mxu0 0.0
    %961 = vmatpush1.msra.mxu0 0.0
    %962 = vmatprep.subr.mxu0 0.0
    %963 = vmatpush1.msra.mxu0 0.0
    %964 = vmatprep.subr.mxu0 0.0
    %965 = vmatpush1.msra.mxu0 0.0
    %966 = vmatprep.subr.mxu0 0.0
    %967 = vmatpush1.msra.mxu0 0.0
    %968 = vmatprep.subr.mxu0 0.0
    %969 = vmatpush1.msra.mxu0 0.0
    %970 = vmatprep.subr.mxu0 0.0
    %971 = vmatpush1.msra.mxu0 0.0
    %972 = vmatprep.subr.mxu0 0.0
    %973 = vmatpush1.msra.mxu0 0.0
    %974 = vmatprep.subr.mxu0 0.0
    %975 = vmatpush1.msra.mxu0 0.0
    %976 = vmatprep.subr.mxu0 0.0
    %977 = vmatpush1.msra.mxu0 0.0
    %978 = vmatprep.mubr.f32.mxu0 0.0
    %v979 = vand.u32 %v764, 4294901760
    %980 = vmatmul.mubr.f32.gmra.mrb[0].mxu0 %v979
    %v981 = vpop.f32.mrb[0].mxu0
    %v982 = vadd.f32 %v850, %v981
    %v983 = vpop.f32.mrb[0].mxu0
    %v984 = vadd.f32 %v852, %v983
    %985 = vdwg.mxu0
    %v986 = vand.u32 %v736, 4294901760
    %v987 = vsub.f32 %v736, %v986
    %988 = vmatprep.subr.mxu0 %v987
    %v989 = vand.u32 %v735, 4294901760
    %v990 = vsub.f32 %v735, %v989
    %991 = vmatpush1.msra.mxu0 %v990
    %v992 = vand.u32 %v738, 4294901760
    %v993 = vsub.f32 %v738, %v992
    %994 = vmatprep.subr.mxu0 %v993
    %v995 = vand.u32 %v737, 4294901760
    %v996 = vsub.f32 %v737, %v995
    %997 = vmatpush1.msra.mxu0 %v996
    %v998 = vand.u32 %v720, 4294901760
    %v999 = vsub.f32 %v720, %v998
    %1000 = vmatprep.subr.mxu0 %v999
    %v1001 = vand.u32 %v719, 4294901760
    %v1002 = vsub.f32 %v719, %v1001
    %1003 = vmatpush1.msra.mxu0 %v1002
    %v1004 = vand.u32 %v722, 4294901760
    %v1005 = vsub.f32 %v722, %v1004
    %1006 = vmatprep.subr.mxu0 %v1005
    %v1007 = vand.u32 %v721, 4294901760
    %v1008 = vsub.f32 %v721, %v1007
    %1009 = vmatpush1.msra.mxu0 %v1008
    %v1010 = vand.u32 %v752, 4294901760
    %v1011 = vsub.f32 %v752, %v1010
    %1012 = vmatprep.subr.mxu0 %v1011
    %v1013 = vand.u32 %v751, 4294901760
    %v1014 = vsub.f32 %v751, %v1013
    %1015 = vmatpush1.msra.mxu0 %v1014
    %v1016 = vand.u32 %v754, 4294901760
    %v1017 = vsub.f32 %v754, %v1016
    %1018 = vmatprep.subr.mxu0 %v1017
    %v1019 = vand.u32 %v753, 4294901760
    %v1020 = vsub.f32 %v753, %v1019
    %1021 = vmatpush1.msra.mxu0 %v1020
    %1022 = vmatprep.subr.mxu0 0.0
    %1023 = vmatpush1.msra.mxu0 0.0
    %1024 = vmatprep.subr.mxu0 0.0
    %1025 = vmatpush1.msra.mxu0 0.0
    %1026 = vmatprep.subr.mxu0 0.0
    %1027 = vmatpush1.msra.mxu0 0.0
    %1028 = vmatprep.subr.mxu0 0.0
    %1029 = vmatpush1.msra.mxu0 0.0
    %1030 = vmatprep.subr.mxu0 0.0
    %1031 = vmatpush1.msra.mxu0 0.0
    %1032 = vmatprep.subr.mxu0 0.0
    %1033 = vmatpush1.msra.mxu0 0.0
    %1034 = vmatprep.subr.mxu0 0.0
    %1035 = vmatpush1.msra.mxu0 0.0
    %1036 = vmatprep.subr.mxu0 0.0
    %1037 = vmatpush1.msra.mxu0 0.0
    %1038 = vmatprep.subr.mxu0 0.0
    %1039 = vmatpush1.msra.mxu0 0.0
    %1040 = vmatprep.subr.mxu0 0.0
    %1041 = vmatpush1.msra.mxu0 0.0
    %1042 = vmatprep.subr.mxu0 0.0
    %1043 = vmatpush1.msra.mxu0 0.0
    %1044 = vmatprep.subr.mxu0 0.0
    %1045 = vmatpush1.msra.mxu0 0.0
    %1046 = vmatprep.subr.mxu0 0.0
    %1047 = vmatpush1.msra.mxu0 0.0
    %1048 = vmatprep.subr.mxu0 0.0
    %1049 = vmatpush1.msra.mxu0 0.0
    %1050 = vmatprep.subr.mxu0 0.0
    %1051 = vmatpush1.msra.mxu0 0.0
    %1052 = vmatprep.subr.mxu0 0.0
    %1053 = vmatpush1.msra.mxu0 0.0
    %1054 = vmatprep.subr.mxu0 0.0
    %1055 = vmatpush1.msra.mxu0 0.0
    %1056 = vmatprep.subr.mxu0 0.0
    %1057 = vmatpush1.msra.mxu0 0.0
    %1058 = vmatprep.subr.mxu0 0.0
    %1059 = vmatpush1.msra.mxu0 0.0
    %1060 = vmatprep.subr.mxu0 0.0
    %1061 = vmatpush1.msra.mxu0 0.0
    %1062 = vmatprep.subr.mxu0 0.0
    %1063 = vmatpush1.msra.mxu0 0.0
    %1064 = vmatprep.subr.mxu0 0.0
    %1065 = vmatpush1.msra.mxu0 0.0
    %1066 = vmatprep.subr.mxu0 0.0
    %1067 = vmatpush1.msra.mxu0 0.0
    %1068 = vmatprep.subr.mxu0 0.0
    %1069 = vmatpush1.msra.mxu0 0.0
    %1070 = vmatprep.subr.mxu0 0.0
    %1071 = vmatpush1.msra.mxu0 0.0
    %1072 = vmatprep.subr.mxu0 0.0
    %1073 = vmatpush1.msra.mxu0 0.0
    %1074 = vmatprep.mubr.f32.mxu0 0.0
    %v1075 = vand.u32 %v764, 4294901760
    %v1076 = vsub.f32 %v764, %v1075
    %1077 = vmatmul.mubr.f32.gmra.mrb[0].mxu0 %v1076
    %v1078 = vpop.f32.mrb[0].mxu0
    %v1079 = vadd.f32 %v982, %v1078
    %v1080 = vpop.f32.mrb[0].mxu0
    %v1081 = vadd.f32 %v984, %v1080
    %1082 = vdwg.mxu0
    %v1083 = vand.u32 %v736, 4294901760
    %1084 = vmatprep.subr.mxu0 %v1083
    %v1085 = vand.u32 %v735, 4294901760
    %1086 = vmatpush1.msra.mxu0 %v1085
    %v1087 = vand.u32 %v738, 4294901760
    %1088 = vmatprep.subr.mxu0 %v1087
    %v1089 = vand.u32 %v737, 4294901760
    %1090 = vmatpush1.msra.mxu0 %v1089
    %v1091 = vand.u32 %v720, 4294901760
    %1092 = vmatprep.subr.mxu0 %v1091
    %v1093 = vand.u32 %v719, 4294901760
    %1094 = vmatpush1.msra.mxu0 %v1093
    %v1095 = vand.u32 %v722, 4294901760
    %1096 = vmatprep.subr.mxu0 %v1095
    %v1097 = vand.u32 %v721, 4294901760
    %1098 = vmatpush1.msra.mxu0 %v1097
    %v1099 = vand.u32 %v752, 4294901760
    %1100 = vmatprep.subr.mxu0 %v1099
    %v1101 = vand.u32 %v751, 4294901760
    %1102 = vmatpush1.msra.mxu0 %v1101
    %v1103 = vand.u32 %v754, 4294901760
    %1104 = vmatprep.subr.mxu0 %v1103
    %v1105 = vand.u32 %v753, 4294901760
    %1106 = vmatpush1.msra.mxu0 %v1105
    %1107 = vmatprep.subr.mxu0 0.0
    %1108 = vmatpush1.msra.mxu0 0.0
    %1109 = vmatprep.subr.mxu0 0.0
    %1110 = vmatpush1.msra.mxu0 0.0
    %1111 = vmatprep.subr.mxu0 0.0
    %1112 = vmatpush1.msra.mxu0 0.0
    %1113 = vmatprep.subr.mxu0 0.0
    %1114 = vmatpush1.msra.mxu0 0.0
    %1115 = vmatprep.subr.mxu0 0.0
    %1116 = vmatpush1.msra.mxu0 0.0
    %1117 = vmatprep.subr.mxu0 0.0
    %1118 = vmatpush1.msra.mxu0 0.0
    %1119 = vmatprep.subr.mxu0 0.0
    %1120 = vmatpush1.msra.mxu0 0.0
    %1121 = vmatprep.subr.mxu0 0.0
    %1122 = vmatpush1.msra.mxu0 0.0
    %1123 = vmatprep.subr.mxu0 0.0
    %1124 = vmatpush1.msra.mxu0 0.0
    %1125 = vmatprep.subr.mxu0 0.0
    %1126 = vmatpush1.msra.mxu0 0.0
    %1127 = vmatprep.subr.mxu0 0.0
    %1128 = vmatpush1.msra.mxu0 0.0
    %1129 = vmatprep.subr.mxu0 0.0
    %1130 = vmatpush1.msra.mxu0 0.0
    %1131 = vmatprep.subr.mxu0 0.0
    %1132 = vmatpush1.msra.mxu0 0.0
    %1133 = vmatprep.subr.mxu0 0.0
    %1134 = vmatpush1.msra.mxu0 0.0
    %1135 = vmatprep.subr.mxu0 0.0
    %1136 = vmatpush1.msra.mxu0 0.0
    %1137 = vmatprep.subr.mxu0 0.0
    %1138 = vmatpush1.msra.mxu0 0.0
    %1139 = vmatprep.subr.mxu0 0.0
    %1140 = vmatpush1.msra.mxu0 0.0
    %1141 = vmatprep.subr.mxu0 0.0
    %1142 = vmatpush1.msra.mxu0 0.0
    %1143 = vmatprep.subr.mxu0 0.0
    %1144 = vmatpush1.msra.mxu0 0.0
    %1145 = vmatprep.subr.mxu0 0.0
    %1146 = vmatpush1.msra.mxu0 0.0
    %1147 = vmatprep.subr.mxu0 0.0
    %1148 = vmatpush1.msra.mxu0 0.0
    %1149 = vmatprep.subr.mxu0 0.0
    %1150 = vmatpush1.msra.mxu0 0.0
    %1151 = vmatprep.subr.mxu0 0.0
    %1152 = vmatpush1.msra.mxu0 0.0
    %1153 = vmatprep.subr.mxu0 0.0
    %1154 = vmatpush1.msra.mxu0 0.0
    %1155 = vmatprep.subr.mxu0 0.0
    %1156 = vmatpush1.msra.mxu0 0.0
    %1157 = vmatprep.subr.mxu0 0.0
    %1158 = vmatpush1.msra.mxu0 0.0
    %1159 = vmatprep.mubr.f32.mxu0 0.0
    %v1160 = vand.u32 %v764, 4294901760
    %v1161 = vsub.f32 %v764, %v1160
    %v1162 = vand.u32 %v1161, 4294901760
    %1163 = vmatmul.mubr.f32.gmra.mrb[0].mxu0 %v1162
    %v1164 = vpop.f32.mrb[0].mxu0
    %v1165 = vadd.f32 %v1079, %v1164
    %v1166 = vpop.f32.mrb[0].mxu0
    %v1167 = vadd.f32 %v1081, %v1166
    %1168 = vdwg.mxu0
    %v1169 = vand.u32 %v736, 4294901760
    %v1170 = vsub.f32 %v736, %v1169
    %v1171 = vand.u32 %v1170, 4294901760
    %1172 = vmatprep.subr.mxu0 %v1171
    %v1173 = vand.u32 %v735, 4294901760
    %v1174 = vsub.f32 %v735, %v1173
    %v1175 = vand.u32 %v1174, 4294901760
    %1176 = vmatpush1.msra.mxu0 %v1175
    %v1177 = vand.u32 %v738, 4294901760
    %v1178 = vsub.f32 %v738, %v1177
    %v1179 = vand.u32 %v1178, 4294901760
    %1180 = vmatprep.subr.mxu0 %v1179
    %v1181 = vand.u32 %v737, 4294901760
    %v1182 = vsub.f32 %v737, %v1181
    %v1183 = vand.u32 %v1182, 4294901760
    %1184 = vmatpush1.msra.mxu0 %v1183
    %v1185 = vand.u32 %v720, 4294901760
    %v1186 = vsub.f32 %v720, %v1185
    %v1187 = vand.u32 %v1186, 4294901760
    %1188 = vmatprep.subr.mxu0 %v1187
    %v1189 = vand.u32 %v719, 4294901760
    %v1190 = vsub.f32 %v719, %v1189
    %v1191 = vand.u32 %v1190, 4294901760
    %1192 = vmatpush1.msra.mxu0 %v1191
    %v1193 = vand.u32 %v722, 4294901760
    %v1194 = vsub.f32 %v722, %v1193
    %v1195 = vand.u32 %v1194, 4294901760
    %1196 = vmatprep.subr.mxu0 %v1195
    %v1197 = vand.u32 %v721, 4294901760
    %v1198 = vsub.f32 %v721, %v1197
    %v1199 = vand.u32 %v1198, 4294901760
    %1200 = vmatpush1.msra.mxu0 %v1199
    %v1201 = vand.u32 %v752, 4294901760
    %v1202 = vsub.f32 %v752, %v1201
    %v1203 = vand.u32 %v1202, 4294901760
    %1204 = vmatprep.subr.mxu0 %v1203
    %v1205 = vand.u32 %v751, 4294901760
    %v1206 = vsub.f32 %v751, %v1205
    %v1207 = vand.u32 %v1206, 4294901760
    %1208 = vmatpush1.msra.mxu0 %v1207
    %v1209 = vand.u32 %v754, 4294901760
    %v1210 = vsub.f32 %v754, %v1209
    %v1211 = vand.u32 %v1210, 4294901760
    %1212 = vmatprep.subr.mxu0 %v1211
    %v1213 = vand.u32 %v753, 4294901760
    %v1214 = vsub.f32 %v753, %v1213
    %v1215 = vand.u32 %v1214, 4294901760
    %1216 = vmatpush1.msra.mxu0 %v1215
    %1217 = vmatprep.subr.mxu0 0.0
    %1218 = vmatpush1.msra.mxu0 0.0
    %1219 = vmatprep.subr.mxu0 0.0
    %1220 = vmatpush1.msra.mxu0 0.0
    %1221 = vmatprep.subr.mxu0 0.0
    %1222 = vmatpush1.msra.mxu0 0.0
    %1223 = vmatprep.subr.mxu0 0.0
    %1224 = vmatpush1.msra.mxu0 0.0
    %1225 = vmatprep.subr.mxu0 0.0
    %1226 = vmatpush1.msra.mxu0 0.0
    %1227 = vmatprep.subr.mxu0 0.0
    %1228 = vmatpush1.msra.mxu0 0.0
    %1229 = vmatprep.subr.mxu0 0.0
    %1230 = vmatpush1.msra.mxu0 0.0
    %1231 = vmatprep.subr.mxu0 0.0
    %1232 = vmatpush1.msra.mxu0 0.0
    %1233 = vmatprep.subr.mxu0 0.0
    %1234 = vmatpush1.msra.mxu0 0.0
    %1235 = vmatprep.subr.mxu0 0.0
    %1236 = vmatpush1.msra.mxu0 0.0
    %1237 = vmatprep.subr.mxu0 0.0
    %1238 = vmatpush1.msra.mxu0 0.0
    %1239 = vmatprep.subr.mxu0 0.0
    %1240 = vmatpush1.msra.mxu0 0.0
    %1241 = vmatprep.subr.mxu0 0.0
    %1242 = vmatpush1.msra.mxu0 0.0
    %1243 = vmatprep.subr.mxu0 0.0
    %1244 = vmatpush1.msra.mxu0 0.0
    %1245 = vmatprep.subr.mxu0 0.0
    %1246 = vmatpush1.msra.mxu0 0.0
    %1247 = vmatprep.subr.mxu0 0.0
    %1248 = vmatpush1.msra.mxu0 0.0
    %1249 = vmatprep.subr.mxu0 0.0
    %1250 = vmatpush1.msra.mxu0 0.0
    %1251 = vmatprep.subr.mxu0 0.0
    %1252 = vmatpush1.msra.mxu0 0.0
    %1253 = vmatprep.subr.mxu0 0.0
    %1254 = vmatpush1.msra.mxu0 0.0
    %1255 = vmatprep.subr.mxu0 0.0
    %1256 = vmatpush1.msra.mxu0 0.0
    %1257 = vmatprep.subr.mxu0 0.0
    %1258 = vmatpush1.msra.mxu0 0.0
    %1259 = vmatprep.subr.mxu0 0.0
    %1260 = vmatpush1.msra.mxu0 0.0
    %1261 = vmatprep.subr.mxu0 0.0
    %1262 = vmatpush1.msra.mxu0 0.0
    %1263 = vmatprep.subr.mxu0 0.0
    %1264 = vmatpush1.msra.mxu0 0.0
    %1265 = vmatprep.subr.mxu0 0.0
    %1266 = vmatpush1.msra.mxu0 0.0
    %1267 = vmatprep.subr.mxu0 0.0
    %1268 = vmatpush1.msra.mxu0 0.0
    %1269 = vmatprep.mubr.f32.mxu0 0.0
    %v1270 = vand.u32 %v764, 4294901760
    %1271 = vmatmul.mubr.f32.gmra.mrb[0].mxu0 %v1270
    %v1272 = vpop.f32.mrb[0].mxu0
    %v1273 = vadd.f32 %v1165, %v1272
    %v1274 = vpop.f32.mrb[0].mxu0
    %v1275 = vadd.f32 %v1167, %v1274
    %1276 = vdwg.mxu0
    %v1277 = vand.u32 %v736, 4294901760
    %1278 = vmatprep.subr.mxu0 %v1277
    %v1279 = vand.u32 %v735, 4294901760
    %1280 = vmatpush1.msra.mxu0 %v1279
    %v1281 = vand.u32 %v738, 4294901760
    %1282 = vmatprep.subr.mxu0 %v1281
    %v1283 = vand.u32 %v737, 4294901760
    %1284 = vmatpush1.msra.mxu0 %v1283
    %v1285 = vand.u32 %v720, 4294901760
    %1286 = vmatprep.subr.mxu0 %v1285
    %v1287 = vand.u32 %v719, 4294901760
    %1288 = vmatpush1.msra.mxu0 %v1287
    %v1289 = vand.u32 %v722, 4294901760
    %1290 = vmatprep.subr.mxu0 %v1289
    %v1291 = vand.u32 %v721, 4294901760
    %1292 = vmatpush1.msra.mxu0 %v1291
    %v1293 = vand.u32 %v752, 4294901760
    %1294 = vmatprep.subr.mxu0 %v1293
    %v1295 = vand.u32 %v751, 4294901760
    %1296 = vmatpush1.msra.mxu0 %v1295
    %v1297 = vand.u32 %v754, 4294901760
    %1298 = vmatprep.subr.mxu0 %v1297
    %v1299 = vand.u32 %v753, 4294901760
    %1300 = vmatpush1.msra.mxu0 %v1299
    %1301 = vmatprep.subr.mxu0 0.0
    %1302 = vmatpush1.msra.mxu0 0.0
    %1303 = vmatprep.subr.mxu0 0.0
    %1304 = vmatpush1.msra.mxu0 0.0
    %1305 = vmatprep.subr.mxu0 0.0
    %1306 = vmatpush1.msra.mxu0 0.0
    %1307 = vmatprep.subr.mxu0 0.0
    %1308 = vmatpush1.msra.mxu0 0.0
    %1309 = vmatprep.subr.mxu0 0.0
    %1310 = vmatpush1.msra.mxu0 0.0
    %1311 = vmatprep.subr.mxu0 0.0
    %1312 = vmatpush1.msra.mxu0 0.0
    %1313 = vmatprep.subr.mxu0 0.0
    %1314 = vmatpush1.msra.mxu0 0.0
    %1315 = vmatprep.subr.mxu0 0.0
    %1316 = vmatpush1.msra.mxu0 0.0
    %1317 = vmatprep.subr.mxu0 0.0
    %1318 = vmatpush1.msra.mxu0 0.0
    %1319 = vmatprep.subr.mxu0 0.0
    %1320 = vmatpush1.msra.mxu0 0.0
    %1321 = vmatprep.subr.mxu0 0.0
    %1322 = vmatpush1.msra.mxu0 0.0
    %1323 = vmatprep.subr.mxu0 0.0
    %1324 = vmatpush1.msra.mxu0 0.0
    %1325 = vmatprep.subr.mxu0 0.0
    %1326 = vmatpush1.msra.mxu0 0.0
    %1327 = vmatprep.subr.mxu0 0.0
    %1328 = vmatpush1.msra.mxu0 0.0
    %1329 = vmatprep.subr.mxu0 0.0
    %1330 = vmatpush1.msra.mxu0 0.0
    %1331 = vmatprep.subr.mxu0 0.0
    %1332 = vmatpush1.msra.mxu0 0.0
    %1333 = vmatprep.subr.mxu0 0.0
    %1334 = vmatpush1.msra.mxu0 0.0
    %1335 = vmatprep.subr.mxu0 0.0
    %1336 = vmatpush1.msra.mxu0 0.0
    %1337 = vmatprep.subr.mxu0 0.0
    %1338 = vmatpush1.msra.mxu0 0.0
    %1339 = vmatprep.subr.mxu0 0.0
    %1340 = vmatpush1.msra.mxu0 0.0
    %1341 = vmatprep.subr.mxu0 0.0
    %1342 = vmatpush1.msra.mxu0 0.0
    %1343 = vmatprep.subr.mxu0 0.0
    %1344 = vmatpush1.msra.mxu0 0.0
    %1345 = vmatprep.subr.mxu0 0.0
    %1346 = vmatpush1.msra.mxu0 0.0
    %1347 = vmatprep.subr.mxu0 0.0
    %1348 = vmatpush1.msra.mxu0 0.0
    %1349 = vmatprep.subr.mxu0 0.0
    %1350 = vmatpush1.msra.mxu0 0.0
    %1351 = vmatprep.subr.mxu0 0.0
    %1352 = vmatpush1.msra.mxu0 0.0
    %1353 = vmatprep.mubr.f32.mxu0 0.0
    %v1354 = vand.u32 %v764, 4294901760
    %1355 = vmatmul.mubr.f32.gmra.mrb[0].mxu0 %v1354
    %v1356 = vpop.f32.mrb[0].mxu0
    %v1357 = vadd.f32 %v1273, %v1356
    %v1358 = vpop.f32.mrb[0].mxu0
    %v1359 = vadd.f32 %v1275, %v1358
    %1360 = vdwg.mxu0
    %1361 = vrot.lane.b32.xlu0 %v68, 1
    %v1362 = vpop.permute.xlu0 %1361
    %1363 = vrot.lane.b32.xlu0 %v70, 1
    %v1364 = vpop.permute.xlu0 %1363
    %v1365 = vsel %vm102, %v1362, %v1364
    %v1366 = vsel %vm102, %v1364, %v1362
    %v1367 = vsel %vm111, %v1366, 0.0
    %v1368 = vsel %vm112, %v1365, 0.0
    %1369 = vrot.lane.b32.xlu0 %v68, 127
    %v1370 = vpop.permute.xlu0 %1369
    %1371 = vrot.lane.b32.xlu0 %v70, 127
    %v1372 = vpop.permute.xlu0 %1371
    %v1373 = vsel %vm119, %v1370, %v1372
    %v1374 = vsel %vm119, %v1372, %v1370
    %v1375 = vsel %vm128, %v1373, 0.0
    %v1376 = vsel %vm129, %v1374, 0.0
    %v1377 = vld [vmem:[%s6] sm:$0xff]
    %v1378 = vld [vmem:[%s6 + $0x8] sm:$0xff]
    %v1379 = vld [vmem:[%s7] sm:$0xff]
    %v1380 = vld [vmem:[%s7 + $0x8] sm:$0xff]
    %1382 = vset.pattern.permute.xlu0 0
    %1383 = vperm.xlu0 %1382, %v1379
    %v1384 = vpop.permute.xlu0 %1383
    %1387 = vset.pattern.permute.xlu0 0
    %1388 = vperm.xlu0 %1387, %v1380
    %v1389 = vpop.permute.xlu0 %1388
    %v1392 = vsel %vm146, %v1377, 0
    %v1395 = vsel %vm146, %v1378, 0
    %v1397 = vand.u32 %v1368, 4294901760
    %1398 = vmatprep.subr.mxu0 %v1397
    %v1399 = vand.u32 %v1367, 4294901760
    %1400 = vmatpush1.msra.mxu0 %v1399
    %v1401 = vand.u32 %v70, 4294901760
    %1402 = vmatprep.subr.mxu0 %v1401
    %v1403 = vand.u32 %v68, 4294901760
    %1404 = vmatpush1.msra.mxu0 %v1403
    %v1405 = vand.u32 %v1376, 4294901760
    %1406 = vmatprep.subr.mxu0 %v1405
    %v1407 = vand.u32 %v1375, 4294901760
    %1408 = vmatpush1.msra.mxu0 %v1407
    %1409 = vmatprep.subr.mxu0 0.0
    %1410 = vmatpush1.msra.mxu0 0.0
    %1411 = vmatprep.subr.mxu0 0.0
    %1412 = vmatpush1.msra.mxu0 0.0
    %1413 = vmatprep.subr.mxu0 0.0
    %1414 = vmatpush1.msra.mxu0 0.0
    %1415 = vmatprep.subr.mxu0 0.0
    %1416 = vmatpush1.msra.mxu0 0.0
    %1417 = vmatprep.subr.mxu0 0.0
    %1418 = vmatpush1.msra.mxu0 0.0
    %1419 = vmatprep.subr.mxu0 0.0
    %1420 = vmatpush1.msra.mxu0 0.0
    %1421 = vmatprep.subr.mxu0 0.0
    %1422 = vmatpush1.msra.mxu0 0.0
    %1423 = vmatprep.subr.mxu0 0.0
    %1424 = vmatpush1.msra.mxu0 0.0
    %1425 = vmatprep.subr.mxu0 0.0
    %1426 = vmatpush1.msra.mxu0 0.0
    %1427 = vmatprep.subr.mxu0 0.0
    %1428 = vmatpush1.msra.mxu0 0.0
    %1429 = vmatprep.subr.mxu0 0.0
    %1430 = vmatpush1.msra.mxu0 0.0
    %1431 = vmatprep.subr.mxu0 0.0
    %1432 = vmatpush1.msra.mxu0 0.0
    %1433 = vmatprep.subr.mxu0 0.0
    %1434 = vmatpush1.msra.mxu0 0.0
    %1435 = vmatprep.subr.mxu0 0.0
    %1436 = vmatpush1.msra.mxu0 0.0
    %1437 = vmatprep.subr.mxu0 0.0
    %1438 = vmatpush1.msra.mxu0 0.0
    %1439 = vmatprep.subr.mxu0 0.0
    %1440 = vmatpush1.msra.mxu0 0.0
    %1441 = vmatprep.subr.mxu0 0.0
    %1442 = vmatpush1.msra.mxu0 0.0
    %1443 = vmatprep.subr.mxu0 0.0
    %1444 = vmatpush1.msra.mxu0 0.0
    %1445 = vmatprep.subr.mxu0 0.0
    %1446 = vmatpush1.msra.mxu0 0.0
    %1447 = vmatprep.subr.mxu0 0.0
    %1448 = vmatpush1.msra.mxu0 0.0
    %1449 = vmatprep.subr.mxu0 0.0
    %1450 = vmatpush1.msra.mxu0 0.0
    %1451 = vmatprep.subr.mxu0 0.0
    %1452 = vmatpush1.msra.mxu0 0.0
    %1453 = vmatprep.subr.mxu0 0.0
    %1454 = vmatpush1.msra.mxu0 0.0
    %1455 = vmatprep.subr.mxu0 0.0
    %1456 = vmatpush1.msra.mxu0 0.0
    %1457 = vmatprep.subr.mxu0 0.0
    %1458 = vmatpush1.msra.mxu0 0.0
    %1459 = vmatprep.subr.mxu0 0.0
    %1460 = vmatpush1.msra.mxu0 0.0
    %1461 = vmatprep.subr.mxu0 0.0
    %1462 = vmatpush1.msra.mxu0 0.0
    %1463 = vmatprep.subr.mxu0 0.0
    %1464 = vmatpush1.msra.mxu0 0.0
    %1465 = vmatprep.subr.mxu0 0.0
    %1466 = vmatpush1.msra.mxu0 0.0
    %1467 = vmatprep.mubr.f32.mxu0 0.0
    %v1468 = vand.u32 %v1392, 4294901760
    %v1469 = vsub.f32 %v1392, %v1468
    %v1470 = vand.u32 %v1469, 4294901760
    %v1471 = vsub.f32 %v1469, %v1470
    %v1472 = vand.u32 %v1471, 4294901760
    %1473 = vmatmul.mubr.f32.gmra.mrb[0].mxu0 %v1472
    %v1474 = vpop.f32.mrb[0].mxu0
    %v1475 = vadd.f32 %v1384, %v1474
    %v1476 = vpop.f32.mrb[0].mxu0
    %v1477 = vadd.f32 %v1384, %v1476
    %1478 = vmatprep.mubr.f32.mxu0 0.0
    %v1479 = vand.u32 %v1395, 4294901760
    %v1480 = vsub.f32 %v1395, %v1479
    %v1481 = vand.u32 %v1480, 4294901760
    %v1482 = vsub.f32 %v1480, %v1481
    %v1483 = vand.u32 %v1482, 4294901760
    %1484 = vmatmul.mubr.f32.gmra.mrb[0].mxu0 %v1483
    %v1485 = vpop.f32.mrb[0].mxu0
    %v1486 = vadd.f32 %v1389, %v1485
    %v1487 = vpop.f32.mrb[0].mxu0
    %v1488 = vadd.f32 %v1389, %v1487
    %1489 = vdwg.mxu0
    %v1490 = vand.u32 %v1368, 4294901760
    %v1491 = vsub.f32 %v1368, %v1490
    %v1492 = vand.u32 %v1491, 4294901760
    %v1493 = vsub.f32 %v1491, %v1492
    %v1494 = vand.u32 %v1493, 4294901760
    %1495 = vmatprep.subr.mxu0 %v1494
    %v1496 = vand.u32 %v1367, 4294901760
    %v1497 = vsub.f32 %v1367, %v1496
    %v1498 = vand.u32 %v1497, 4294901760
    %v1499 = vsub.f32 %v1497, %v1498
    %v1500 = vand.u32 %v1499, 4294901760
    %1501 = vmatpush1.msra.mxu0 %v1500
    %v1502 = vand.u32 %v70, 4294901760
    %v1503 = vsub.f32 %v70, %v1502
    %v1504 = vand.u32 %v1503, 4294901760
    %v1505 = vsub.f32 %v1503, %v1504
    %v1506 = vand.u32 %v1505, 4294901760
    %1507 = vmatprep.subr.mxu0 %v1506
    %v1508 = vand.u32 %v68, 4294901760
    %v1509 = vsub.f32 %v68, %v1508
    %v1510 = vand.u32 %v1509, 4294901760
    %v1511 = vsub.f32 %v1509, %v1510
    %v1512 = vand.u32 %v1511, 4294901760
    %1513 = vmatpush1.msra.mxu0 %v1512
    %v1514 = vand.u32 %v1376, 4294901760
    %v1515 = vsub.f32 %v1376, %v1514
    %v1516 = vand.u32 %v1515, 4294901760
    %v1517 = vsub.f32 %v1515, %v1516
    %v1518 = vand.u32 %v1517, 4294901760
    %1519 = vmatprep.subr.mxu0 %v1518
    %v1520 = vand.u32 %v1375, 4294901760
    %v1521 = vsub.f32 %v1375, %v1520
    %v1522 = vand.u32 %v1521, 4294901760
    %v1523 = vsub.f32 %v1521, %v1522
    %v1524 = vand.u32 %v1523, 4294901760
    %1525 = vmatpush1.msra.mxu0 %v1524
    %1526 = vmatprep.subr.mxu0 0.0
    %1527 = vmatpush1.msra.mxu0 0.0
    %1528 = vmatprep.subr.mxu0 0.0
    %1529 = vmatpush1.msra.mxu0 0.0
    %1530 = vmatprep.subr.mxu0 0.0
    %1531 = vmatpush1.msra.mxu0 0.0
    %1532 = vmatprep.subr.mxu0 0.0
    %1533 = vmatpush1.msra.mxu0 0.0
    %1534 = vmatprep.subr.mxu0 0.0
    %1535 = vmatpush1.msra.mxu0 0.0
    %1536 = vmatprep.subr.mxu0 0.0
    %1537 = vmatpush1.msra.mxu0 0.0
    %1538 = vmatprep.subr.mxu0 0.0
    %1539 = vmatpush1.msra.mxu0 0.0
    %1540 = vmatprep.subr.mxu0 0.0
    %1541 = vmatpush1.msra.mxu0 0.0
    %1542 = vmatprep.subr.mxu0 0.0
    %1543 = vmatpush1.msra.mxu0 0.0
    %1544 = vmatprep.subr.mxu0 0.0
    %1545 = vmatpush1.msra.mxu0 0.0
    %1546 = vmatprep.subr.mxu0 0.0
    %1547 = vmatpush1.msra.mxu0 0.0
    %1548 = vmatprep.subr.mxu0 0.0
    %1549 = vmatpush1.msra.mxu0 0.0
    %1550 = vmatprep.subr.mxu0 0.0
    %1551 = vmatpush1.msra.mxu0 0.0
    %1552 = vmatprep.subr.mxu0 0.0
    %1553 = vmatpush1.msra.mxu0 0.0
    %1554 = vmatprep.subr.mxu0 0.0
    %1555 = vmatpush1.msra.mxu0 0.0
    %1556 = vmatprep.subr.mxu0 0.0
    %1557 = vmatpush1.msra.mxu0 0.0
    %1558 = vmatprep.subr.mxu0 0.0
    %1559 = vmatpush1.msra.mxu0 0.0
    %1560 = vmatprep.subr.mxu0 0.0
    %1561 = vmatpush1.msra.mxu0 0.0
    %1562 = vmatprep.subr.mxu0 0.0
    %1563 = vmatpush1.msra.mxu0 0.0
    %1564 = vmatprep.subr.mxu0 0.0
    %1565 = vmatpush1.msra.mxu0 0.0
    %1566 = vmatprep.subr.mxu0 0.0
    %1567 = vmatpush1.msra.mxu0 0.0
    %1568 = vmatprep.subr.mxu0 0.0
    %1569 = vmatpush1.msra.mxu0 0.0
    %1570 = vmatprep.subr.mxu0 0.0
    %1571 = vmatpush1.msra.mxu0 0.0
    %1572 = vmatprep.subr.mxu0 0.0
    %1573 = vmatpush1.msra.mxu0 0.0
    %1574 = vmatprep.subr.mxu0 0.0
    %1575 = vmatpush1.msra.mxu0 0.0
    %1576 = vmatprep.subr.mxu0 0.0
    %1577 = vmatpush1.msra.mxu0 0.0
    %1578 = vmatprep.subr.mxu0 0.0
    %1579 = vmatpush1.msra.mxu0 0.0
    %1580 = vmatprep.subr.mxu0 0.0
    %1581 = vmatpush1.msra.mxu0 0.0
    %1582 = vmatprep.subr.mxu0 0.0
    %1583 = vmatpush1.msra.mxu0 0.0
    %1584 = vmatprep.mubr.f32.mxu0 0.0
    %v1585 = vand.u32 %v1392, 4294901760
    %1586 = vmatmul.mubr.f32.gmra.mrb[0].mxu0 %v1585
    %v1587 = vpop.f32.mrb[0].mxu0
    %v1588 = vadd.f32 %v1475, %v1587
    %v1589 = vpop.f32.mrb[0].mxu0
    %v1590 = vadd.f32 %v1477, %v1589
    %1591 = vmatprep.mubr.f32.mxu0 0.0
    %v1592 = vand.u32 %v1395, 4294901760
    %1593 = vmatmul.mubr.f32.gmra.mrb[0].mxu0 %v1592
    %v1594 = vpop.f32.mrb[0].mxu0
    %v1595 = vadd.f32 %v1486, %v1594
    %v1596 = vpop.f32.mrb[0].mxu0
    %v1597 = vadd.f32 %v1488, %v1596
    %1598 = vdwg.mxu0
    %v1599 = vand.u32 %v1368, 4294901760
    %v1600 = vsub.f32 %v1368, %v1599
    %1601 = vmatprep.subr.mxu0 %v1600
    %v1602 = vand.u32 %v1367, 4294901760
    %v1603 = vsub.f32 %v1367, %v1602
    %1604 = vmatpush1.msra.mxu0 %v1603
    %v1605 = vand.u32 %v70, 4294901760
    %v1606 = vsub.f32 %v70, %v1605
    %1607 = vmatprep.subr.mxu0 %v1606
    %v1608 = vand.u32 %v68, 4294901760
    %v1609 = vsub.f32 %v68, %v1608
    %1610 = vmatpush1.msra.mxu0 %v1609
    %v1611 = vand.u32 %v1376, 4294901760
    %v1612 = vsub.f32 %v1376, %v1611
    %1613 = vmatprep.subr.mxu0 %v1612
    %v1614 = vand.u32 %v1375, 4294901760
    %v1615 = vsub.f32 %v1375, %v1614
    %1616 = vmatpush1.msra.mxu0 %v1615
    %1617 = vmatprep.subr.mxu0 0.0
    %1618 = vmatpush1.msra.mxu0 0.0
    %1619 = vmatprep.subr.mxu0 0.0
    %1620 = vmatpush1.msra.mxu0 0.0
    %1621 = vmatprep.subr.mxu0 0.0
    %1622 = vmatpush1.msra.mxu0 0.0
    %1623 = vmatprep.subr.mxu0 0.0
    %1624 = vmatpush1.msra.mxu0 0.0
    %1625 = vmatprep.subr.mxu0 0.0
    %1626 = vmatpush1.msra.mxu0 0.0
    %1627 = vmatprep.subr.mxu0 0.0
    %1628 = vmatpush1.msra.mxu0 0.0
    %1629 = vmatprep.subr.mxu0 0.0
    %1630 = vmatpush1.msra.mxu0 0.0
    %1631 = vmatprep.subr.mxu0 0.0
    %1632 = vmatpush1.msra.mxu0 0.0
    %1633 = vmatprep.subr.mxu0 0.0
    %1634 = vmatpush1.msra.mxu0 0.0
    %1635 = vmatprep.subr.mxu0 0.0
    %1636 = vmatpush1.msra.mxu0 0.0
    %1637 = vmatprep.subr.mxu0 0.0
    %1638 = vmatpush1.msra.mxu0 0.0
    %1639 = vmatprep.subr.mxu0 0.0
    %1640 = vmatpush1.msra.mxu0 0.0
    %1641 = vmatprep.subr.mxu0 0.0
    %1642 = vmatpush1.msra.mxu0 0.0
    %1643 = vmatprep.subr.mxu0 0.0
    %1644 = vmatpush1.msra.mxu0 0.0
    %1645 = vmatprep.subr.mxu0 0.0
    %1646 = vmatpush1.msra.mxu0 0.0
    %1647 = vmatprep.subr.mxu0 0.0
    %1648 = vmatpush1.msra.mxu0 0.0
    %1649 = vmatprep.subr.mxu0 0.0
    %1650 = vmatpush1.msra.mxu0 0.0
    %1651 = vmatprep.subr.mxu0 0.0
    %1652 = vmatpush1.msra.mxu0 0.0
    %1653 = vmatprep.subr.mxu0 0.0
    %1654 = vmatpush1.msra.mxu0 0.0
    %1655 = vmatprep.subr.mxu0 0.0
    %1656 = vmatpush1.msra.mxu0 0.0
    %1657 = vmatprep.subr.mxu0 0.0
    %1658 = vmatpush1.msra.mxu0 0.0
    %1659 = vmatprep.subr.mxu0 0.0
    %1660 = vmatpush1.msra.mxu0 0.0
    %1661 = vmatprep.subr.mxu0 0.0
    %1662 = vmatpush1.msra.mxu0 0.0
    %1663 = vmatprep.subr.mxu0 0.0
    %1664 = vmatpush1.msra.mxu0 0.0
    %1665 = vmatprep.subr.mxu0 0.0
    %1666 = vmatpush1.msra.mxu0 0.0
    %1667 = vmatprep.subr.mxu0 0.0
    %1668 = vmatpush1.msra.mxu0 0.0
    %1669 = vmatprep.subr.mxu0 0.0
    %1670 = vmatpush1.msra.mxu0 0.0
    %1671 = vmatprep.subr.mxu0 0.0
    %1672 = vmatpush1.msra.mxu0 0.0
    %1673 = vmatprep.subr.mxu0 0.0
    %1674 = vmatpush1.msra.mxu0 0.0
    %1675 = vmatprep.mubr.f32.mxu0 0.0
    %v1676 = vand.u32 %v1392, 4294901760
    %v1677 = vsub.f32 %v1392, %v1676
    %1678 = vmatmul.mubr.f32.gmra.mrb[0].mxu0 %v1677
    %v1679 = vpop.f32.mrb[0].mxu0
    %v1680 = vadd.f32 %v1588, %v1679
    %v1681 = vpop.f32.mrb[0].mxu0
    %v1682 = vadd.f32 %v1590, %v1681
    %1683 = vmatprep.mubr.f32.mxu0 0.0
    %v1684 = vand.u32 %v1395, 4294901760
    %v1685 = vsub.f32 %v1395, %v1684
    %1686 = vmatmul.mubr.f32.gmra.mrb[0].mxu0 %v1685
    %v1687 = vpop.f32.mrb[0].mxu0
    %v1688 = vadd.f32 %v1595, %v1687
    %v1689 = vpop.f32.mrb[0].mxu0
    %v1690 = vadd.f32 %v1597, %v1689
    %1691 = vdwg.mxu0
    %v1692 = vand.u32 %v1368, 4294901760
    %1693 = vmatprep.subr.mxu0 %v1692
    %v1694 = vand.u32 %v1367, 4294901760
    %1695 = vmatpush1.msra.mxu0 %v1694
    %v1696 = vand.u32 %v70, 4294901760
    %1697 = vmatprep.subr.mxu0 %v1696
    %v1698 = vand.u32 %v68, 4294901760
    %1699 = vmatpush1.msra.mxu0 %v1698
    %v1700 = vand.u32 %v1376, 4294901760
    %1701 = vmatprep.subr.mxu0 %v1700
    %v1702 = vand.u32 %v1375, 4294901760
    %1703 = vmatpush1.msra.mxu0 %v1702
    %1704 = vmatprep.subr.mxu0 0.0
    %1705 = vmatpush1.msra.mxu0 0.0
    %1706 = vmatprep.subr.mxu0 0.0
    %1707 = vmatpush1.msra.mxu0 0.0
    %1708 = vmatprep.subr.mxu0 0.0
    %1709 = vmatpush1.msra.mxu0 0.0
    %1710 = vmatprep.subr.mxu0 0.0
    %1711 = vmatpush1.msra.mxu0 0.0
    %1712 = vmatprep.subr.mxu0 0.0
    %1713 = vmatpush1.msra.mxu0 0.0
    %1714 = vmatprep.subr.mxu0 0.0
    %1715 = vmatpush1.msra.mxu0 0.0
    %1716 = vmatprep.subr.mxu0 0.0
    %1717 = vmatpush1.msra.mxu0 0.0
    %1718 = vmatprep.subr.mxu0 0.0
    %1719 = vmatpush1.msra.mxu0 0.0
    %1720 = vmatprep.subr.mxu0 0.0
    %1721 = vmatpush1.msra.mxu0 0.0
    %1722 = vmatprep.subr.mxu0 0.0
    %1723 = vmatpush1.msra.mxu0 0.0
    %1724 = vmatprep.subr.mxu0 0.0
    %1725 = vmatpush1.msra.mxu0 0.0
    %1726 = vmatprep.subr.mxu0 0.0
    %1727 = vmatpush1.msra.mxu0 0.0
    %1728 = vmatprep.subr.mxu0 0.0
    %1729 = vmatpush1.msra.mxu0 0.0
    %1730 = vmatprep.subr.mxu0 0.0
    %1731 = vmatpush1.msra.mxu0 0.0
    %1732 = vmatprep.subr.mxu0 0.0
    %1733 = vmatpush1.msra.mxu0 0.0
    %1734 = vmatprep.subr.mxu0 0.0
    %1735 = vmatpush1.msra.mxu0 0.0
    %1736 = vmatprep.subr.mxu0 0.0
    %1737 = vmatpush1.msra.mxu0 0.0
    %1738 = vmatprep.subr.mxu0 0.0
    %1739 = vmatpush1.msra.mxu0 0.0
    %1740 = vmatprep.subr.mxu0 0.0
    %1741 = vmatpush1.msra.mxu0 0.0
    %1742 = vmatprep.subr.mxu0 0.0
    %1743 = vmatpush1.msra.mxu0 0.0
    %1744 = vmatprep.subr.mxu0 0.0
    %1745 = vmatpush1.msra.mxu0 0.0
    %1746 = vmatprep.subr.mxu0 0.0
    %1747 = vmatpush1.msra.mxu0 0.0
    %1748 = vmatprep.subr.mxu0 0.0
    %1749 = vmatpush1.msra.mxu0 0.0
    %1750 = vmatprep.subr.mxu0 0.0
    %1751 = vmatpush1.msra.mxu0 0.0
    %1752 = vmatprep.subr.mxu0 0.0
    %1753 = vmatpush1.msra.mxu0 0.0
    %1754 = vmatprep.subr.mxu0 0.0
    %1755 = vmatpush1.msra.mxu0 0.0
    %1756 = vmatprep.subr.mxu0 0.0
    %1757 = vmatpush1.msra.mxu0 0.0
    %1758 = vmatprep.subr.mxu0 0.0
    %1759 = vmatpush1.msra.mxu0 0.0
    %1760 = vmatprep.subr.mxu0 0.0
    %1761 = vmatpush1.msra.mxu0 0.0
    %1762 = vmatprep.mubr.f32.mxu0 0.0
    %v1763 = vand.u32 %v1392, 4294901760
    %v1764 = vsub.f32 %v1392, %v1763
    %v1765 = vand.u32 %v1764, 4294901760
    %1766 = vmatmul.mubr.f32.gmra.mrb[0].mxu0 %v1765
    %v1767 = vpop.f32.mrb[0].mxu0
    %v1768 = vadd.f32 %v1680, %v1767
    %v1769 = vpop.f32.mrb[0].mxu0
    %v1770 = vadd.f32 %v1682, %v1769
    %1771 = vmatprep.mubr.f32.mxu0 0.0
    %v1772 = vand.u32 %v1395, 4294901760
    %v1773 = vsub.f32 %v1395, %v1772
    %v1774 = vand.u32 %v1773, 4294901760
    %1775 = vmatmul.mubr.f32.gmra.mrb[0].mxu0 %v1774
    %v1776 = vpop.f32.mrb[0].mxu0
    %v1777 = vadd.f32 %v1688, %v1776
    %v1778 = vpop.f32.mrb[0].mxu0
    %v1779 = vadd.f32 %v1690, %v1778
    %1780 = vdwg.mxu0
    %v1781 = vand.u32 %v1368, 4294901760
    %v1782 = vsub.f32 %v1368, %v1781
    %v1783 = vand.u32 %v1782, 4294901760
    %1784 = vmatprep.subr.mxu0 %v1783
    %v1785 = vand.u32 %v1367, 4294901760
    %v1786 = vsub.f32 %v1367, %v1785
    %v1787 = vand.u32 %v1786, 4294901760
    %1788 = vmatpush1.msra.mxu0 %v1787
    %v1789 = vand.u32 %v70, 4294901760
    %v1790 = vsub.f32 %v70, %v1789
    %v1791 = vand.u32 %v1790, 4294901760
    %1792 = vmatprep.subr.mxu0 %v1791
    %v1793 = vand.u32 %v68, 4294901760
    %v1794 = vsub.f32 %v68, %v1793
    %v1795 = vand.u32 %v1794, 4294901760
    %1796 = vmatpush1.msra.mxu0 %v1795
    %v1797 = vand.u32 %v1376, 4294901760
    %v1798 = vsub.f32 %v1376, %v1797
    %v1799 = vand.u32 %v1798, 4294901760
    %1800 = vmatprep.subr.mxu0 %v1799
    %v1801 = vand.u32 %v1375, 4294901760
    %v1802 = vsub.f32 %v1375, %v1801
    %v1803 = vand.u32 %v1802, 4294901760
    %1804 = vmatpush1.msra.mxu0 %v1803
    %1805 = vmatprep.subr.mxu0 0.0
    %1806 = vmatpush1.msra.mxu0 0.0
    %1807 = vmatprep.subr.mxu0 0.0
    %1808 = vmatpush1.msra.mxu0 0.0
    %1809 = vmatprep.subr.mxu0 0.0
    %1810 = vmatpush1.msra.mxu0 0.0
    %1811 = vmatprep.subr.mxu0 0.0
    %1812 = vmatpush1.msra.mxu0 0.0
    %1813 = vmatprep.subr.mxu0 0.0
    %1814 = vmatpush1.msra.mxu0 0.0
    %1815 = vmatprep.subr.mxu0 0.0
    %1816 = vmatpush1.msra.mxu0 0.0
    %1817 = vmatprep.subr.mxu0 0.0
    %1818 = vmatpush1.msra.mxu0 0.0
    %1819 = vmatprep.subr.mxu0 0.0
    %1820 = vmatpush1.msra.mxu0 0.0
    %1821 = vmatprep.subr.mxu0 0.0
    %1822 = vmatpush1.msra.mxu0 0.0
    %1823 = vmatprep.subr.mxu0 0.0
    %1824 = vmatpush1.msra.mxu0 0.0
    %1825 = vmatprep.subr.mxu0 0.0
    %1826 = vmatpush1.msra.mxu0 0.0
    %1827 = vmatprep.subr.mxu0 0.0
    %1828 = vmatpush1.msra.mxu0 0.0
    %1829 = vmatprep.subr.mxu0 0.0
    %1830 = vmatpush1.msra.mxu0 0.0
    %1831 = vmatprep.subr.mxu0 0.0
    %1832 = vmatpush1.msra.mxu0 0.0
    %1833 = vmatprep.subr.mxu0 0.0
    %1834 = vmatpush1.msra.mxu0 0.0
    %1835 = vmatprep.subr.mxu0 0.0
    %1836 = vmatpush1.msra.mxu0 0.0
    %1837 = vmatprep.subr.mxu0 0.0
    %1838 = vmatpush1.msra.mxu0 0.0
    %1839 = vmatprep.subr.mxu0 0.0
    %1840 = vmatpush1.msra.mxu0 0.0
    %1841 = vmatprep.subr.mxu0 0.0
    %1842 = vmatpush1.msra.mxu0 0.0
    %1843 = vmatprep.subr.mxu0 0.0
    %1844 = vmatpush1.msra.mxu0 0.0
    %1845 = vmatprep.subr.mxu0 0.0
    %1846 = vmatpush1.msra.mxu0 0.0
    %1847 = vmatprep.subr.mxu0 0.0
    %1848 = vmatpush1.msra.mxu0 0.0
    %1849 = vmatprep.subr.mxu0 0.0
    %1850 = vmatpush1.msra.mxu0 0.0
    %1851 = vmatprep.subr.mxu0 0.0
    %1852 = vmatpush1.msra.mxu0 0.0
    %1853 = vmatprep.subr.mxu0 0.0
    %1854 = vmatpush1.msra.mxu0 0.0
    %1855 = vmatprep.subr.mxu0 0.0
    %1856 = vmatpush1.msra.mxu0 0.0
    %1857 = vmatprep.subr.mxu0 0.0
    %1858 = vmatpush1.msra.mxu0 0.0
    %1859 = vmatprep.subr.mxu0 0.0
    %1860 = vmatpush1.msra.mxu0 0.0
    %1861 = vmatprep.subr.mxu0 0.0
    %1862 = vmatpush1.msra.mxu0 0.0
    %1863 = vmatprep.mubr.f32.mxu0 0.0
    %v1864 = vand.u32 %v1392, 4294901760
    %1865 = vmatmul.mubr.f32.gmra.mrb[0].mxu0 %v1864
    %v1866 = vpop.f32.mrb[0].mxu0
    %v1867 = vadd.f32 %v1768, %v1866
    %v1868 = vpop.f32.mrb[0].mxu0
    %v1869 = vadd.f32 %v1770, %v1868
    %1870 = vmatprep.mubr.f32.mxu0 0.0
    %v1871 = vand.u32 %v1395, 4294901760
    %1872 = vmatmul.mubr.f32.gmra.mrb[0].mxu0 %v1871
    %v1873 = vpop.f32.mrb[0].mxu0
    %v1874 = vadd.f32 %v1777, %v1873
    %v1875 = vpop.f32.mrb[0].mxu0
    %v1876 = vadd.f32 %v1779, %v1875
    %1877 = vdwg.mxu0
    %v1878 = vand.u32 %v1368, 4294901760
    %1879 = vmatprep.subr.mxu0 %v1878
    %v1880 = vand.u32 %v1367, 4294901760
    %1881 = vmatpush1.msra.mxu0 %v1880
    %v1882 = vand.u32 %v70, 4294901760
    %1883 = vmatprep.subr.mxu0 %v1882
    %v1884 = vand.u32 %v68, 4294901760
    %1885 = vmatpush1.msra.mxu0 %v1884
    %v1886 = vand.u32 %v1376, 4294901760
    %1887 = vmatprep.subr.mxu0 %v1886
    %v1888 = vand.u32 %v1375, 4294901760
    %1889 = vmatpush1.msra.mxu0 %v1888
    %1890 = vmatprep.subr.mxu0 0.0
    %1891 = vmatpush1.msra.mxu0 0.0
    %1892 = vmatprep.subr.mxu0 0.0
    %1893 = vmatpush1.msra.mxu0 0.0
    %1894 = vmatprep.subr.mxu0 0.0
    %1895 = vmatpush1.msra.mxu0 0.0
    %1896 = vmatprep.subr.mxu0 0.0
    %1897 = vmatpush1.msra.mxu0 0.0
    %1898 = vmatprep.subr.mxu0 0.0
    %1899 = vmatpush1.msra.mxu0 0.0
    %1900 = vmatprep.subr.mxu0 0.0
    %1901 = vmatpush1.msra.mxu0 0.0
    %1902 = vmatprep.subr.mxu0 0.0
    %1903 = vmatpush1.msra.mxu0 0.0
    %1904 = vmatprep.subr.mxu0 0.0
    %1905 = vmatpush1.msra.mxu0 0.0
    %1906 = vmatprep.subr.mxu0 0.0
    %1907 = vmatpush1.msra.mxu0 0.0
    %1908 = vmatprep.subr.mxu0 0.0
    %1909 = vmatpush1.msra.mxu0 0.0
    %1910 = vmatprep.subr.mxu0 0.0
    %1911 = vmatpush1.msra.mxu0 0.0
    %1912 = vmatprep.subr.mxu0 0.0
    %1913 = vmatpush1.msra.mxu0 0.0
    %1914 = vmatprep.subr.mxu0 0.0
    %1915 = vmatpush1.msra.mxu0 0.0
    %1916 = vmatprep.subr.mxu0 0.0
    %1917 = vmatpush1.msra.mxu0 0.0
    %1918 = vmatprep.subr.mxu0 0.0
    %1919 = vmatpush1.msra.mxu0 0.0
    %1920 = vmatprep.subr.mxu0 0.0
    %1921 = vmatpush1.msra.mxu0 0.0
    %1922 = vmatprep.subr.mxu0 0.0
    %1923 = vmatpush1.msra.mxu0 0.0
    %1924 = vmatprep.subr.mxu0 0.0
    %1925 = vmatpush1.msra.mxu0 0.0
    %1926 = vmatprep.subr.mxu0 0.0
    %1927 = vmatpush1.msra.mxu0 0.0
    %1928 = vmatprep.subr.mxu0 0.0
    %1929 = vmatpush1.msra.mxu0 0.0
    %1930 = vmatprep.subr.mxu0 0.0
    %1931 = vmatpush1.msra.mxu0 0.0
    %1932 = vmatprep.subr.mxu0 0.0
    %1933 = vmatpush1.msra.mxu0 0.0
    %1934 = vmatprep.subr.mxu0 0.0
    %1935 = vmatpush1.msra.mxu0 0.0
    %1936 = vmatprep.subr.mxu0 0.0
    %1937 = vmatpush1.msra.mxu0 0.0
    %1938 = vmatprep.subr.mxu0 0.0
    %1939 = vmatpush1.msra.mxu0 0.0
    %1940 = vmatprep.subr.mxu0 0.0
    %1941 = vmatpush1.msra.mxu0 0.0
    %1942 = vmatprep.subr.mxu0 0.0
    %1943 = vmatpush1.msra.mxu0 0.0
    %1944 = vmatprep.subr.mxu0 0.0
    %1945 = vmatpush1.msra.mxu0 0.0
    %1946 = vmatprep.subr.mxu0 0.0
    %1947 = vmatpush1.msra.mxu0 0.0
    %1948 = vmatprep.mubr.f32.mxu0 0.0
    %v1949 = vand.u32 %v1392, 4294901760
    %1950 = vmatmul.mubr.f32.gmra.mrb[0].mxu0 %v1949
    %v1951 = vpop.f32.mrb[0].mxu0
    %v1952 = vadd.f32 %v1867, %v1951
    %v1953 = vpop.f32.mrb[0].mxu0
    %v1954 = vadd.f32 %v1869, %v1953
    %1955 = vmatprep.mubr.f32.mxu0 0.0
    %v1956 = vand.u32 %v1395, 4294901760
    %1957 = vmatmul.mubr.f32.gmra.mrb[0].mxu0 %v1956
    %v1958 = vpop.f32.mrb[0].mxu0
    %v1959 = vadd.f32 %v1874, %v1958
    %v1960 = vpop.f32.mrb[0].mxu0
    %v1961 = vadd.f32 %v1876, %v1960
    %1962 = vdwg.mxu0
    %v1963 = vmax.f32 %v1952, 0.0
    %v1964 = vmax.f32 %v1954, 0.0
    %v1965 = vmax.f32 %v1959, 0.0
    %v1966 = vmax.f32 %v1961, 0.0
    %1967 = vrot.lane.b32.xlu0 %v1963, 1
    %v1968 = vpop.permute.xlu0 %1967
    %1969 = vrot.lane.b32.xlu0 %v1965, 1
    %v1970 = vpop.permute.xlu0 %1969
    %1971 = vrot.lane.b32.xlu0 %v1964, 1
    %v1972 = vpop.permute.xlu0 %1971
    %1973 = vrot.lane.b32.xlu0 %v1966, 1
    %v1974 = vpop.permute.xlu0 %1973
    %v1975 = vsel %vm102, %v1968, %v1972
    %v1976 = vsel %vm102, %v1970, %v1974
    %v1977 = vsel %vm102, %v1972, %v1968
    %v1978 = vsel %vm102, %v1974, %v1970
    %v1979 = vsel %vm111, %v1977, 0.0
    %v1980 = vsel %vm112, %v1975, 0.0
    %v1981 = vsel %vm111, %v1978, 0.0
    %v1982 = vsel %vm112, %v1976, 0.0
    %1983 = vrot.lane.b32.xlu0 %v1963, 127
    %v1984 = vpop.permute.xlu0 %1983
    %1985 = vrot.lane.b32.xlu0 %v1965, 127
    %v1986 = vpop.permute.xlu0 %1985
    %1987 = vrot.lane.b32.xlu0 %v1964, 127
    %v1988 = vpop.permute.xlu0 %1987
    %1989 = vrot.lane.b32.xlu0 %v1966, 127
    %v1990 = vpop.permute.xlu0 %1989
    %v1991 = vsel %vm119, %v1984, %v1988
    %v1992 = vsel %vm119, %v1986, %v1990
    %v1993 = vsel %vm119, %v1988, %v1984
    %v1994 = vsel %vm119, %v1990, %v1986
    %v1995 = vsel %vm128, %v1991, 0.0
    %v1996 = vsel %vm129, %v1993, 0.0
    %v1997 = vsel %vm128, %v1992, 0.0
    %v1998 = vsel %vm129, %v1994, 0.0
    %v1999 = vld [vmem:[%s8] sm:$0xff]
    %v2000 = vld [vmem:[%s9] sm:$0xff]
    %2002 = vset.pattern.permute.xlu0 0
    %2003 = vperm.xlu0 %2002, %v2000
    %v2004 = vpop.permute.xlu0 %2003
    %v2007 = vsel %vm762, %v1999, 0
    %v2009 = vand.u32 %v1980, 4294901760
    %2010 = vmatprep.subr.mxu0 %v2009
    %v2011 = vand.u32 %v1979, 4294901760
    %2012 = vmatpush1.msra.mxu0 %v2011
    %v2013 = vand.u32 %v1982, 4294901760
    %2014 = vmatprep.subr.mxu0 %v2013
    %v2015 = vand.u32 %v1981, 4294901760
    %2016 = vmatpush1.msra.mxu0 %v2015
    %v2017 = vand.u32 %v1964, 4294901760
    %2018 = vmatprep.subr.mxu0 %v2017
    %v2019 = vand.u32 %v1963, 4294901760
    %2020 = vmatpush1.msra.mxu0 %v2019
    %v2021 = vand.u32 %v1966, 4294901760
    %2022 = vmatprep.subr.mxu0 %v2021
    %v2023 = vand.u32 %v1965, 4294901760
    %2024 = vmatpush1.msra.mxu0 %v2023
    %v2025 = vand.u32 %v1996, 4294901760
    %2026 = vmatprep.subr.mxu0 %v2025
    %v2027 = vand.u32 %v1995, 4294901760
    %2028 = vmatpush1.msra.mxu0 %v2027
    %v2029 = vand.u32 %v1998, 4294901760
    %2030 = vmatprep.subr.mxu0 %v2029
    %v2031 = vand.u32 %v1997, 4294901760
    %2032 = vmatpush1.msra.mxu0 %v2031
    %2033 = vmatprep.subr.mxu0 0.0
    %2034 = vmatpush1.msra.mxu0 0.0
    %2035 = vmatprep.subr.mxu0 0.0
    %2036 = vmatpush1.msra.mxu0 0.0
    %2037 = vmatprep.subr.mxu0 0.0
    %2038 = vmatpush1.msra.mxu0 0.0
    %2039 = vmatprep.subr.mxu0 0.0
    %2040 = vmatpush1.msra.mxu0 0.0
    %2041 = vmatprep.subr.mxu0 0.0
    %2042 = vmatpush1.msra.mxu0 0.0
    %2043 = vmatprep.subr.mxu0 0.0
    %2044 = vmatpush1.msra.mxu0 0.0
    %2045 = vmatprep.subr.mxu0 0.0
    %2046 = vmatpush1.msra.mxu0 0.0
    %2047 = vmatprep.subr.mxu0 0.0
    %2048 = vmatpush1.msra.mxu0 0.0
    %2049 = vmatprep.subr.mxu0 0.0
    %2050 = vmatpush1.msra.mxu0 0.0
    %2051 = vmatprep.subr.mxu0 0.0
    %2052 = vmatpush1.msra.mxu0 0.0
    %2053 = vmatprep.subr.mxu0 0.0
    %2054 = vmatpush1.msra.mxu0 0.0
    %2055 = vmatprep.subr.mxu0 0.0
    %2056 = vmatpush1.msra.mxu0 0.0
    %2057 = vmatprep.subr.mxu0 0.0
    %2058 = vmatpush1.msra.mxu0 0.0
    %2059 = vmatprep.subr.mxu0 0.0
    %2060 = vmatpush1.msra.mxu0 0.0
    %2061 = vmatprep.subr.mxu0 0.0
    %2062 = vmatpush1.msra.mxu0 0.0
    %2063 = vmatprep.subr.mxu0 0.0
    %2064 = vmatpush1.msra.mxu0 0.0
    %2065 = vmatprep.subr.mxu0 0.0
    %2066 = vmatpush1.msra.mxu0 0.0
    %2067 = vmatprep.subr.mxu0 0.0
    %2068 = vmatpush1.msra.mxu0 0.0
    %2069 = vmatprep.subr.mxu0 0.0
    %2070 = vmatpush1.msra.mxu0 0.0
    %2071 = vmatprep.subr.mxu0 0.0
    %2072 = vmatpush1.msra.mxu0 0.0
    %2073 = vmatprep.subr.mxu0 0.0
    %2074 = vmatpush1.msra.mxu0 0.0
    %2075 = vmatprep.subr.mxu0 0.0
    %2076 = vmatpush1.msra.mxu0 0.0
    %2077 = vmatprep.subr.mxu0 0.0
    %2078 = vmatpush1.msra.mxu0 0.0
    %2079 = vmatprep.subr.mxu0 0.0
    %2080 = vmatpush1.msra.mxu0 0.0
    %2081 = vmatprep.subr.mxu0 0.0
    %2082 = vmatpush1.msra.mxu0 0.0
    %2083 = vmatprep.subr.mxu0 0.0
    %2084 = vmatpush1.msra.mxu0 0.0
    %2085 = vmatprep.mubr.f32.mxu0 0.0
    %v2086 = vand.u32 %v2007, 4294901760
    %v2087 = vsub.f32 %v2007, %v2086
    %v2088 = vand.u32 %v2087, 4294901760
    %v2089 = vsub.f32 %v2087, %v2088
    %v2090 = vand.u32 %v2089, 4294901760
    %2091 = vmatmul.mubr.f32.gmra.mrb[0].mxu0 %v2090
    %v2092 = vpop.f32.mrb[0].mxu0
    %v2093 = vadd.f32 %v2004, %v2092
    %v2094 = vpop.f32.mrb[0].mxu0
    %v2095 = vadd.f32 %v2004, %v2094
    %2096 = vdwg.mxu0
    %v2097 = vand.u32 %v1980, 4294901760
    %v2098 = vsub.f32 %v1980, %v2097
    %v2099 = vand.u32 %v2098, 4294901760
    %v2100 = vsub.f32 %v2098, %v2099
    %v2101 = vand.u32 %v2100, 4294901760
    %2102 = vmatprep.subr.mxu0 %v2101
    %v2103 = vand.u32 %v1979, 4294901760
    %v2104 = vsub.f32 %v1979, %v2103
    %v2105 = vand.u32 %v2104, 4294901760
    %v2106 = vsub.f32 %v2104, %v2105
    %v2107 = vand.u32 %v2106, 4294901760
    %2108 = vmatpush1.msra.mxu0 %v2107
    %v2109 = vand.u32 %v1982, 4294901760
    %v2110 = vsub.f32 %v1982, %v2109
    %v2111 = vand.u32 %v2110, 4294901760
    %v2112 = vsub.f32 %v2110, %v2111
    %v2113 = vand.u32 %v2112, 4294901760
    %2114 = vmatprep.subr.mxu0 %v2113
    %v2115 = vand.u32 %v1981, 4294901760
    %v2116 = vsub.f32 %v1981, %v2115
    %v2117 = vand.u32 %v2116, 4294901760
    %v2118 = vsub.f32 %v2116, %v2117
    %v2119 = vand.u32 %v2118, 4294901760
    %2120 = vmatpush1.msra.mxu0 %v2119
    %v2121 = vand.u32 %v1964, 4294901760
    %v2122 = vsub.f32 %v1964, %v2121
    %v2123 = vand.u32 %v2122, 4294901760
    %v2124 = vsub.f32 %v2122, %v2123
    %v2125 = vand.u32 %v2124, 4294901760
    %2126 = vmatprep.subr.mxu0 %v2125
    %v2127 = vand.u32 %v1963, 4294901760
    %v2128 = vsub.f32 %v1963, %v2127
    %v2129 = vand.u32 %v2128, 4294901760
    %v2130 = vsub.f32 %v2128, %v2129
    %v2131 = vand.u32 %v2130, 4294901760
    %2132 = vmatpush1.msra.mxu0 %v2131
    %v2133 = vand.u32 %v1966, 4294901760
    %v2134 = vsub.f32 %v1966, %v2133
    %v2135 = vand.u32 %v2134, 4294901760
    %v2136 = vsub.f32 %v2134, %v2135
    %v2137 = vand.u32 %v2136, 4294901760
    %2138 = vmatprep.subr.mxu0 %v2137
    %v2139 = vand.u32 %v1965, 4294901760
    %v2140 = vsub.f32 %v1965, %v2139
    %v2141 = vand.u32 %v2140, 4294901760
    %v2142 = vsub.f32 %v2140, %v2141
    %v2143 = vand.u32 %v2142, 4294901760
    %2144 = vmatpush1.msra.mxu0 %v2143
    %v2145 = vand.u32 %v1996, 4294901760
    %v2146 = vsub.f32 %v1996, %v2145
    %v2147 = vand.u32 %v2146, 4294901760
    %v2148 = vsub.f32 %v2146, %v2147
    %v2149 = vand.u32 %v2148, 4294901760
    %2150 = vmatprep.subr.mxu0 %v2149
    %v2151 = vand.u32 %v1995, 4294901760
    %v2152 = vsub.f32 %v1995, %v2151
    %v2153 = vand.u32 %v2152, 4294901760
    %v2154 = vsub.f32 %v2152, %v2153
    %v2155 = vand.u32 %v2154, 4294901760
    %2156 = vmatpush1.msra.mxu0 %v2155
    %v2157 = vand.u32 %v1998, 4294901760
    %v2158 = vsub.f32 %v1998, %v2157
    %v2159 = vand.u32 %v2158, 4294901760
    %v2160 = vsub.f32 %v2158, %v2159
    %v2161 = vand.u32 %v2160, 4294901760
    %2162 = vmatprep.subr.mxu0 %v2161
    %v2163 = vand.u32 %v1997, 4294901760
    %v2164 = vsub.f32 %v1997, %v2163
    %v2165 = vand.u32 %v2164, 4294901760
    %v2166 = vsub.f32 %v2164, %v2165
    %v2167 = vand.u32 %v2166, 4294901760
    %2168 = vmatpush1.msra.mxu0 %v2167
    %2169 = vmatprep.subr.mxu0 0.0
    %2170 = vmatpush1.msra.mxu0 0.0
    %2171 = vmatprep.subr.mxu0 0.0
    %2172 = vmatpush1.msra.mxu0 0.0
    %2173 = vmatprep.subr.mxu0 0.0
    %2174 = vmatpush1.msra.mxu0 0.0
    %2175 = vmatprep.subr.mxu0 0.0
    %2176 = vmatpush1.msra.mxu0 0.0
    %2177 = vmatprep.subr.mxu0 0.0
    %2178 = vmatpush1.msra.mxu0 0.0
    %2179 = vmatprep.subr.mxu0 0.0
    %2180 = vmatpush1.msra.mxu0 0.0
    %2181 = vmatprep.subr.mxu0 0.0
    %2182 = vmatpush1.msra.mxu0 0.0
    %2183 = vmatprep.subr.mxu0 0.0
    %2184 = vmatpush1.msra.mxu0 0.0
    %2185 = vmatprep.subr.mxu0 0.0
    %2186 = vmatpush1.msra.mxu0 0.0
    %2187 = vmatprep.subr.mxu0 0.0
    %2188 = vmatpush1.msra.mxu0 0.0
    %2189 = vmatprep.subr.mxu0 0.0
    %2190 = vmatpush1.msra.mxu0 0.0
    %2191 = vmatprep.subr.mxu0 0.0
    %2192 = vmatpush1.msra.mxu0 0.0
    %2193 = vmatprep.subr.mxu0 0.0
    %2194 = vmatpush1.msra.mxu0 0.0
    %2195 = vmatprep.subr.mxu0 0.0
    %2196 = vmatpush1.msra.mxu0 0.0
    %2197 = vmatprep.subr.mxu0 0.0
    %2198 = vmatpush1.msra.mxu0 0.0
    %2199 = vmatprep.subr.mxu0 0.0
    %2200 = vmatpush1.msra.mxu0 0.0
    %2201 = vmatprep.subr.mxu0 0.0
    %2202 = vmatpush1.msra.mxu0 0.0
    %2203 = vmatprep.subr.mxu0 0.0
    %2204 = vmatpush1.msra.mxu0 0.0
    %2205 = vmatprep.subr.mxu0 0.0
    %2206 = vmatpush1.msra.mxu0 0.0
    %2207 = vmatprep.subr.mxu0 0.0
    %2208 = vmatpush1.msra.mxu0 0.0
    %2209 = vmatprep.subr.mxu0 0.0
    %2210 = vmatpush1.msra.mxu0 0.0
    %2211 = vmatprep.subr.mxu0 0.0
    %2212 = vmatpush1.msra.mxu0 0.0
    %2213 = vmatprep.subr.mxu0 0.0
    %2214 = vmatpush1.msra.mxu0 0.0
    %2215 = vmatprep.subr.mxu0 0.0
    %2216 = vmatpush1.msra.mxu0 0.0
    %2217 = vmatprep.subr.mxu0 0.0
    %2218 = vmatpush1.msra.mxu0 0.0
    %2219 = vmatprep.subr.mxu0 0.0
    %2220 = vmatpush1.msra.mxu0 0.0
    %2221 = vmatprep.mubr.f32.mxu0 0.0
    %v2222 = vand.u32 %v2007, 4294901760
    %2223 = vmatmul.mubr.f32.gmra.mrb[0].mxu0 %v2222
    %v2224 = vpop.f32.mrb[0].mxu0
    %v2225 = vadd.f32 %v2093, %v2224
    %v2226 = vpop.f32.mrb[0].mxu0
    %v2227 = vadd.f32 %v2095, %v2226
    %2228 = vdwg.mxu0
    %v2229 = vand.u32 %v1980, 4294901760
    %v2230 = vsub.f32 %v1980, %v2229
    %2231 = vmatprep.subr.mxu0 %v2230
    %v2232 = vand.u32 %v1979, 4294901760
    %v2233 = vsub.f32 %v1979, %v2232
    %2234 = vmatpush1.msra.mxu0 %v2233
    %v2235 = vand.u32 %v1982, 4294901760
    %v2236 = vsub.f32 %v1982, %v2235
    %2237 = vmatprep.subr.mxu0 %v2236
    %v2238 = vand.u32 %v1981, 4294901760
    %v2239 = vsub.f32 %v1981, %v2238
    %2240 = vmatpush1.msra.mxu0 %v2239
    %v2241 = vand.u32 %v1964, 4294901760
    %v2242 = vsub.f32 %v1964, %v2241
    %2243 = vmatprep.subr.mxu0 %v2242
    %v2244 = vand.u32 %v1963, 4294901760
    %v2245 = vsub.f32 %v1963, %v2244
    %2246 = vmatpush1.msra.mxu0 %v2245
    %v2247 = vand.u32 %v1966, 4294901760
    %v2248 = vsub.f32 %v1966, %v2247
    %2249 = vmatprep.subr.mxu0 %v2248
    %v2250 = vand.u32 %v1965, 4294901760
    %v2251 = vsub.f32 %v1965, %v2250
    %2252 = vmatpush1.msra.mxu0 %v2251
    %v2253 = vand.u32 %v1996, 4294901760
    %v2254 = vsub.f32 %v1996, %v2253
    %2255 = vmatprep.subr.mxu0 %v2254
    %v2256 = vand.u32 %v1995, 4294901760
    %v2257 = vsub.f32 %v1995, %v2256
    %2258 = vmatpush1.msra.mxu0 %v2257
    %v2259 = vand.u32 %v1998, 4294901760
    %v2260 = vsub.f32 %v1998, %v2259
    %2261 = vmatprep.subr.mxu0 %v2260
    %v2262 = vand.u32 %v1997, 4294901760
    %v2263 = vsub.f32 %v1997, %v2262
    %2264 = vmatpush1.msra.mxu0 %v2263
    %2265 = vmatprep.subr.mxu0 0.0
    %2266 = vmatpush1.msra.mxu0 0.0
    %2267 = vmatprep.subr.mxu0 0.0
    %2268 = vmatpush1.msra.mxu0 0.0
    %2269 = vmatprep.subr.mxu0 0.0
    %2270 = vmatpush1.msra.mxu0 0.0
    %2271 = vmatprep.subr.mxu0 0.0
    %2272 = vmatpush1.msra.mxu0 0.0
    %2273 = vmatprep.subr.mxu0 0.0
    %2274 = vmatpush1.msra.mxu0 0.0
    %2275 = vmatprep.subr.mxu0 0.0
    %2276 = vmatpush1.msra.mxu0 0.0
    %2277 = vmatprep.subr.mxu0 0.0
    %2278 = vmatpush1.msra.mxu0 0.0
    %2279 = vmatprep.subr.mxu0 0.0
    %2280 = vmatpush1.msra.mxu0 0.0
    %2281 = vmatprep.subr.mxu0 0.0
    %2282 = vmatpush1.msra.mxu0 0.0
    %2283 = vmatprep.subr.mxu0 0.0
    %2284 = vmatpush1.msra.mxu0 0.0
    %2285 = vmatprep.subr.mxu0 0.0
    %2286 = vmatpush1.msra.mxu0 0.0
    %2287 = vmatprep.subr.mxu0 0.0
    %2288 = vmatpush1.msra.mxu0 0.0
    %2289 = vmatprep.subr.mxu0 0.0
    %2290 = vmatpush1.msra.mxu0 0.0
    %2291 = vmatprep.subr.mxu0 0.0
    %2292 = vmatpush1.msra.mxu0 0.0
    %2293 = vmatprep.subr.mxu0 0.0
    %2294 = vmatpush1.msra.mxu0 0.0
    %2295 = vmatprep.subr.mxu0 0.0
    %2296 = vmatpush1.msra.mxu0 0.0
    %2297 = vmatprep.subr.mxu0 0.0
    %2298 = vmatpush1.msra.mxu0 0.0
    %2299 = vmatprep.subr.mxu0 0.0
    %2300 = vmatpush1.msra.mxu0 0.0
    %2301 = vmatprep.subr.mxu0 0.0
    %2302 = vmatpush1.msra.mxu0 0.0
    %2303 = vmatprep.subr.mxu0 0.0
    %2304 = vmatpush1.msra.mxu0 0.0
    %2305 = vmatprep.subr.mxu0 0.0
    %2306 = vmatpush1.msra.mxu0 0.0
    %2307 = vmatprep.subr.mxu0 0.0
    %2308 = vmatpush1.msra.mxu0 0.0
    %2309 = vmatprep.subr.mxu0 0.0
    %2310 = vmatpush1.msra.mxu0 0.0
    %2311 = vmatprep.subr.mxu0 0.0
    %2312 = vmatpush1.msra.mxu0 0.0
    %2313 = vmatprep.subr.mxu0 0.0
    %2314 = vmatpush1.msra.mxu0 0.0
    %2315 = vmatprep.subr.mxu0 0.0
    %2316 = vmatpush1.msra.mxu0 0.0
    %2317 = vmatprep.mubr.f32.mxu0 0.0
    %v2318 = vand.u32 %v2007, 4294901760
    %v2319 = vsub.f32 %v2007, %v2318
    %2320 = vmatmul.mubr.f32.gmra.mrb[0].mxu0 %v2319
    %v2321 = vpop.f32.mrb[0].mxu0
    %v2322 = vadd.f32 %v2225, %v2321
    %v2323 = vpop.f32.mrb[0].mxu0
    %v2324 = vadd.f32 %v2227, %v2323
    %2325 = vdwg.mxu0
    %v2326 = vand.u32 %v1980, 4294901760
    %2327 = vmatprep.subr.mxu0 %v2326
    %v2328 = vand.u32 %v1979, 4294901760
    %2329 = vmatpush1.msra.mxu0 %v2328
    %v2330 = vand.u32 %v1982, 4294901760
    %2331 = vmatprep.subr.mxu0 %v2330
    %v2332 = vand.u32 %v1981, 4294901760
    %2333 = vmatpush1.msra.mxu0 %v2332
    %v2334 = vand.u32 %v1964, 4294901760
    %2335 = vmatprep.subr.mxu0 %v2334
    %v2336 = vand.u32 %v1963, 4294901760
    %2337 = vmatpush1.msra.mxu0 %v2336
    %v2338 = vand.u32 %v1966, 4294901760
    %2339 = vmatprep.subr.mxu0 %v2338
    %v2340 = vand.u32 %v1965, 4294901760
    %2341 = vmatpush1.msra.mxu0 %v2340
    %v2342 = vand.u32 %v1996, 4294901760
    %2343 = vmatprep.subr.mxu0 %v2342
    %v2344 = vand.u32 %v1995, 4294901760
    %2345 = vmatpush1.msra.mxu0 %v2344
    %v2346 = vand.u32 %v1998, 4294901760
    %2347 = vmatprep.subr.mxu0 %v2346
    %v2348 = vand.u32 %v1997, 4294901760
    %2349 = vmatpush1.msra.mxu0 %v2348
    %2350 = vmatprep.subr.mxu0 0.0
    %2351 = vmatpush1.msra.mxu0 0.0
    %2352 = vmatprep.subr.mxu0 0.0
    %2353 = vmatpush1.msra.mxu0 0.0
    %2354 = vmatprep.subr.mxu0 0.0
    %2355 = vmatpush1.msra.mxu0 0.0
    %2356 = vmatprep.subr.mxu0 0.0
    %2357 = vmatpush1.msra.mxu0 0.0
    %2358 = vmatprep.subr.mxu0 0.0
    %2359 = vmatpush1.msra.mxu0 0.0
    %2360 = vmatprep.subr.mxu0 0.0
    %2361 = vmatpush1.msra.mxu0 0.0
    %2362 = vmatprep.subr.mxu0 0.0
    %2363 = vmatpush1.msra.mxu0 0.0
    %2364 = vmatprep.subr.mxu0 0.0
    %2365 = vmatpush1.msra.mxu0 0.0
    %2366 = vmatprep.subr.mxu0 0.0
    %2367 = vmatpush1.msra.mxu0 0.0
    %2368 = vmatprep.subr.mxu0 0.0
    %2369 = vmatpush1.msra.mxu0 0.0
    %2370 = vmatprep.subr.mxu0 0.0
    %2371 = vmatpush1.msra.mxu0 0.0
    %2372 = vmatprep.subr.mxu0 0.0
    %2373 = vmatpush1.msra.mxu0 0.0
    %2374 = vmatprep.subr.mxu0 0.0
    %2375 = vmatpush1.msra.mxu0 0.0
    %2376 = vmatprep.subr.mxu0 0.0
    %2377 = vmatpush1.msra.mxu0 0.0
    %2378 = vmatprep.subr.mxu0 0.0
    %2379 = vmatpush1.msra.mxu0 0.0
    %2380 = vmatprep.subr.mxu0 0.0
    %2381 = vmatpush1.msra.mxu0 0.0
    %2382 = vmatprep.subr.mxu0 0.0
    %2383 = vmatpush1.msra.mxu0 0.0
    %2384 = vmatprep.subr.mxu0 0.0
    %2385 = vmatpush1.msra.mxu0 0.0
    %2386 = vmatprep.subr.mxu0 0.0
    %2387 = vmatpush1.msra.mxu0 0.0
    %2388 = vmatprep.subr.mxu0 0.0
    %2389 = vmatpush1.msra.mxu0 0.0
    %2390 = vmatprep.subr.mxu0 0.0
    %2391 = vmatpush1.msra.mxu0 0.0
    %2392 = vmatprep.subr.mxu0 0.0
    %2393 = vmatpush1.msra.mxu0 0.0
    %2394 = vmatprep.subr.mxu0 0.0
    %2395 = vmatpush1.msra.mxu0 0.0
    %2396 = vmatprep.subr.mxu0 0.0
    %2397 = vmatpush1.msra.mxu0 0.0
    %2398 = vmatprep.subr.mxu0 0.0
    %2399 = vmatpush1.msra.mxu0 0.0
    %2400 = vmatprep.subr.mxu0 0.0
    %2401 = vmatpush1.msra.mxu0 0.0
    %2402 = vmatprep.mubr.f32.mxu0 0.0
    %v2403 = vand.u32 %v2007, 4294901760
    %v2404 = vsub.f32 %v2007, %v2403
    %v2405 = vand.u32 %v2404, 4294901760
    %2406 = vmatmul.mubr.f32.gmra.mrb[0].mxu0 %v2405
    %v2407 = vpop.f32.mrb[0].mxu0
    %v2408 = vadd.f32 %v2322, %v2407
    %v2409 = vpop.f32.mrb[0].mxu0
    %v2410 = vadd.f32 %v2324, %v2409
    %2411 = vdwg.mxu0
    %v2412 = vand.u32 %v1980, 4294901760
    %v2413 = vsub.f32 %v1980, %v2412
    %v2414 = vand.u32 %v2413, 4294901760
    %2415 = vmatprep.subr.mxu0 %v2414
    %v2416 = vand.u32 %v1979, 4294901760
    %v2417 = vsub.f32 %v1979, %v2416
    %v2418 = vand.u32 %v2417, 4294901760
    %2419 = vmatpush1.msra.mxu0 %v2418
    %v2420 = vand.u32 %v1982, 4294901760
    %v2421 = vsub.f32 %v1982, %v2420
    %v2422 = vand.u32 %v2421, 4294901760
    %2423 = vmatprep.subr.mxu0 %v2422
    %v2424 = vand.u32 %v1981, 4294901760
    %v2425 = vsub.f32 %v1981, %v2424
    %v2426 = vand.u32 %v2425, 4294901760
    %2427 = vmatpush1.msra.mxu0 %v2426
    %v2428 = vand.u32 %v1964, 4294901760
    %v2429 = vsub.f32 %v1964, %v2428
    %v2430 = vand.u32 %v2429, 4294901760
    %2431 = vmatprep.subr.mxu0 %v2430
    %v2432 = vand.u32 %v1963, 4294901760
    %v2433 = vsub.f32 %v1963, %v2432
    %v2434 = vand.u32 %v2433, 4294901760
    %2435 = vmatpush1.msra.mxu0 %v2434
    %v2436 = vand.u32 %v1966, 4294901760
    %v2437 = vsub.f32 %v1966, %v2436
    %v2438 = vand.u32 %v2437, 4294901760
    %2439 = vmatprep.subr.mxu0 %v2438
    %v2440 = vand.u32 %v1965, 4294901760
    %v2441 = vsub.f32 %v1965, %v2440
    %v2442 = vand.u32 %v2441, 4294901760
    %2443 = vmatpush1.msra.mxu0 %v2442
    %v2444 = vand.u32 %v1996, 4294901760
    %v2445 = vsub.f32 %v1996, %v2444
    %v2446 = vand.u32 %v2445, 4294901760
    %2447 = vmatprep.subr.mxu0 %v2446
    %v2448 = vand.u32 %v1995, 4294901760
    %v2449 = vsub.f32 %v1995, %v2448
    %v2450 = vand.u32 %v2449, 4294901760
    %2451 = vmatpush1.msra.mxu0 %v2450
    %v2452 = vand.u32 %v1998, 4294901760
    %v2453 = vsub.f32 %v1998, %v2452
    %v2454 = vand.u32 %v2453, 4294901760
    %2455 = vmatprep.subr.mxu0 %v2454
    %v2456 = vand.u32 %v1997, 4294901760
    %v2457 = vsub.f32 %v1997, %v2456
    %v2458 = vand.u32 %v2457, 4294901760
    %2459 = vmatpush1.msra.mxu0 %v2458
    %2460 = vmatprep.subr.mxu0 0.0
    %2461 = vmatpush1.msra.mxu0 0.0
    %2462 = vmatprep.subr.mxu0 0.0
    %2463 = vmatpush1.msra.mxu0 0.0
    %2464 = vmatprep.subr.mxu0 0.0
    %2465 = vmatpush1.msra.mxu0 0.0
    %2466 = vmatprep.subr.mxu0 0.0
    %2467 = vmatpush1.msra.mxu0 0.0
    %2468 = vmatprep.subr.mxu0 0.0
    %2469 = vmatpush1.msra.mxu0 0.0
    %2470 = vmatprep.subr.mxu0 0.0
    %2471 = vmatpush1.msra.mxu0 0.0
    %2472 = vmatprep.subr.mxu0 0.0
    %2473 = vmatpush1.msra.mxu0 0.0
    %2474 = vmatprep.subr.mxu0 0.0
    %2475 = vmatpush1.msra.mxu0 0.0
    %2476 = vmatprep.subr.mxu0 0.0
    %2477 = vmatpush1.msra.mxu0 0.0
    %2478 = vmatprep.subr.mxu0 0.0
    %2479 = vmatpush1.msra.mxu0 0.0
    %2480 = vmatprep.subr.mxu0 0.0
    %2481 = vmatpush1.msra.mxu0 0.0
    %2482 = vmatprep.subr.mxu0 0.0
    %2483 = vmatpush1.msra.mxu0 0.0
    %2484 = vmatprep.subr.mxu0 0.0
    %2485 = vmatpush1.msra.mxu0 0.0
    %2486 = vmatprep.subr.mxu0 0.0
    %2487 = vmatpush1.msra.mxu0 0.0
    %2488 = vmatprep.subr.mxu0 0.0
    %2489 = vmatpush1.msra.mxu0 0.0
    %2490 = vmatprep.subr.mxu0 0.0
    %2491 = vmatpush1.msra.mxu0 0.0
    %2492 = vmatprep.subr.mxu0 0.0
    %2493 = vmatpush1.msra.mxu0 0.0
    %2494 = vmatprep.subr.mxu0 0.0
    %2495 = vmatpush1.msra.mxu0 0.0
    %2496 = vmatprep.subr.mxu0 0.0
    %2497 = vmatpush1.msra.mxu0 0.0
    %2498 = vmatprep.subr.mxu0 0.0
    %2499 = vmatpush1.msra.mxu0 0.0
    %2500 = vmatprep.subr.mxu0 0.0
    %2501 = vmatpush1.msra.mxu0 0.0
    %2502 = vmatprep.subr.mxu0 0.0
    %2503 = vmatpush1.msra.mxu0 0.0
    %2504 = vmatprep.subr.mxu0 0.0
    %2505 = vmatpush1.msra.mxu0 0.0
    %2506 = vmatprep.subr.mxu0 0.0
    %2507 = vmatpush1.msra.mxu0 0.0
    %2508 = vmatprep.subr.mxu0 0.0
    %2509 = vmatpush1.msra.mxu0 0.0
    %2510 = vmatprep.subr.mxu0 0.0
    %2511 = vmatpush1.msra.mxu0 0.0
    %2512 = vmatprep.mubr.f32.mxu0 0.0
    %v2513 = vand.u32 %v2007, 4294901760
    %2514 = vmatmul.mubr.f32.gmra.mrb[0].mxu0 %v2513
    %v2515 = vpop.f32.mrb[0].mxu0
    %v2516 = vadd.f32 %v2408, %v2515
    %v2517 = vpop.f32.mrb[0].mxu0
    %v2518 = vadd.f32 %v2410, %v2517
    %2519 = vdwg.mxu0
    %v2520 = vand.u32 %v1980, 4294901760
    %2521 = vmatprep.subr.mxu0 %v2520
    %v2522 = vand.u32 %v1979, 4294901760
    %2523 = vmatpush1.msra.mxu0 %v2522
    %v2524 = vand.u32 %v1982, 4294901760
    %2525 = vmatprep.subr.mxu0 %v2524
    %v2526 = vand.u32 %v1981, 4294901760
    %2527 = vmatpush1.msra.mxu0 %v2526
    %v2528 = vand.u32 %v1964, 4294901760
    %2529 = vmatprep.subr.mxu0 %v2528
    %v2530 = vand.u32 %v1963, 4294901760
    %2531 = vmatpush1.msra.mxu0 %v2530
    %v2532 = vand.u32 %v1966, 4294901760
    %2533 = vmatprep.subr.mxu0 %v2532
    %v2534 = vand.u32 %v1965, 4294901760
    %2535 = vmatpush1.msra.mxu0 %v2534
    %v2536 = vand.u32 %v1996, 4294901760
    %2537 = vmatprep.subr.mxu0 %v2536
    %v2538 = vand.u32 %v1995, 4294901760
    %2539 = vmatpush1.msra.mxu0 %v2538
    %v2540 = vand.u32 %v1998, 4294901760
    %2541 = vmatprep.subr.mxu0 %v2540
    %v2542 = vand.u32 %v1997, 4294901760
    %2543 = vmatpush1.msra.mxu0 %v2542
    %2544 = vmatprep.subr.mxu0 0.0
    %2545 = vmatpush1.msra.mxu0 0.0
    %2546 = vmatprep.subr.mxu0 0.0
    %2547 = vmatpush1.msra.mxu0 0.0
    %2548 = vmatprep.subr.mxu0 0.0
    %2549 = vmatpush1.msra.mxu0 0.0
    %2550 = vmatprep.subr.mxu0 0.0
    %2551 = vmatpush1.msra.mxu0 0.0
    %2552 = vmatprep.subr.mxu0 0.0
    %2553 = vmatpush1.msra.mxu0 0.0
    %2554 = vmatprep.subr.mxu0 0.0
    %2555 = vmatpush1.msra.mxu0 0.0
    %2556 = vmatprep.subr.mxu0 0.0
    %2557 = vmatpush1.msra.mxu0 0.0
    %2558 = vmatprep.subr.mxu0 0.0
    %2559 = vmatpush1.msra.mxu0 0.0
    %2560 = vmatprep.subr.mxu0 0.0
    %2561 = vmatpush1.msra.mxu0 0.0
    %2562 = vmatprep.subr.mxu0 0.0
    %2563 = vmatpush1.msra.mxu0 0.0
    %2564 = vmatprep.subr.mxu0 0.0
    %2565 = vmatpush1.msra.mxu0 0.0
    %2566 = vmatprep.subr.mxu0 0.0
    %2567 = vmatpush1.msra.mxu0 0.0
    %2568 = vmatprep.subr.mxu0 0.0
    %2569 = vmatpush1.msra.mxu0 0.0
    %2570 = vmatprep.subr.mxu0 0.0
    %2571 = vmatpush1.msra.mxu0 0.0
    %2572 = vmatprep.subr.mxu0 0.0
    %2573 = vmatpush1.msra.mxu0 0.0
    %2574 = vmatprep.subr.mxu0 0.0
    %2575 = vmatpush1.msra.mxu0 0.0
    %2576 = vmatprep.subr.mxu0 0.0
    %2577 = vmatpush1.msra.mxu0 0.0
    %2578 = vmatprep.subr.mxu0 0.0
    %2579 = vmatpush1.msra.mxu0 0.0
    %2580 = vmatprep.subr.mxu0 0.0
    %2581 = vmatpush1.msra.mxu0 0.0
    %2582 = vmatprep.subr.mxu0 0.0
    %2583 = vmatpush1.msra.mxu0 0.0
    %2584 = vmatprep.subr.mxu0 0.0
    %2585 = vmatpush1.msra.mxu0 0.0
    %2586 = vmatprep.subr.mxu0 0.0
    %2587 = vmatpush1.msra.mxu0 0.0
    %2588 = vmatprep.subr.mxu0 0.0
    %2589 = vmatpush1.msra.mxu0 0.0
    %2590 = vmatprep.subr.mxu0 0.0
    %2591 = vmatpush1.msra.mxu0 0.0
    %2592 = vmatprep.subr.mxu0 0.0
    %2593 = vmatpush1.msra.mxu0 0.0
    %2594 = vmatprep.subr.mxu0 0.0
    %2595 = vmatpush1.msra.mxu0 0.0
    %2596 = vmatprep.mubr.f32.mxu0 0.0
    %v2597 = vand.u32 %v2007, 4294901760
    %2598 = vmatmul.mubr.f32.gmra.mrb[0].mxu0 %v2597
    %v2599 = vpop.f32.mrb[0].mxu0
    %v2600 = vadd.f32 %v2516, %v2599
    %v2601 = vpop.f32.mrb[0].mxu0
    %v2602 = vadd.f32 %v2518, %v2601
    %2603 = vdwg.mxu0
    %v2604 = vand.u32 2147483647, %v1357
    %vm2605 = vcmp.le.f32.partialorder %v2604, 0.7853982
    %vm2606 = vcmp.lt.s32.totalorder %v1357, 0
    %v2607 = vand.u32 %v1357, 2139095040
    %v2608 = vshrl.u32 %v2607, 23
    %v2609 = vsub.s32 %v2608, 127
    %v2610 = vand.u32 2147483647, %v1357
    %v2611 = vand.u32 %v2610, 8388607
    %v2612 = vor.u32 %v2611, 8388608
    %v2613 = vsub.s32 0, %v2612
    %v2614 = vadd.s32 %v2609, 1
    %vm2615 = vcmp.gt.s32.totalorder %v2614, 0
    %v2616 = vsel %vm2615, %v2614, 0
    %v2617 = vshrl.u32 %v2616, 5
    %v2618 = vand.u32 %v2616, 31
    %v2619 = vsub.s32 32, %v2618
    %v2620 = vshrl.u32 683565275, %v2619
    %v2621 = vshll.u32 683565275, %v2618
    %v2622 = vshrl.u32 2475754826, %v2619
    %v2623 = vor.u32 %v2621, %v2622
    %v2624 = vshll.u32 2475754826, %v2618
    %v2625 = vshrl.u32 2131351028, %v2619
    %v2626 = vor.u32 %v2624, %v2625
    %v2627 = vshll.u32 2131351028, %v2618
    %v2628 = vshrl.u32 2102212464, %v2619
    %v2629 = vor.u32 %v2627, %v2628
    %v2630 = vshll.u32 2102212464, %v2618
    %v2631 = vshrl.u32 920167782, %v2619
    %v2632 = vor.u32 %v2630, %v2631
    %v2633 = vshll.u32 920167782, %v2618
    %v2634 = vshrl.u32 1326507024, %v2619
    %v2635 = vor.u32 %v2633, %v2634
    %vm2636 = vcmp.lt.s32.totalorder %v2617, 1
    %vm2637 = vcmp.lt.s32.totalorder %v2617, 2
    %vm2638 = vcmp.lt.s32.totalorder %v2617, 3
    %vm2639 = vcmp.lt.s32.totalorder %v2617, 4
    %v2640 = vsel %vm2636, %v2620, %v2623
    %v2641 = vsel %vm2639, %v2629, 2102212464
    %v2642 = vsel %vm2638, %v2626, %v2641
    %v2643 = vsel %vm2637, %v2640, %v2642
    %v2644 = vsel %vm2636, %v2623, %v2626
    %v2645 = vsel %vm2639, %v2632, 920167782
    %v2646 = vsel %vm2638, %v2629, %v2645
    %v2647 = vsel %vm2637, %v2644, %v2646
    %v2648 = vsel %vm2636, %v2626, %v2629
    %v2649 = vsel %vm2639, %v2635, 1326507024
    %v2650 = vsel %vm2638, %v2632, %v2649
    %v2651 = vsel %vm2637, %v2648, %v2650
    %v2652 = vshll.u32 %v2612, 8
    %v2653 = vmul.u32.u64.compose %v2652, %v2651
    %v2654 = vextract.low.u32 %v2653
    %v2655 = vextract.high.u32 %v2653
    %v2656 = vmul.u32.u64.compose %v2652, %v2647
    %v2657 = vextract.low.u32 %v2656
    %v2658 = vextract.high.u32 %v2656
    %v2659 = vmul.u32 %v2652, %v2643
    %v2660 = vadd.s32 %v2655, %v2657
    %vm2661 = vc.u32 %v2655, %v2657
    %v2662 = vadd.s32 %v2658, 1
    %v2663 = vsel %vm2661, %v2662, %v2658
    %v2664 = vadd.s32 %v2659, %v2663
    %v2665 = vadd.s32 %v2664, 536870912
    %v2666 = vshrl.u32 %v2665, 30
    %v2667 = vshll.u32 %v2666, 30
    %v2668 = vsub.s32 %v2664, %v2667
    %vm2669 = vcmp.lt.s32.totalorder %v2668, 0
    %v2670 = vsub.s32 0, %v2668
    %v2671 = vsel %vm2669, %v2670, %v2668
    %v2672 = vclz %v2671
    %v2673 = vsub.s32 %v2672, 2
    %vm2674 = vcmp.gt.s32.totalorder 0, %v2673
    %v2675 = vsel %vm2674, 0, %v2673
    %v2676 = vsub.s32 32, %v2675
    %v2677 = vshll.u32 %v2668, %v2675
    %v2678 = vshrl.u32 %v2660, %v2676
    %v2679 = vor.u32 %v2677, %v2678
    %v2680 = vsub.s32 4294967266, %v2675
    %v2681 = vadd.s32 %v2680, 127
    %v2682 = vshll.u32 %v2681, 23
    %v2683 = vor.u32 4788187, %v2682
    %v2684 = vand.u32 2147483647, %v2683
    %v2686 = vcvt.s32.f32 %v2679
    %v2687 = vmul.f32 %v2686, %v2684
    %v2688 = vxor.u32 %v2687, 2147483648
    %v2689 = vsel %vm2606, %v2688, %v2687
    %v2690 = vsub.s32 4, %v2666
    %v2691 = vsel %vm2606, %v2690, %v2666
    %v2692 = vsel %vm2605, %v1357, %v2689
    %v2693 = vsel %vm2605, 0, %v2691
    %v2694 = vcosq.f32.pop %v2692
    %v2695 = vsinq.f32.pop %v2692
    %vm2696 = vweird.f32 %v1357
    %v2697 = vand.u32 %v2693, 3
    %vm2698 = vcmp.lt.s32.totalorder %v2697, 2
    %vm2699 = vcmp.eq.s32.totalorder %v2697, 0
    %v2700 = vxor.u32 %v2695, 2147483648
    %v2701 = vsel %vm2699, %v2694, %v2700
    %vm2702 = vcmp.eq.s32.totalorder %v2697, 2
    %v2703 = vxor.u32 %v2694, 2147483648
    %v2704 = vsel %vm2702, %v2703, %v2695
    %v2705 = vsel %vm2698, %v2701, %v2704
    %v2706 = vsel %vm2696, nan, %v2705
    %v2707 = vand.u32 2147483647, %v1359
    %vm2708 = vcmp.le.f32.partialorder %v2707, 0.7853982
    %vm2709 = vcmp.lt.s32.totalorder %v1359, 0
    %v2710 = vand.u32 %v1359, 2139095040
    %v2711 = vshrl.u32 %v2710, 23
    %v2712 = vsub.s32 %v2711, 127
    %v2713 = vand.u32 2147483647, %v1359
    %v2714 = vand.u32 %v2713, 8388607
    %v2715 = vor.u32 %v2714, 8388608
    %v2716 = vsub.s32 0, %v2715
    %v2717 = vadd.s32 %v2712, 1
    %vm2718 = vcmp.gt.s32.totalorder %v2717, 0
    %v2719 = vsel %vm2718, %v2717, 0
    %v2720 = vshrl.u32 %v2719, 5
    %v2721 = vand.u32 %v2719, 31
    %v2722 = vsub.s32 32, %v2721
    %v2723 = vshrl.u32 683565275, %v2722
    %v2724 = vshll.u32 683565275, %v2721
    %v2725 = vshrl.u32 2475754826, %v2722
    %v2726 = vor.u32 %v2724, %v2725
    %v2727 = vshll.u32 2475754826, %v2721
    %v2728 = vshrl.u32 2131351028, %v2722
    %v2729 = vor.u32 %v2727, %v2728
    %v2730 = vshll.u32 2131351028, %v2721
    %v2731 = vshrl.u32 2102212464, %v2722
    %v2732 = vor.u32 %v2730, %v2731
    %v2733 = vshll.u32 2102212464, %v2721
    %v2734 = vshrl.u32 920167782, %v2722
    %v2735 = vor.u32 %v2733, %v2734
    %v2736 = vshll.u32 920167782, %v2721
    %v2737 = vshrl.u32 1326507024, %v2722
    %v2738 = vor.u32 %v2736, %v2737
    %vm2739 = vcmp.lt.s32.totalorder %v2720, 1
    %vm2740 = vcmp.lt.s32.totalorder %v2720, 2
    %vm2741 = vcmp.lt.s32.totalorder %v2720, 3
    %vm2742 = vcmp.lt.s32.totalorder %v2720, 4
    %v2743 = vsel %vm2739, %v2723, %v2726
    %v2744 = vsel %vm2742, %v2732, 2102212464
    %v2745 = vsel %vm2741, %v2729, %v2744
    %v2746 = vsel %vm2740, %v2743, %v2745
    %v2747 = vsel %vm2739, %v2726, %v2729
    %v2748 = vsel %vm2742, %v2735, 920167782
    %v2749 = vsel %vm2741, %v2732, %v2748
    %v2750 = vsel %vm2740, %v2747, %v2749
    %v2751 = vsel %vm2739, %v2729, %v2732
    %v2752 = vsel %vm2742, %v2738, 1326507024
    %v2753 = vsel %vm2741, %v2735, %v2752
    %v2754 = vsel %vm2740, %v2751, %v2753
    %v2755 = vshll.u32 %v2715, 8
    %v2756 = vmul.u32.u64.compose %v2755, %v2754
    %v2757 = vextract.low.u32 %v2756
    %v2758 = vextract.high.u32 %v2756
    %v2759 = vmul.u32.u64.compose %v2755, %v2750
    %v2760 = vextract.low.u32 %v2759
    %v2761 = vextract.high.u32 %v2759
    %v2762 = vmul.u32 %v2755, %v2746
    %v2763 = vadd.s32 %v2758, %v2760
    %vm2764 = vc.u32 %v2758, %v2760
    %v2765 = vadd.s32 %v2761, 1
    %v2766 = vsel %vm2764, %v2765, %v2761
    %v2767 = vadd.s32 %v2762, %v2766
    %v2768 = vadd.s32 %v2767, 536870912
    %v2769 = vshrl.u32 %v2768, 30
    %v2770 = vshll.u32 %v2769, 30
    %v2771 = vsub.s32 %v2767, %v2770
    %vm2772 = vcmp.lt.s32.totalorder %v2771, 0
    %v2773 = vsub.s32 0, %v2771
    %v2774 = vsel %vm2772, %v2773, %v2771
    %v2775 = vclz %v2774
    %v2776 = vsub.s32 %v2775, 2
    %vm2777 = vcmp.gt.s32.totalorder 0, %v2776
    %v2778 = vsel %vm2777, 0, %v2776
    %v2779 = vsub.s32 32, %v2778
    %v2780 = vshll.u32 %v2771, %v2778
    %v2781 = vshrl.u32 %v2763, %v2779
    %v2782 = vor.u32 %v2780, %v2781
    %v2783 = vsub.s32 4294967266, %v2778
    %v2784 = vadd.s32 %v2783, 127
    %v2785 = vshll.u32 %v2784, 23
    %v2786 = vor.u32 4788187, %v2785
    %v2787 = vand.u32 2147483647, %v2786
    %v2789 = vcvt.s32.f32 %v2782
    %v2790 = vmul.f32 %v2789, %v2787
    %v2791 = vxor.u32 %v2790, 2147483648
    %v2792 = vsel %vm2709, %v2791, %v2790
    %v2793 = vsub.s32 4, %v2769
    %v2794 = vsel %vm2709, %v2793, %v2769
    %v2795 = vsel %vm2708, %v1359, %v2792
    %v2796 = vsel %vm2708, 0, %v2794
    %v2797 = vcosq.f32.pop %v2795
    %v2798 = vsinq.f32.pop %v2795
    %vm2799 = vweird.f32 %v1359
    %v2800 = vand.u32 %v2796, 3
    %vm2801 = vcmp.lt.s32.totalorder %v2800, 2
    %vm2802 = vcmp.eq.s32.totalorder %v2800, 0
    %v2803 = vxor.u32 %v2798, 2147483648
    %v2804 = vsel %vm2802, %v2797, %v2803
    %vm2805 = vcmp.eq.s32.totalorder %v2800, 2
    %v2806 = vxor.u32 %v2797, 2147483648
    %v2807 = vsel %vm2805, %v2806, %v2798
    %v2808 = vsel %vm2801, %v2804, %v2807
    %v2809 = vsel %vm2799, nan, %v2808
    %v2810 = vmul.f32 %v2600, %v2706
    %v2811 = vmul.f32 %v2602, %v2809
    %v2812 = vand.u32 2147483647, %v1357
    %vm2813 = vcmp.le.f32.partialorder %v2812, 0.7853982
    %vm2814 = vcmp.lt.s32.totalorder %v1357, 0
    %v2815 = vand.u32 %v1357, 2139095040
    %v2816 = vshrl.u32 %v2815, 23
    %v2817 = vsub.s32 %v2816, 127
    %v2818 = vand.u32 2147483647, %v1357
    %v2819 = vand.u32 %v2818, 8388607
    %v2820 = vor.u32 %v2819, 8388608
    %v2821 = vsub.s32 0, %v2820
    %v2822 = vadd.s32 %v2817, 1
    %vm2823 = vcmp.gt.s32.totalorder %v2822, 0
    %v2824 = vsel %vm2823, %v2822, 0
    %v2825 = vshrl.u32 %v2824, 5
    %v2826 = vand.u32 %v2824, 31
    %v2827 = vsub.s32 32, %v2826
    %v2828 = vshrl.u32 683565275, %v2827
    %v2829 = vshll.u32 683565275, %v2826
    %v2830 = vshrl.u32 2475754826, %v2827
    %v2831 = vor.u32 %v2829, %v2830
    %v2832 = vshll.u32 2475754826, %v2826
    %v2833 = vshrl.u32 2131351028, %v2827
    %v2834 = vor.u32 %v2832, %v2833
    %v2835 = vshll.u32 2131351028, %v2826
    %v2836 = vshrl.u32 2102212464, %v2827
    %v2837 = vor.u32 %v2835, %v2836
    %v2838 = vshll.u32 2102212464, %v2826
    %v2839 = vshrl.u32 920167782, %v2827
    %v2840 = vor.u32 %v2838, %v2839
    %v2841 = vshll.u32 920167782, %v2826
    %v2842 = vshrl.u32 1326507024, %v2827
    %v2843 = vor.u32 %v2841, %v2842
    %vm2844 = vcmp.lt.s32.totalorder %v2825, 1
    %vm2845 = vcmp.lt.s32.totalorder %v2825, 2
    %vm2846 = vcmp.lt.s32.totalorder %v2825, 3
    %vm2847 = vcmp.lt.s32.totalorder %v2825, 4
    %v2848 = vsel %vm2844, %v2828, %v2831
    %v2849 = vsel %vm2847, %v2837, 2102212464
    %v2850 = vsel %vm2846, %v2834, %v2849
    %v2851 = vsel %vm2845, %v2848, %v2850
    %v2852 = vsel %vm2844, %v2831, %v2834
    %v2853 = vsel %vm2847, %v2840, 920167782
    %v2854 = vsel %vm2846, %v2837, %v2853
    %v2855 = vsel %vm2845, %v2852, %v2854
    %v2856 = vsel %vm2844, %v2834, %v2837
    %v2857 = vsel %vm2847, %v2843, 1326507024
    %v2858 = vsel %vm2846, %v2840, %v2857
    %v2859 = vsel %vm2845, %v2856, %v2858
    %v2860 = vshll.u32 %v2820, 8
    %v2861 = vmul.u32.u64.compose %v2860, %v2859
    %v2862 = vextract.low.u32 %v2861
    %v2863 = vextract.high.u32 %v2861
    %v2864 = vmul.u32.u64.compose %v2860, %v2855
    %v2865 = vextract.low.u32 %v2864
    %v2866 = vextract.high.u32 %v2864
    %v2867 = vmul.u32 %v2860, %v2851
    %v2868 = vadd.s32 %v2863, %v2865
    %vm2869 = vc.u32 %v2863, %v2865
    %v2870 = vadd.s32 %v2866, 1
    %v2871 = vsel %vm2869, %v2870, %v2866
    %v2872 = vadd.s32 %v2867, %v2871
    %v2873 = vadd.s32 %v2872, 536870912
    %v2874 = vshrl.u32 %v2873, 30
    %v2875 = vshll.u32 %v2874, 30
    %v2876 = vsub.s32 %v2872, %v2875
    %vm2877 = vcmp.lt.s32.totalorder %v2876, 0
    %v2878 = vsub.s32 0, %v2876
    %v2879 = vsel %vm2877, %v2878, %v2876
    %v2880 = vclz %v2879
    %v2881 = vsub.s32 %v2880, 2
    %vm2882 = vcmp.gt.s32.totalorder 0, %v2881
    %v2883 = vsel %vm2882, 0, %v2881
    %v2884 = vsub.s32 32, %v2883
    %v2885 = vshll.u32 %v2876, %v2883
    %v2886 = vshrl.u32 %v2868, %v2884
    %v2887 = vor.u32 %v2885, %v2886
    %v2888 = vsub.s32 4294967266, %v2883
    %v2889 = vadd.s32 %v2888, 127
    %v2890 = vshll.u32 %v2889, 23
    %v2891 = vor.u32 4788187, %v2890
    %v2892 = vand.u32 2147483647, %v2891
    %v2894 = vcvt.s32.f32 %v2887
    %v2895 = vmul.f32 %v2894, %v2892
    %v2896 = vxor.u32 %v2895, 2147483648
    %v2897 = vsel %vm2814, %v2896, %v2895
    %v2898 = vsub.s32 4, %v2874
    %v2899 = vsel %vm2814, %v2898, %v2874
    %v2900 = vsel %vm2813, %v1357, %v2897
    %v2901 = vsel %vm2813, 0, %v2899
    %v2902 = vcosq.f32.pop %v2900
    %v2903 = vsinq.f32.pop %v2900
    %vm2904 = vweird.f32 %v1357
    %v2905 = vadd.s32 %v2901, 3
    %v2906 = vand.u32 %v2905, 3
    %vm2907 = vcmp.lt.s32.totalorder %v2906, 2
    %vm2908 = vcmp.eq.s32.totalorder %v2906, 0
    %v2909 = vxor.u32 %v2903, 2147483648
    %v2910 = vsel %vm2908, %v2902, %v2909
    %vm2911 = vcmp.eq.s32.totalorder %v2906, 2
    %v2912 = vxor.u32 %v2902, 2147483648
    %v2913 = vsel %vm2911, %v2912, %v2903
    %v2914 = vsel %vm2907, %v2910, %v2913
    %v2915 = vsel %vm2904, nan, %v2914
    %v2916 = vand.u32 2147483647, %v1359
    %vm2917 = vcmp.le.f32.partialorder %v2916, 0.7853982
    %vm2918 = vcmp.lt.s32.totalorder %v1359, 0
    %v2919 = vand.u32 %v1359, 2139095040
    %v2920 = vshrl.u32 %v2919, 23
    %v2921 = vsub.s32 %v2920, 127
    %v2922 = vand.u32 2147483647, %v1359
    %v2923 = vand.u32 %v2922, 8388607
    %v2924 = vor.u32 %v2923, 8388608
    %v2925 = vsub.s32 0, %v2924
    %v2926 = vadd.s32 %v2921, 1
    %vm2927 = vcmp.gt.s32.totalorder %v2926, 0
    %v2928 = vsel %vm2927, %v2926, 0
    %v2929 = vshrl.u32 %v2928, 5
    %v2930 = vand.u32 %v2928, 31
    %v2931 = vsub.s32 32, %v2930
    %v2932 = vshrl.u32 683565275, %v2931
    %v2933 = vshll.u32 683565275, %v2930
    %v2934 = vshrl.u32 2475754826, %v2931
    %v2935 = vor.u32 %v2933, %v2934
    %v2936 = vshll.u32 2475754826, %v2930
    %v2937 = vshrl.u32 2131351028, %v2931
    %v2938 = vor.u32 %v2936, %v2937
    %v2939 = vshll.u32 2131351028, %v2930
    %v2940 = vshrl.u32 2102212464, %v2931
    %v2941 = vor.u32 %v2939, %v2940
    %v2942 = vshll.u32 2102212464, %v2930
    %v2943 = vshrl.u32 920167782, %v2931
    %v2944 = vor.u32 %v2942, %v2943
    %v2945 = vshll.u32 920167782, %v2930
    %v2946 = vshrl.u32 1326507024, %v2931
    %v2947 = vor.u32 %v2945, %v2946
    %vm2948 = vcmp.lt.s32.totalorder %v2929, 1
    %vm2949 = vcmp.lt.s32.totalorder %v2929, 2
    %vm2950 = vcmp.lt.s32.totalorder %v2929, 3
    %vm2951 = vcmp.lt.s32.totalorder %v2929, 4
    %v2952 = vsel %vm2948, %v2932, %v2935
    %v2953 = vsel %vm2951, %v2941, 2102212464
    %v2954 = vsel %vm2950, %v2938, %v2953
    %v2955 = vsel %vm2949, %v2952, %v2954
    %v2956 = vsel %vm2948, %v2935, %v2938
    %v2957 = vsel %vm2951, %v2944, 920167782
    %v2958 = vsel %vm2950, %v2941, %v2957
    %v2959 = vsel %vm2949, %v2956, %v2958
    %v2960 = vsel %vm2948, %v2938, %v2941
    %v2961 = vsel %vm2951, %v2947, 1326507024
    %v2962 = vsel %vm2950, %v2944, %v2961
    %v2963 = vsel %vm2949, %v2960, %v2962
    %v2964 = vshll.u32 %v2924, 8
    %v2965 = vmul.u32.u64.compose %v2964, %v2963
    %v2966 = vextract.low.u32 %v2965
    %v2967 = vextract.high.u32 %v2965
    %v2968 = vmul.u32.u64.compose %v2964, %v2959
    %v2969 = vextract.low.u32 %v2968
    %v2970 = vextract.high.u32 %v2968
    %v2971 = vmul.u32 %v2964, %v2955
    %v2972 = vadd.s32 %v2967, %v2969
    %vm2973 = vc.u32 %v2967, %v2969
    %v2974 = vadd.s32 %v2970, 1
    %v2975 = vsel %vm2973, %v2974, %v2970
    %v2976 = vadd.s32 %v2971, %v2975
    %v2977 = vadd.s32 %v2976, 536870912
    %v2978 = vshrl.u32 %v2977, 30
    %v2979 = vshll.u32 %v2978, 30
    %v2980 = vsub.s32 %v2976, %v2979
    %vm2981 = vcmp.lt.s32.totalorder %v2980, 0
    %v2982 = vsub.s32 0, %v2980
    %v2983 = vsel %vm2981, %v2982, %v2980
    %v2984 = vclz %v2983
    %v2985 = vsub.s32 %v2984, 2
    %vm2986 = vcmp.gt.s32.totalorder 0, %v2985
    %v2987 = vsel %vm2986, 0, %v2985
    %v2988 = vsub.s32 32, %v2987
    %v2989 = vshll.u32 %v2980, %v2987
    %v2990 = vshrl.u32 %v2972, %v2988
    %v2991 = vor.u32 %v2989, %v2990
    %v2992 = vsub.s32 4294967266, %v2987
    %v2993 = vadd.s32 %v2992, 127
    %v2994 = vshll.u32 %v2993, 23
    %v2995 = vor.u32 4788187, %v2994
    %v2996 = vand.u32 2147483647, %v2995
    %v2998 = vcvt.s32.f32 %v2991
    %v2999 = vmul.f32 %v2998, %v2996
    %v3000 = vxor.u32 %v2999, 2147483648
    %v3001 = vsel %vm2918, %v3000, %v2999
    %v3002 = vsub.s32 4, %v2978
    %v3003 = vsel %vm2918, %v3002, %v2978
    %v3004 = vsel %vm2917, %v1359, %v3001
    %v3005 = vsel %vm2917, 0, %v3003
    %v3006 = vcosq.f32.pop %v3004
    %v3007 = vsinq.f32.pop %v3004
    %vm3008 = vweird.f32 %v1359
    %v3009 = vadd.s32 %v3005, 3
    %v3010 = vand.u32 %v3009, 3
    %vm3011 = vcmp.lt.s32.totalorder %v3010, 2
    %vm3012 = vcmp.eq.s32.totalorder %v3010, 0
    %v3013 = vxor.u32 %v3007, 2147483648
    %v3014 = vsel %vm3012, %v3006, %v3013
    %vm3015 = vcmp.eq.s32.totalorder %v3010, 2
    %v3016 = vxor.u32 %v3006, 2147483648
    %v3017 = vsel %vm3015, %v3016, %v3007
    %v3018 = vsel %vm3011, %v3014, %v3017
    %v3019 = vsel %vm3008, nan, %v3018
    %v3020 = vmul.f32 %v2600, %v2915
    %v3021 = vmul.f32 %v2602, %v3019
    %v3022 = vld [vmem:[#allocation5] sm:$0xff]
    %v3023 = vld [vmem:[#allocation5 + $0x8] sm:$0xff]
    %v3024 = vld [vmem:[#allocation5 + $0x10] sm:$0xff]
    %v3025 = vld [vmem:[#allocation5 + $0x18] sm:$0xff]
    %v3026 = vld [vmem:[#allocation5 + $0x20] sm:$0xff]
    %v3027 = vld [vmem:[#allocation5 + $0x28] sm:$0xff]
    %v3028 = vld [vmem:[#allocation5 + $0x30] sm:$0xff]
    %v3029 = vld [vmem:[#allocation5 + $0x38] sm:$0xff]
    %v3030 = vld [vmem:[#allocation5 + $0x40] sm:$0xff]
    %v3031 = vld [vmem:[#allocation5 + $0x48] sm:$0xff]
    %v3032 = vld [vmem:[#allocation5 + $0x50] sm:$0xff]
    %v3033 = vld [vmem:[#allocation5 + $0x58] sm:$0xff]
    %v3034 = vld [vmem:[#allocation5 + $0x60] sm:$0xff]
    %v3035 = vld [vmem:[#allocation5 + $0x68] sm:$0xff]
    %v3036 = vld [vmem:[#allocation5 + $0x70] sm:$0xff]
    %v3037 = vld [vmem:[#allocation5 + $0x78] sm:$0xff]
    %v3038 = vld [vmem:[#allocation5 + $0x80] sm:$0xff]
    %v3039 = vld [vmem:[#allocation5 + $0x88] sm:$0xff]
    %v3040 = vld [vmem:[#allocation5 + $0x90] sm:$0xff]
    %v3041 = vld [vmem:[#allocation5 + $0x98] sm:$0xff]
    %v3042 = vld [vmem:[#allocation5 + $0xa0] sm:$0xff]
    %v3043 = vld [vmem:[#allocation5 + $0xa8] sm:$0xff]
    %v3044 = vld [vmem:[#allocation5 + $0xb0] sm:$0xff]
    %v3045 = vld [vmem:[#allocation5 + $0xb8] sm:$0xff]
    %v3046 = vld [vmem:[#allocation5 + $0xc0] sm:$0xff]
    %v3047 = vld [vmem:[#allocation5 + $0xc8] sm:$0xff]
    %v3048 = vld [vmem:[#allocation5 + $0xd0] sm:$0xff]
    %v3049 = vld [vmem:[#allocation5 + $0xd8] sm:$0xff]
    %v3050 = vld [vmem:[#allocation5 + $0xe0] sm:$0xff]
    %v3051 = vld [vmem:[#allocation5 + $0xe8] sm:$0xff]
    %v3052 = vld [vmem:[#allocation5 + $0xf0] sm:$0xff]
    %v3053 = vld [vmem:[#allocation5 + $0xf8] sm:$0xff]
    %v3054 = vld [vmem:[#allocation5 + $0x100] sm:$0xff]
    %v3055 = vld [vmem:[#allocation5 + $0x108] sm:$0xff]
    %v3056 = vld [vmem:[#allocation5 + $0x110] sm:$0xff]
    %v3057 = vld [vmem:[#allocation5 + $0x118] sm:$0xff]
    %v3058 = vld [vmem:[#allocation5 + $0x120] sm:$0xff]
    %v3059 = vld [vmem:[#allocation5 + $0x128] sm:$0xff]
    %v3060 = vld [vmem:[#allocation5 + $0x130] sm:$0xff]
    %v3061 = vld [vmem:[#allocation5 + $0x138] sm:$0xff]
    %v3062 = vld [vmem:[#allocation5 + $0x140] sm:$0xff]
    %v3063 = vld [vmem:[#allocation5 + $0x148] sm:$0xff]
    %v3064 = vld [vmem:[#allocation5 + $0x150] sm:$0xff]
    %v3065 = vld [vmem:[#allocation5 + $0x158] sm:$0xff]
    %v3066 = vld [vmem:[#allocation5 + $0x160] sm:$0xff]
    %v3067 = vld [vmem:[#allocation5 + $0x168] sm:$0xff]
    %v3068 = vld [vmem:[#allocation5 + $0x170] sm:$0xff]
    %v3069 = vld [vmem:[#allocation5 + $0x178] sm:$0xff]
    %v3070 = vld [vmem:[#allocation5 + $0x180] sm:$0xff]
    %v3071 = vld [vmem:[#allocation5 + $0x188] sm:$0xff]
    %v3072 = vld [vmem:[#allocation5 + $0x190] sm:$0xff]
    %v3073 = vld [vmem:[#allocation5 + $0x198] sm:$0xff]
    %v3074 = vld [vmem:[#allocation5 + $0x1a0] sm:$0xff]
    %v3075 = vld [vmem:[#allocation5 + $0x1a8] sm:$0xff]
    %v3076 = vld [vmem:[#allocation5 + $0x1b0] sm:$0xff]
    %v3077 = vld [vmem:[#allocation5 + $0x1b8] sm:$0xff]
    %v3078 = vld [vmem:[#allocation5 + $0x1c0] sm:$0xff]
    %v3079 = vld [vmem:[#allocation5 + $0x1c8] sm:$0xff]
    %v3080 = vld [vmem:[#allocation5 + $0x1d0] sm:$0xff]
    %v3081 = vld [vmem:[#allocation5 + $0x1d8] sm:$0xff]
    %v3082 = vld [vmem:[#allocation5 + $0x1e0] sm:$0xff]
    %v3083 = vld [vmem:[#allocation5 + $0x1e8] sm:$0xff]
    %v3084 = vld [vmem:[#allocation5 + $0x1f0] sm:$0xff]
    %v3085 = vld [vmem:[#allocation5 + $0x1f8] sm:$0xff]
    %v3086 = vand.u32 %v3023, 4294901760
    %3087 = vmatprep.subr.mxu0 %v3086
    %v3088 = vand.u32 %v3022, 4294901760
    %3089 = vmatpush1.msra.mxu0 %v3088
    %v3090 = vand.u32 %v3025, 4294901760
    %3091 = vmatprep.subr.mxu0 %v3090
    %v3092 = vand.u32 %v3024, 4294901760
    %3093 = vmatpush1.msra.mxu0 %v3092
    %v3094 = vand.u32 %v3027, 4294901760
    %3095 = vmatprep.subr.mxu0 %v3094
    %v3096 = vand.u32 %v3026, 4294901760
    %3097 = vmatpush1.msra.mxu0 %v3096
    %v3098 = vand.u32 %v3029, 4294901760
    %3099 = vmatprep.subr.mxu0 %v3098
    %v3100 = vand.u32 %v3028, 4294901760
    %3101 = vmatpush1.msra.mxu0 %v3100
    %v3102 = vand.u32 %v3031, 4294901760
    %3103 = vmatprep.subr.mxu0 %v3102
    %v3104 = vand.u32 %v3030, 4294901760
    %3105 = vmatpush1.msra.mxu0 %v3104
    %v3106 = vand.u32 %v3033, 4294901760
    %3107 = vmatprep.subr.mxu0 %v3106
    %v3108 = vand.u32 %v3032, 4294901760
    %3109 = vmatpush1.msra.mxu0 %v3108
    %v3110 = vand.u32 %v3035, 4294901760
    %3111 = vmatprep.subr.mxu0 %v3110
    %v3112 = vand.u32 %v3034, 4294901760
    %3113 = vmatpush1.msra.mxu0 %v3112
    %v3114 = vand.u32 %v3037, 4294901760
    %3115 = vmatprep.subr.mxu0 %v3114
    %v3116 = vand.u32 %v3036, 4294901760
    %3117 = vmatpush1.msra.mxu0 %v3116
    %v3118 = vand.u32 %v3039, 4294901760
    %3119 = vmatprep.subr.mxu0 %v3118
    %v3120 = vand.u32 %v3038, 4294901760
    %3121 = vmatpush1.msra.mxu0 %v3120
    %v3122 = vand.u32 %v3041, 4294901760
    %3123 = vmatprep.subr.mxu0 %v3122
    %v3124 = vand.u32 %v3040, 4294901760
    %3125 = vmatpush1.msra.mxu0 %v3124
    %v3126 = vand.u32 %v3043, 4294901760
    %3127 = vmatprep.subr.mxu0 %v3126
    %v3128 = vand.u32 %v3042, 4294901760
    %3129 = vmatpush1.msra.mxu0 %v3128
    %v3130 = vand.u32 %v3045, 4294901760
    %3131 = vmatprep.subr.mxu0 %v3130
    %v3132 = vand.u32 %v3044, 4294901760
    %3133 = vmatpush1.msra.mxu0 %v3132
    %v3134 = vand.u32 %v3047, 4294901760
    %3135 = vmatprep.subr.mxu0 %v3134
    %v3136 = vand.u32 %v3046, 4294901760
    %3137 = vmatpush1.msra.mxu0 %v3136
    %v3138 = vand.u32 %v3049, 4294901760
    %3139 = vmatprep.subr.mxu0 %v3138
    %v3140 = vand.u32 %v3048, 4294901760
    %3141 = vmatpush1.msra.mxu0 %v3140
    %v3142 = vand.u32 %v3051, 4294901760
    %3143 = vmatprep.subr.mxu0 %v3142
    %v3144 = vand.u32 %v3050, 4294901760
    %3145 = vmatpush1.msra.mxu0 %v3144
    %v3146 = vand.u32 %v3053, 4294901760
    %3147 = vmatprep.subr.mxu0 %v3146
    %v3148 = vand.u32 %v3052, 4294901760
    %3149 = vmatpush1.msra.mxu0 %v3148
    %v3150 = vand.u32 %v3055, 4294901760
    %3151 = vmatprep.subr.mxu0 %v3150
    %v3152 = vand.u32 %v3054, 4294901760
    %3153 = vmatpush1.msra.mxu0 %v3152
    %v3154 = vand.u32 %v3057, 4294901760
    %3155 = vmatprep.subr.mxu0 %v3154
    %v3156 = vand.u32 %v3056, 4294901760
    %3157 = vmatpush1.msra.mxu0 %v3156
    %v3158 = vand.u32 %v3059, 4294901760
    %3159 = vmatprep.subr.mxu0 %v3158
    %v3160 = vand.u32 %v3058, 4294901760
    %3161 = vmatpush1.msra.mxu0 %v3160
    %v3162 = vand.u32 %v3061, 4294901760
    %3163 = vmatprep.subr.mxu0 %v3162
    %v3164 = vand.u32 %v3060, 4294901760
    %3165 = vmatpush1.msra.mxu0 %v3164
    %v3166 = vand.u32 %v3063, 4294901760
    %3167 = vmatprep.subr.mxu0 %v3166
    %v3168 = vand.u32 %v3062, 4294901760
    %3169 = vmatpush1.msra.mxu0 %v3168
    %v3170 = vand.u32 %v3065, 4294901760
    %3171 = vmatprep.subr.mxu0 %v3170
    %v3172 = vand.u32 %v3064, 4294901760
    %3173 = vmatpush1.msra.mxu0 %v3172
    %v3174 = vand.u32 %v3067, 4294901760
    %3175 = vmatprep.subr.mxu0 %v3174
    %v3176 = vand.u32 %v3066, 4294901760
    %3177 = vmatpush1.msra.mxu0 %v3176
    %v3178 = vand.u32 %v3069, 4294901760
    %3179 = vmatprep.subr.mxu0 %v3178
    %v3180 = vand.u32 %v3068, 4294901760
    %3181 = vmatpush1.msra.mxu0 %v3180
    %v3182 = vand.u32 %v3071, 4294901760
    %3183 = vmatprep.subr.mxu0 %v3182
    %v3184 = vand.u32 %v3070, 4294901760
    %3185 = vmatpush1.msra.mxu0 %v3184
    %v3186 = vand.u32 %v3073, 4294901760
    %3187 = vmatprep.subr.mxu0 %v3186
    %v3188 = vand.u32 %v3072, 4294901760
    %3189 = vmatpush1.msra.mxu0 %v3188
    %v3190 = vand.u32 %v3075, 4294901760
    %3191 = vmatprep.subr.mxu0 %v3190
    %v3192 = vand.u32 %v3074, 4294901760
    %3193 = vmatpush1.msra.mxu0 %v3192
    %v3194 = vand.u32 %v3077, 4294901760
    %3195 = vmatprep.subr.mxu0 %v3194
    %v3196 = vand.u32 %v3076, 4294901760
    %3197 = vmatpush1.msra.mxu0 %v3196
    %v3198 = vand.u32 %v3079, 4294901760
    %3199 = vmatprep.subr.mxu0 %v3198
    %v3200 = vand.u32 %v3078, 4294901760
    %3201 = vmatpush1.msra.mxu0 %v3200
    %v3202 = vand.u32 %v3081, 4294901760
    %3203 = vmatprep.subr.mxu0 %v3202
    %v3204 = vand.u32 %v3080, 4294901760
    %3205 = vmatpush1.msra.mxu0 %v3204
    %v3206 = vand.u32 %v3083, 4294901760
    %3207 = vmatprep.subr.mxu0 %v3206
    %v3208 = vand.u32 %v3082, 4294901760
    %3209 = vmatpush1.msra.mxu0 %v3208
    %v3210 = vand.u32 %v3085, 4294901760
    %3211 = vmatprep.subr.mxu0 %v3210
    %v3212 = vand.u32 %v3084, 4294901760
    %3213 = vmatpush1.msra.mxu0 %v3212
    %v3214 = vand.u32 %v3020, 4294901760
    %v3215 = vsub.f32 %v3020, %v3214
    %v3216 = vand.u32 %v3215, 4294901760
    %v3217 = vsub.f32 %v3215, %v3216
    %v3218 = vand.u32 %v3217, 4294901760
    %3219 = vmatprep.mubr.f32.mxu0 %v3218
    %v3220 = vand.u32 %v2810, 4294901760
    %v3221 = vsub.f32 %v2810, %v3220
    %v3222 = vand.u32 %v3221, 4294901760
    %v3223 = vsub.f32 %v3221, %v3222
    %v3224 = vand.u32 %v3223, 4294901760
    %3225 = vmatmul.mubr.f32.gmra.mrb[0].mxu0 %v3224
    %v3226 = vpop.f32.mrb[0].mxu0
    %v3227 = vadd.f32 0.0, %v3226
    %v3228 = vpop.f32.mrb[0].mxu0
    %v3229 = vadd.f32 0.0, %v3228
    %3230 = vdwg.mxu0
    %v3231 = vand.u32 %v3023, 4294901760
    %v3232 = vsub.f32 %v3023, %v3231
    %v3233 = vand.u32 %v3232, 4294901760
    %v3234 = vsub.f32 %v3232, %v3233
    %v3235 = vand.u32 %v3234, 4294901760
    %3236 = vmatprep.subr.mxu0 %v3235
    %v3237 = vand.u32 %v3022, 4294901760
    %v3238 = vsub.f32 %v3022, %v3237
    %v3239 = vand.u32 %v3238, 4294901760
    %v3240 = vsub.f32 %v3238, %v3239
    %v3241 = vand.u32 %v3240, 4294901760
    %3242 = vmatpush1.msra.mxu0 %v3241
    %v3243 = vand.u32 %v3025, 4294901760
    %v3244 = vsub.f32 %v3025, %v3243
    %v3245 = vand.u32 %v3244, 4294901760
    %v3246 = vsub.f32 %v3244, %v3245
    %v3247 = vand.u32 %v3246, 4294901760
    %3248 = vmatprep.subr.mxu0 %v3247
    %v3249 = vand.u32 %v3024, 4294901760
    %v3250 = vsub.f32 %v3024, %v3249
    %v3251 = vand.u32 %v3250, 4294901760
    %v3252 = vsub.f32 %v3250, %v3251
    %v3253 = vand.u32 %v3252, 4294901760
    %3254 = vmatpush1.msra.mxu0 %v3253
    %v3255 = vand.u32 %v3027, 4294901760
    %v3256 = vsub.f32 %v3027, %v3255
    %v3257 = vand.u32 %v3256, 4294901760
    %v3258 = vsub.f32 %v3256, %v3257
    %v3259 = vand.u32 %v3258, 4294901760
    %3260 = vmatprep.subr.mxu0 %v3259
    %v3261 = vand.u32 %v3026, 4294901760
    %v3262 = vsub.f32 %v3026, %v3261
    %v3263 = vand.u32 %v3262, 4294901760
    %v3264 = vsub.f32 %v3262, %v3263
    %v3265 = vand.u32 %v3264, 4294901760
    %3266 = vmatpush1.msra.mxu0 %v3265
    %v3267 = vand.u32 %v3029, 4294901760
    %v3268 = vsub.f32 %v3029, %v3267
    %v3269 = vand.u32 %v3268, 4294901760
    %v3270 = vsub.f32 %v3268, %v3269
    %v3271 = vand.u32 %v3270, 4294901760
    %3272 = vmatprep.subr.mxu0 %v3271
    %v3273 = vand.u32 %v3028, 4294901760
    %v3274 = vsub.f32 %v3028, %v3273
    %v3275 = vand.u32 %v3274, 4294901760
    %v3276 = vsub.f32 %v3274, %v3275
    %v3277 = vand.u32 %v3276, 4294901760
    %3278 = vmatpush1.msra.mxu0 %v3277
    %v3279 = vand.u32 %v3031, 4294901760
    %v3280 = vsub.f32 %v3031, %v3279
    %v3281 = vand.u32 %v3280, 4294901760
    %v3282 = vsub.f32 %v3280, %v3281
    %v3283 = vand.u32 %v3282, 4294901760
    %3284 = vmatprep.subr.mxu0 %v3283
    %v3285 = vand.u32 %v3030, 4294901760
    %v3286 = vsub.f32 %v3030, %v3285
    %v3287 = vand.u32 %v3286, 4294901760
    %v3288 = vsub.f32 %v3286, %v3287
    %v3289 = vand.u32 %v3288, 4294901760
    %3290 = vmatpush1.msra.mxu0 %v3289
    %v3291 = vand.u32 %v3033, 4294901760
    %v3292 = vsub.f32 %v3033, %v3291
    %v3293 = vand.u32 %v3292, 4294901760
    %v3294 = vsub.f32 %v3292, %v3293
    %v3295 = vand.u32 %v3294, 4294901760
    %3296 = vmatprep.subr.mxu0 %v3295
    %v3297 = vand.u32 %v3032, 4294901760
    %v3298 = vsub.f32 %v3032, %v3297
    %v3299 = vand.u32 %v3298, 4294901760
    %v3300 = vsub.f32 %v3298, %v3299
    %v3301 = vand.u32 %v3300, 4294901760
    %3302 = vmatpush1.msra.mxu0 %v3301
    %v3303 = vand.u32 %v3035, 4294901760
    %v3304 = vsub.f32 %v3035, %v3303
    %v3305 = vand.u32 %v3304, 4294901760
    %v3306 = vsub.f32 %v3304, %v3305
    %v3307 = vand.u32 %v3306, 4294901760
    %3308 = vmatprep.subr.mxu0 %v3307
    %v3309 = vand.u32 %v3034, 4294901760
    %v3310 = vsub.f32 %v3034, %v3309
    %v3311 = vand.u32 %v3310, 4294901760
    %v3312 = vsub.f32 %v3310, %v3311
    %v3313 = vand.u32 %v3312, 4294901760
    %3314 = vmatpush1.msra.mxu0 %v3313
    %v3315 = vand.u32 %v3037, 4294901760
    %v3316 = vsub.f32 %v3037, %v3315
    %v3317 = vand.u32 %v3316, 4294901760
    %v3318 = vsub.f32 %v3316, %v3317
    %v3319 = vand.u32 %v3318, 4294901760
    %3320 = vmatprep.subr.mxu0 %v3319
    %v3321 = vand.u32 %v3036, 4294901760
    %v3322 = vsub.f32 %v3036, %v3321
    %v3323 = vand.u32 %v3322, 4294901760
    %v3324 = vsub.f32 %v3322, %v3323
    %v3325 = vand.u32 %v3324, 4294901760
    %3326 = vmatpush1.msra.mxu0 %v3325
    %v3327 = vand.u32 %v3039, 4294901760
    %v3328 = vsub.f32 %v3039, %v3327
    %v3329 = vand.u32 %v3328, 4294901760
    %v3330 = vsub.f32 %v3328, %v3329
    %v3331 = vand.u32 %v3330, 4294901760
    %3332 = vmatprep.subr.mxu0 %v3331
    %v3333 = vand.u32 %v3038, 4294901760
    %v3334 = vsub.f32 %v3038, %v3333
    %v3335 = vand.u32 %v3334, 4294901760
    %v3336 = vsub.f32 %v3334, %v3335
    %v3337 = vand.u32 %v3336, 4294901760
    %3338 = vmatpush1.msra.mxu0 %v3337
    %v3339 = vand.u32 %v3041, 4294901760
    %v3340 = vsub.f32 %v3041, %v3339
    %v3341 = vand.u32 %v3340, 4294901760
    %v3342 = vsub.f32 %v3340, %v3341
    %v3343 = vand.u32 %v3342, 4294901760
    %3344 = vmatprep.subr.mxu0 %v3343
    %v3345 = vand.u32 %v3040, 4294901760
    %v3346 = vsub.f32 %v3040, %v3345
    %v3347 = vand.u32 %v3346, 4294901760
    %v3348 = vsub.f32 %v3346, %v3347
    %v3349 = vand.u32 %v3348, 4294901760
    %3350 = vmatpush1.msra.mxu0 %v3349
    %v3351 = vand.u32 %v3043, 4294901760
    %v3352 = vsub.f32 %v3043, %v3351
    %v3353 = vand.u32 %v3352, 4294901760
    %v3354 = vsub.f32 %v3352, %v3353
    %v3355 = vand.u32 %v3354, 4294901760
    %3356 = vmatprep.subr.mxu0 %v3355
    %v3357 = vand.u32 %v3042, 4294901760
    %v3358 = vsub.f32 %v3042, %v3357
    %v3359 = vand.u32 %v3358, 4294901760
    %v3360 = vsub.f32 %v3358, %v3359
    %v3361 = vand.u32 %v3360, 4294901760
    %3362 = vmatpush1.msra.mxu0 %v3361
    %v3363 = vand.u32 %v3045, 4294901760
    %v3364 = vsub.f32 %v3045, %v3363
    %v3365 = vand.u32 %v3364, 4294901760
    %v3366 = vsub.f32 %v3364, %v3365
    %v3367 = vand.u32 %v3366, 4294901760
    %3368 = vmatprep.subr.mxu0 %v3367
    %v3369 = vand.u32 %v3044, 4294901760
    %v3370 = vsub.f32 %v3044, %v3369
    %v3371 = vand.u32 %v3370, 4294901760
    %v3372 = vsub.f32 %v3370, %v3371
    %v3373 = vand.u32 %v3372, 4294901760
    %3374 = vmatpush1.msra.mxu0 %v3373
    %v3375 = vand.u32 %v3047, 4294901760
    %v3376 = vsub.f32 %v3047, %v3375
    %v3377 = vand.u32 %v3376, 4294901760
    %v3378 = vsub.f32 %v3376, %v3377
    %v3379 = vand.u32 %v3378, 4294901760
    %3380 = vmatprep.subr.mxu0 %v3379
    %v3381 = vand.u32 %v3046, 4294901760
    %v3382 = vsub.f32 %v3046, %v3381
    %v3383 = vand.u32 %v3382, 4294901760
    %v3384 = vsub.f32 %v3382, %v3383
    %v3385 = vand.u32 %v3384, 4294901760
    %3386 = vmatpush1.msra.mxu0 %v3385
    %v3387 = vand.u32 %v3049, 4294901760
    %v3388 = vsub.f32 %v3049, %v3387
    %v3389 = vand.u32 %v3388, 4294901760
    %v3390 = vsub.f32 %v3388, %v3389
    %v3391 = vand.u32 %v3390, 4294901760
    %3392 = vmatprep.subr.mxu0 %v3391
    %v3393 = vand.u32 %v3048, 4294901760
    %v3394 = vsub.f32 %v3048, %v3393
    %v3395 = vand.u32 %v3394, 4294901760
    %v3396 = vsub.f32 %v3394, %v3395
    %v3397 = vand.u32 %v3396, 4294901760
    %3398 = vmatpush1.msra.mxu0 %v3397
    %v3399 = vand.u32 %v3051, 4294901760
    %v3400 = vsub.f32 %v3051, %v3399
    %v3401 = vand.u32 %v3400, 4294901760
    %v3402 = vsub.f32 %v3400, %v3401
    %v3403 = vand.u32 %v3402, 4294901760
    %3404 = vmatprep.subr.mxu0 %v3403
    %v3405 = vand.u32 %v3050, 4294901760
    %v3406 = vsub.f32 %v3050, %v3405
    %v3407 = vand.u32 %v3406, 4294901760
    %v3408 = vsub.f32 %v3406, %v3407
    %v3409 = vand.u32 %v3408, 4294901760
    %3410 = vmatpush1.msra.mxu0 %v3409
    %v3411 = vand.u32 %v3053, 4294901760
    %v3412 = vsub.f32 %v3053, %v3411
    %v3413 = vand.u32 %v3412, 4294901760
    %v3414 = vsub.f32 %v3412, %v3413
    %v3415 = vand.u32 %v3414, 4294901760
    %3416 = vmatprep.subr.mxu0 %v3415
    %v3417 = vand.u32 %v3052, 4294901760
    %v3418 = vsub.f32 %v3052, %v3417
    %v3419 = vand.u32 %v3418, 4294901760
    %v3420 = vsub.f32 %v3418, %v3419
    %v3421 = vand.u32 %v3420, 4294901760
    %3422 = vmatpush1.msra.mxu0 %v3421
    %v3423 = vand.u32 %v3055, 4294901760
    %v3424 = vsub.f32 %v3055, %v3423
    %v3425 = vand.u32 %v3424, 4294901760
    %v3426 = vsub.f32 %v3424, %v3425
    %v3427 = vand.u32 %v3426, 4294901760
    %3428 = vmatprep.subr.mxu0 %v3427
    %v3429 = vand.u32 %v3054, 4294901760
    %v3430 = vsub.f32 %v3054, %v3429
    %v3431 = vand.u32 %v3430, 4294901760
    %v3432 = vsub.f32 %v3430, %v3431
    %v3433 = vand.u32 %v3432, 4294901760
    %3434 = vmatpush1.msra.mxu0 %v3433
    %v3435 = vand.u32 %v3057, 4294901760
    %v3436 = vsub.f32 %v3057, %v3435
    %v3437 = vand.u32 %v3436, 4294901760
    %v3438 = vsub.f32 %v3436, %v3437
    %v3439 = vand.u32 %v3438, 4294901760
    %3440 = vmatprep.subr.mxu0 %v3439
    %v3441 = vand.u32 %v3056, 4294901760
    %v3442 = vsub.f32 %v3056, %v3441
    %v3443 = vand.u32 %v3442, 4294901760
    %v3444 = vsub.f32 %v3442, %v3443
    %v3445 = vand.u32 %v3444, 4294901760
    %3446 = vmatpush1.msra.mxu0 %v3445
    %v3447 = vand.u32 %v3059, 4294901760
    %v3448 = vsub.f32 %v3059, %v3447
    %v3449 = vand.u32 %v3448, 4294901760
    %v3450 = vsub.f32 %v3448, %v3449
    %v3451 = vand.u32 %v3450, 4294901760
    %3452 = vmatprep.subr.mxu0 %v3451
    %v3453 = vand.u32 %v3058, 4294901760
    %v3454 = vsub.f32 %v3058, %v3453
    %v3455 = vand.u32 %v3454, 4294901760
    %v3456 = vsub.f32 %v3454, %v3455
    %v3457 = vand.u32 %v3456, 4294901760
    %3458 = vmatpush1.msra.mxu0 %v3457
    %v3459 = vand.u32 %v3061, 4294901760
    %v3460 = vsub.f32 %v3061, %v3459
    %v3461 = vand.u32 %v3460, 4294901760
    %v3462 = vsub.f32 %v3460, %v3461
    %v3463 = vand.u32 %v3462, 4294901760
    %3464 = vmatprep.subr.mxu0 %v3463
    %v3465 = vand.u32 %v3060, 4294901760
    %v3466 = vsub.f32 %v3060, %v3465
    %v3467 = vand.u32 %v3466, 4294901760
    %v3468 = vsub.f32 %v3466, %v3467
    %v3469 = vand.u32 %v3468, 4294901760
    %3470 = vmatpush1.msra.mxu0 %v3469
    %v3471 = vand.u32 %v3063, 4294901760
    %v3472 = vsub.f32 %v3063, %v3471
    %v3473 = vand.u32 %v3472, 4294901760
    %v3474 = vsub.f32 %v3472, %v3473
    %v3475 = vand.u32 %v3474, 4294901760
    %3476 = vmatprep.subr.mxu0 %v3475
    %v3477 = vand.u32 %v3062, 4294901760
    %v3478 = vsub.f32 %v3062, %v3477
    %v3479 = vand.u32 %v3478, 4294901760
    %v3480 = vsub.f32 %v3478, %v3479
    %v3481 = vand.u32 %v3480, 4294901760
    %3482 = vmatpush1.msra.mxu0 %v3481
    %v3483 = vand.u32 %v3065, 4294901760
    %v3484 = vsub.f32 %v3065, %v3483
    %v3485 = vand.u32 %v3484, 4294901760
    %v3486 = vsub.f32 %v3484, %v3485
    %v3487 = vand.u32 %v3486, 4294901760
    %3488 = vmatprep.subr.mxu0 %v3487
    %v3489 = vand.u32 %v3064, 4294901760
    %v3490 = vsub.f32 %v3064, %v3489
    %v3491 = vand.u32 %v3490, 4294901760
    %v3492 = vsub.f32 %v3490, %v3491
    %v3493 = vand.u32 %v3492, 4294901760
    %3494 = vmatpush1.msra.mxu0 %v3493
    %v3495 = vand.u32 %v3067, 4294901760
    %v3496 = vsub.f32 %v3067, %v3495
    %v3497 = vand.u32 %v3496, 4294901760
    %v3498 = vsub.f32 %v3496, %v3497
    %v3499 = vand.u32 %v3498, 4294901760
    %3500 = vmatprep.subr.mxu0 %v3499
    %v3501 = vand.u32 %v3066, 4294901760
    %v3502 = vsub.f32 %v3066, %v3501
    %v3503 = vand.u32 %v3502, 4294901760
    %v3504 = vsub.f32 %v3502, %v3503
    %v3505 = vand.u32 %v3504, 4294901760
    %3506 = vmatpush1.msra.mxu0 %v3505
    %v3507 = vand.u32 %v3069, 4294901760
    %v3508 = vsub.f32 %v3069, %v3507
    %v3509 = vand.u32 %v3508, 4294901760
    %v3510 = vsub.f32 %v3508, %v3509
    %v3511 = vand.u32 %v3510, 4294901760
    %3512 = vmatprep.subr.mxu0 %v3511
    %v3513 = vand.u32 %v3068, 4294901760
    %v3514 = vsub.f32 %v3068, %v3513
    %v3515 = vand.u32 %v3514, 4294901760
    %v3516 = vsub.f32 %v3514, %v3515
    %v3517 = vand.u32 %v3516, 4294901760
    %3518 = vmatpush1.msra.mxu0 %v3517
    %v3519 = vand.u32 %v3071, 4294901760
    %v3520 = vsub.f32 %v3071, %v3519
    %v3521 = vand.u32 %v3520, 4294901760
    %v3522 = vsub.f32 %v3520, %v3521
    %v3523 = vand.u32 %v3522, 4294901760
    %3524 = vmatprep.subr.mxu0 %v3523
    %v3525 = vand.u32 %v3070, 4294901760
    %v3526 = vsub.f32 %v3070, %v3525
    %v3527 = vand.u32 %v3526, 4294901760
    %v3528 = vsub.f32 %v3526, %v3527
    %v3529 = vand.u32 %v3528, 4294901760
    %3530 = vmatpush1.msra.mxu0 %v3529
    %v3531 = vand.u32 %v3073, 4294901760
    %v3532 = vsub.f32 %v3073, %v3531
    %v3533 = vand.u32 %v3532, 4294901760
    %v3534 = vsub.f32 %v3532, %v3533
    %v3535 = vand.u32 %v3534, 4294901760
    %3536 = vmatprep.subr.mxu0 %v3535
    %v3537 = vand.u32 %v3072, 4294901760
    %v3538 = vsub.f32 %v3072, %v3537
    %v3539 = vand.u32 %v3538, 4294901760
    %v3540 = vsub.f32 %v3538, %v3539
    %v3541 = vand.u32 %v3540, 4294901760
    %3542 = vmatpush1.msra.mxu0 %v3541
    %v3543 = vand.u32 %v3075, 4294901760
    %v3544 = vsub.f32 %v3075, %v3543
    %v3545 = vand.u32 %v3544, 4294901760
    %v3546 = vsub.f32 %v3544, %v3545
    %v3547 = vand.u32 %v3546, 4294901760
    %3548 = vmatprep.subr.mxu0 %v3547
    %v3549 = vand.u32 %v3074, 4294901760
    %v3550 = vsub.f32 %v3074, %v3549
    %v3551 = vand.u32 %v3550, 4294901760
    %v3552 = vsub.f32 %v3550, %v3551
    %v3553 = vand.u32 %v3552, 4294901760
    %3554 = vmatpush1.msra.mxu0 %v3553
    %v3555 = vand.u32 %v3077, 4294901760
    %v3556 = vsub.f32 %v3077, %v3555
    %v3557 = vand.u32 %v3556, 4294901760
    %v3558 = vsub.f32 %v3556, %v3557
    %v3559 = vand.u32 %v3558, 4294901760
    %3560 = vmatprep.subr.mxu0 %v3559
    %v3561 = vand.u32 %v3076, 4294901760
    %v3562 = vsub.f32 %v3076, %v3561
    %v3563 = vand.u32 %v3562, 4294901760
    %v3564 = vsub.f32 %v3562, %v3563
    %v3565 = vand.u32 %v3564, 4294901760
    %3566 = vmatpush1.msra.mxu0 %v3565
    %v3567 = vand.u32 %v3079, 4294901760
    %v3568 = vsub.f32 %v3079, %v3567
    %v3569 = vand.u32 %v3568, 4294901760
    %v3570 = vsub.f32 %v3568, %v3569
    %v3571 = vand.u32 %v3570, 4294901760
    %3572 = vmatprep.subr.mxu0 %v3571
    %v3573 = vand.u32 %v3078, 4294901760
    %v3574 = vsub.f32 %v3078, %v3573
    %v3575 = vand.u32 %v3574, 4294901760
    %v3576 = vsub.f32 %v3574, %v3575
    %v3577 = vand.u32 %v3576, 4294901760
    %3578 = vmatpush1.msra.mxu0 %v3577
    %v3579 = vand.u32 %v3081, 4294901760
    %v3580 = vsub.f32 %v3081, %v3579
    %v3581 = vand.u32 %v3580, 4294901760
    %v3582 = vsub.f32 %v3580, %v3581
    %v3583 = vand.u32 %v3582, 4294901760
    %3584 = vmatprep.subr.mxu0 %v3583
    %v3585 = vand.u32 %v3080, 4294901760
    %v3586 = vsub.f32 %v3080, %v3585
    %v3587 = vand.u32 %v3586, 4294901760
    %v3588 = vsub.f32 %v3586, %v3587
    %v3589 = vand.u32 %v3588, 4294901760
    %3590 = vmatpush1.msra.mxu0 %v3589
    %v3591 = vand.u32 %v3083, 4294901760
    %v3592 = vsub.f32 %v3083, %v3591
    %v3593 = vand.u32 %v3592, 4294901760
    %v3594 = vsub.f32 %v3592, %v3593
    %v3595 = vand.u32 %v3594, 4294901760
    %3596 = vmatprep.subr.mxu0 %v3595
    %v3597 = vand.u32 %v3082, 4294901760
    %v3598 = vsub.f32 %v3082, %v3597
    %v3599 = vand.u32 %v3598, 4294901760
    %v3600 = vsub.f32 %v3598, %v3599
    %v3601 = vand.u32 %v3600, 4294901760
    %3602 = vmatpush1.msra.mxu0 %v3601
    %v3603 = vand.u32 %v3085, 4294901760
    %v3604 = vsub.f32 %v3085, %v3603
    %v3605 = vand.u32 %v3604, 4294901760
    %v3606 = vsub.f32 %v3604, %v3605
    %v3607 = vand.u32 %v3606, 4294901760
    %3608 = vmatprep.subr.mxu0 %v3607
    %v3609 = vand.u32 %v3084, 4294901760
    %v3610 = vsub.f32 %v3084, %v3609
    %v3611 = vand.u32 %v3610, 4294901760
    %v3612 = vsub.f32 %v3610, %v3611
    %v3613 = vand.u32 %v3612, 4294901760
    %3614 = vmatpush1.msra.mxu0 %v3613
    %v3615 = vand.u32 %v3020, 4294901760
    %3616 = vmatprep.mubr.f32.mxu0 %v3615
    %v3617 = vand.u32 %v2810, 4294901760
    %3618 = vmatmul.mubr.f32.gmra.mrb[0].mxu0 %v3617
    %v3619 = vpop.f32.mrb[0].mxu0
    %v3620 = vadd.f32 %v3227, %v3619
    %v3621 = vpop.f32.mrb[0].mxu0
    %v3622 = vadd.f32 %v3229, %v3621
    %3623 = vdwg.mxu0
    %v3624 = vand.u32 %v3023, 4294901760
    %v3625 = vsub.f32 %v3023, %v3624
    %3626 = vmatprep.subr.mxu0 %v3625
    %v3627 = vand.u32 %v3022, 4294901760
    %v3628 = vsub.f32 %v3022, %v3627
    %3629 = vmatpush1.msra.mxu0 %v3628
    %v3630 = vand.u32 %v3025, 4294901760
    %v3631 = vsub.f32 %v3025, %v3630
    %3632 = vmatprep.subr.mxu0 %v3631
    %v3633 = vand.u32 %v3024, 4294901760
    %v3634 = vsub.f32 %v3024, %v3633
    %3635 = vmatpush1.msra.mxu0 %v3634
    %v3636 = vand.u32 %v3027, 4294901760
    %v3637 = vsub.f32 %v3027, %v3636
    %3638 = vmatprep.subr.mxu0 %v3637
    %v3639 = vand.u32 %v3026, 4294901760
    %v3640 = vsub.f32 %v3026, %v3639
    %3641 = vmatpush1.msra.mxu0 %v3640
    %v3642 = vand.u32 %v3029, 4294901760
    %v3643 = vsub.f32 %v3029, %v3642
    %3644 = vmatprep.subr.mxu0 %v3643
    %v3645 = vand.u32 %v3028, 4294901760
    %v3646 = vsub.f32 %v3028, %v3645
    %3647 = vmatpush1.msra.mxu0 %v3646
    %v3648 = vand.u32 %v3031, 4294901760
    %v3649 = vsub.f32 %v3031, %v3648
    %3650 = vmatprep.subr.mxu0 %v3649
    %v3651 = vand.u32 %v3030, 4294901760
    %v3652 = vsub.f32 %v3030, %v3651
    %3653 = vmatpush1.msra.mxu0 %v3652
    %v3654 = vand.u32 %v3033, 4294901760
    %v3655 = vsub.f32 %v3033, %v3654
    %3656 = vmatprep.subr.mxu0 %v3655
    %v3657 = vand.u32 %v3032, 4294901760
    %v3658 = vsub.f32 %v3032, %v3657
    %3659 = vmatpush1.msra.mxu0 %v3658
    %v3660 = vand.u32 %v3035, 4294901760
    %v3661 = vsub.f32 %v3035, %v3660
    %3662 = vmatprep.subr.mxu0 %v3661
    %v3663 = vand.u32 %v3034, 4294901760
    %v3664 = vsub.f32 %v3034, %v3663
    %3665 = vmatpush1.msra.mxu0 %v3664
    %v3666 = vand.u32 %v3037, 4294901760
    %v3667 = vsub.f32 %v3037, %v3666
    %3668 = vmatprep.subr.mxu0 %v3667
    %v3669 = vand.u32 %v3036, 4294901760
    %v3670 = vsub.f32 %v3036, %v3669
    %3671 = vmatpush1.msra.mxu0 %v3670
    %v3672 = vand.u32 %v3039, 4294901760
    %v3673 = vsub.f32 %v3039, %v3672
    %3674 = vmatprep.subr.mxu0 %v3673
    %v3675 = vand.u32 %v3038, 4294901760
    %v3676 = vsub.f32 %v3038, %v3675
    %3677 = vmatpush1.msra.mxu0 %v3676
    %v3678 = vand.u32 %v3041, 4294901760
    %v3679 = vsub.f32 %v3041, %v3678
    %3680 = vmatprep.subr.mxu0 %v3679
    %v3681 = vand.u32 %v3040, 4294901760
    %v3682 = vsub.f32 %v3040, %v3681
    %3683 = vmatpush1.msra.mxu0 %v3682
    %v3684 = vand.u32 %v3043, 4294901760
    %v3685 = vsub.f32 %v3043, %v3684
    %3686 = vmatprep.subr.mxu0 %v3685
    %v3687 = vand.u32 %v3042, 4294901760
    %v3688 = vsub.f32 %v3042, %v3687
    %3689 = vmatpush1.msra.mxu0 %v3688
    %v3690 = vand.u32 %v3045, 4294901760
    %v3691 = vsub.f32 %v3045, %v3690
    %3692 = vmatprep.subr.mxu0 %v3691
    %v3693 = vand.u32 %v3044, 4294901760
    %v3694 = vsub.f32 %v3044, %v3693
    %3695 = vmatpush1.msra.mxu0 %v3694
    %v3696 = vand.u32 %v3047, 4294901760
    %v3697 = vsub.f32 %v3047, %v3696
    %3698 = vmatprep.subr.mxu0 %v3697
    %v3699 = vand.u32 %v3046, 4294901760
    %v3700 = vsub.f32 %v3046, %v3699
    %3701 = vmatpush1.msra.mxu0 %v3700
    %v3702 = vand.u32 %v3049, 4294901760
    %v3703 = vsub.f32 %v3049, %v3702
    %3704 = vmatprep.subr.mxu0 %v3703
    %v3705 = vand.u32 %v3048, 4294901760
    %v3706 = vsub.f32 %v3048, %v3705
    %3707 = vmatpush1.msra.mxu0 %v3706
    %v3708 = vand.u32 %v3051, 4294901760
    %v3709 = vsub.f32 %v3051, %v3708
    %3710 = vmatprep.subr.mxu0 %v3709
    %v3711 = vand.u32 %v3050, 4294901760
    %v3712 = vsub.f32 %v3050, %v3711
    %3713 = vmatpush1.msra.mxu0 %v3712
    %v3714 = vand.u32 %v3053, 4294901760
    %v3715 = vsub.f32 %v3053, %v3714
    %3716 = vmatprep.subr.mxu0 %v3715
    %v3717 = vand.u32 %v3052, 4294901760
    %v3718 = vsub.f32 %v3052, %v3717
    %3719 = vmatpush1.msra.mxu0 %v3718
    %v3720 = vand.u32 %v3055, 4294901760
    %v3721 = vsub.f32 %v3055, %v3720
    %3722 = vmatprep.subr.mxu0 %v3721
    %v3723 = vand.u32 %v3054, 4294901760
    %v3724 = vsub.f32 %v3054, %v3723
    %3725 = vmatpush1.msra.mxu0 %v3724
    %v3726 = vand.u32 %v3057, 4294901760
    %v3727 = vsub.f32 %v3057, %v3726
    %3728 = vmatprep.subr.mxu0 %v3727
    %v3729 = vand.u32 %v3056, 4294901760
    %v3730 = vsub.f32 %v3056, %v3729
    %3731 = vmatpush1.msra.mxu0 %v3730
    %v3732 = vand.u32 %v3059, 4294901760
    %v3733 = vsub.f32 %v3059, %v3732
    %3734 = vmatprep.subr.mxu0 %v3733
    %v3735 = vand.u32 %v3058, 4294901760
    %v3736 = vsub.f32 %v3058, %v3735
    %3737 = vmatpush1.msra.mxu0 %v3736
    %v3738 = vand.u32 %v3061, 4294901760
    %v3739 = vsub.f32 %v3061, %v3738
    %3740 = vmatprep.subr.mxu0 %v3739
    %v3741 = vand.u32 %v3060, 4294901760
    %v3742 = vsub.f32 %v3060, %v3741
    %3743 = vmatpush1.msra.mxu0 %v3742
    %v3744 = vand.u32 %v3063, 4294901760
    %v3745 = vsub.f32 %v3063, %v3744
    %3746 = vmatprep.subr.mxu0 %v3745
    %v3747 = vand.u32 %v3062, 4294901760
    %v3748 = vsub.f32 %v3062, %v3747
    %3749 = vmatpush1.msra.mxu0 %v3748
    %v3750 = vand.u32 %v3065, 4294901760
    %v3751 = vsub.f32 %v3065, %v3750
    %3752 = vmatprep.subr.mxu0 %v3751
    %v3753 = vand.u32 %v3064, 4294901760
    %v3754 = vsub.f32 %v3064, %v3753
    %3755 = vmatpush1.msra.mxu0 %v3754
    %v3756 = vand.u32 %v3067, 4294901760
    %v3757 = vsub.f32 %v3067, %v3756
    %3758 = vmatprep.subr.mxu0 %v3757
    %v3759 = vand.u32 %v3066, 4294901760
    %v3760 = vsub.f32 %v3066, %v3759
    %3761 = vmatpush1.msra.mxu0 %v3760
    %v3762 = vand.u32 %v3069, 4294901760
    %v3763 = vsub.f32 %v3069, %v3762
    %3764 = vmatprep.subr.mxu0 %v3763
    %v3765 = vand.u32 %v3068, 4294901760
    %v3766 = vsub.f32 %v3068, %v3765
    %3767 = vmatpush1.msra.mxu0 %v3766
    %v3768 = vand.u32 %v3071, 4294901760
    %v3769 = vsub.f32 %v3071, %v3768
    %3770 = vmatprep.subr.mxu0 %v3769
    %v3771 = vand.u32 %v3070, 4294901760
    %v3772 = vsub.f32 %v3070, %v3771
    %3773 = vmatpush1.msra.mxu0 %v3772
    %v3774 = vand.u32 %v3073, 4294901760
    %v3775 = vsub.f32 %v3073, %v3774
    %3776 = vmatprep.subr.mxu0 %v3775
    %v3777 = vand.u32 %v3072, 4294901760
    %v3778 = vsub.f32 %v3072, %v3777
    %3779 = vmatpush1.msra.mxu0 %v3778
    %v3780 = vand.u32 %v3075, 4294901760
    %v3781 = vsub.f32 %v3075, %v3780
    %3782 = vmatprep.subr.mxu0 %v3781
    %v3783 = vand.u32 %v3074, 4294901760
    %v3784 = vsub.f32 %v3074, %v3783
    %3785 = vmatpush1.msra.mxu0 %v3784
    %v3786 = vand.u32 %v3077, 4294901760
    %v3787 = vsub.f32 %v3077, %v3786
    %3788 = vmatprep.subr.mxu0 %v3787
    %v3789 = vand.u32 %v3076, 4294901760
    %v3790 = vsub.f32 %v3076, %v3789
    %3791 = vmatpush1.msra.mxu0 %v3790
    %v3792 = vand.u32 %v3079, 4294901760
    %v3793 = vsub.f32 %v3079, %v3792
    %3794 = vmatprep.subr.mxu0 %v3793
    %v3795 = vand.u32 %v3078, 4294901760
    %v3796 = vsub.f32 %v3078, %v3795
    %3797 = vmatpush1.msra.mxu0 %v3796
    %v3798 = vand.u32 %v3081, 4294901760
    %v3799 = vsub.f32 %v3081, %v3798
    %3800 = vmatprep.subr.mxu0 %v3799
    %v3801 = vand.u32 %v3080, 4294901760
    %v3802 = vsub.f32 %v3080, %v3801
    %3803 = vmatpush1.msra.mxu0 %v3802
    %v3804 = vand.u32 %v3083, 4294901760
    %v3805 = vsub.f32 %v3083, %v3804
    %3806 = vmatprep.subr.mxu0 %v3805
    %v3807 = vand.u32 %v3082, 4294901760
    %v3808 = vsub.f32 %v3082, %v3807
    %3809 = vmatpush1.msra.mxu0 %v3808
    %v3810 = vand.u32 %v3085, 4294901760
    %v3811 = vsub.f32 %v3085, %v3810
    %3812 = vmatprep.subr.mxu0 %v3811
    %v3813 = vand.u32 %v3084, 4294901760
    %v3814 = vsub.f32 %v3084, %v3813
    %3815 = vmatpush1.msra.mxu0 %v3814
    %v3816 = vand.u32 %v3020, 4294901760
    %v3817 = vsub.f32 %v3020, %v3816
    %3818 = vmatprep.mubr.f32.mxu0 %v3817
    %v3819 = vand.u32 %v2810, 4294901760
    %v3820 = vsub.f32 %v2810, %v3819
    %3821 = vmatmul.mubr.f32.gmra.mrb[0].mxu0 %v3820
    %v3822 = vpop.f32.mrb[0].mxu0
    %v3823 = vadd.f32 %v3620, %v3822
    %v3824 = vpop.f32.mrb[0].mxu0
    %v3825 = vadd.f32 %v3622, %v3824
    %3826 = vdwg.mxu0
    %v3827 = vand.u32 %v3023, 4294901760
    %3828 = vmatprep.subr.mxu0 %v3827
    %v3829 = vand.u32 %v3022, 4294901760
    %3830 = vmatpush1.msra.mxu0 %v3829
    %v3831 = vand.u32 %v3025, 4294901760
    %3832 = vmatprep.subr.mxu0 %v3831
    %v3833 = vand.u32 %v3024, 4294901760
    %3834 = vmatpush1.msra.mxu0 %v3833
    %v3835 = vand.u32 %v3027, 4294901760
    %3836 = vmatprep.subr.mxu0 %v3835
    %v3837 = vand.u32 %v3026, 4294901760
    %3838 = vmatpush1.msra.mxu0 %v3837
    %v3839 = vand.u32 %v3029, 4294901760
    %3840 = vmatprep.subr.mxu0 %v3839
    %v3841 = vand.u32 %v3028, 4294901760
    %3842 = vmatpush1.msra.mxu0 %v3841
    %v3843 = vand.u32 %v3031, 4294901760
    %3844 = vmatprep.subr.mxu0 %v3843
    %v3845 = vand.u32 %v3030, 4294901760
    %3846 = vmatpush1.msra.mxu0 %v3845
    %v3847 = vand.u32 %v3033, 4294901760
    %3848 = vmatprep.subr.mxu0 %v3847
    %v3849 = vand.u32 %v3032, 4294901760
    %3850 = vmatpush1.msra.mxu0 %v3849
    %v3851 = vand.u32 %v3035, 4294901760
    %3852 = vmatprep.subr.mxu0 %v3851
    %v3853 = vand.u32 %v3034, 4294901760
    %3854 = vmatpush1.msra.mxu0 %v3853
    %v3855 = vand.u32 %v3037, 4294901760
    %3856 = vmatprep.subr.mxu0 %v3855
    %v3857 = vand.u32 %v3036, 4294901760
    %3858 = vmatpush1.msra.mxu0 %v3857
    %v3859 = vand.u32 %v3039, 4294901760
    %3860 = vmatprep.subr.mxu0 %v3859
    %v3861 = vand.u32 %v3038, 4294901760
    %3862 = vmatpush1.msra.mxu0 %v3861
    %v3863 = vand.u32 %v3041, 4294901760
    %3864 = vmatprep.subr.mxu0 %v3863
    %v3865 = vand.u32 %v3040, 4294901760
    %3866 = vmatpush1.msra.mxu0 %v3865
    %v3867 = vand.u32 %v3043, 4294901760
    %3868 = vmatprep.subr.mxu0 %v3867
    %v3869 = vand.u32 %v3042, 4294901760
    %3870 = vmatpush1.msra.mxu0 %v3869
    %v3871 = vand.u32 %v3045, 4294901760
    %3872 = vmatprep.subr.mxu0 %v3871
    %v3873 = vand.u32 %v3044, 4294901760
    %3874 = vmatpush1.msra.mxu0 %v3873
    %v3875 = vand.u32 %v3047, 4294901760
    %3876 = vmatprep.subr.mxu0 %v3875
    %v3877 = vand.u32 %v3046, 4294901760
    %3878 = vmatpush1.msra.mxu0 %v3877
    %v3879 = vand.u32 %v3049, 4294901760
    %3880 = vmatprep.subr.mxu0 %v3879
    %v3881 = vand.u32 %v3048, 4294901760
    %3882 = vmatpush1.msra.mxu0 %v3881
    %v3883 = vand.u32 %v3051, 4294901760
    %3884 = vmatprep.subr.mxu0 %v3883
    %v3885 = vand.u32 %v3050, 4294901760
    %3886 = vmatpush1.msra.mxu0 %v3885
    %v3887 = vand.u32 %v3053, 4294901760
    %3888 = vmatprep.subr.mxu0 %v3887
    %v3889 = vand.u32 %v3052, 4294901760
    %3890 = vmatpush1.msra.mxu0 %v3889
    %v3891 = vand.u32 %v3055, 4294901760
    %3892 = vmatprep.subr.mxu0 %v3891
    %v3893 = vand.u32 %v3054, 4294901760
    %3894 = vmatpush1.msra.mxu0 %v3893
    %v3895 = vand.u32 %v3057, 4294901760
    %3896 = vmatprep.subr.mxu0 %v3895
    %v3897 = vand.u32 %v3056, 4294901760
    %3898 = vmatpush1.msra.mxu0 %v3897
    %v3899 = vand.u32 %v3059, 4294901760
    %3900 = vmatprep.subr.mxu0 %v3899
    %v3901 = vand.u32 %v3058, 4294901760
    %3902 = vmatpush1.msra.mxu0 %v3901
    %v3903 = vand.u32 %v3061, 4294901760
    %3904 = vmatprep.subr.mxu0 %v3903
    %v3905 = vand.u32 %v3060, 4294901760
    %3906 = vmatpush1.msra.mxu0 %v3905
    %v3907 = vand.u32 %v3063, 4294901760
    %3908 = vmatprep.subr.mxu0 %v3907
    %v3909 = vand.u32 %v3062, 4294901760
    %3910 = vmatpush1.msra.mxu0 %v3909
    %v3911 = vand.u32 %v3065, 4294901760
    %3912 = vmatprep.subr.mxu0 %v3911
    %v3913 = vand.u32 %v3064, 4294901760
    %3914 = vmatpush1.msra.mxu0 %v3913
    %v3915 = vand.u32 %v3067, 4294901760
    %3916 = vmatprep.subr.mxu0 %v3915
    %v3917 = vand.u32 %v3066, 4294901760
    %3918 = vmatpush1.msra.mxu0 %v3917
    %v3919 = vand.u32 %v3069, 4294901760
    %3920 = vmatprep.subr.mxu0 %v3919
    %v3921 = vand.u32 %v3068, 4294901760
    %3922 = vmatpush1.msra.mxu0 %v3921
    %v3923 = vand.u32 %v3071, 4294901760
    %3924 = vmatprep.subr.mxu0 %v3923
    %v3925 = vand.u32 %v3070, 4294901760
    %3926 = vmatpush1.msra.mxu0 %v3925
    %v3927 = vand.u32 %v3073, 4294901760
    %3928 = vmatprep.subr.mxu0 %v3927
    %v3929 = vand.u32 %v3072, 4294901760
    %3930 = vmatpush1.msra.mxu0 %v3929
    %v3931 = vand.u32 %v3075, 4294901760
    %3932 = vmatprep.subr.mxu0 %v3931
    %v3933 = vand.u32 %v3074, 4294901760
    %3934 = vmatpush1.msra.mxu0 %v3933
    %v3935 = vand.u32 %v3077, 4294901760
    %3936 = vmatprep.subr.mxu0 %v3935
    %v3937 = vand.u32 %v3076, 4294901760
    %3938 = vmatpush1.msra.mxu0 %v3937
    %v3939 = vand.u32 %v3079, 4294901760
    %3940 = vmatprep.subr.mxu0 %v3939
    %v3941 = vand.u32 %v3078, 4294901760
    %3942 = vmatpush1.msra.mxu0 %v3941
    %v3943 = vand.u32 %v3081, 4294901760
    %3944 = vmatprep.subr.mxu0 %v3943
    %v3945 = vand.u32 %v3080, 4294901760
    %3946 = vmatpush1.msra.mxu0 %v3945
    %v3947 = vand.u32 %v3083, 4294901760
    %3948 = vmatprep.subr.mxu0 %v3947
    %v3949 = vand.u32 %v3082, 4294901760
    %3950 = vmatpush1.msra.mxu0 %v3949
    %v3951 = vand.u32 %v3085, 4294901760
    %3952 = vmatprep.subr.mxu0 %v3951
    %v3953 = vand.u32 %v3084, 4294901760
    %3954 = vmatpush1.msra.mxu0 %v3953
    %v3955 = vand.u32 %v3020, 4294901760
    %v3956 = vsub.f32 %v3020, %v3955
    %v3957 = vand.u32 %v3956, 4294901760
    %3958 = vmatprep.mubr.f32.mxu0 %v3957
    %v3959 = vand.u32 %v2810, 4294901760
    %v3960 = vsub.f32 %v2810, %v3959
    %v3961 = vand.u32 %v3960, 4294901760
    %3962 = vmatmul.mubr.f32.gmra.mrb[0].mxu0 %v3961
    %v3963 = vpop.f32.mrb[0].mxu0
    %v3964 = vadd.f32 %v3823, %v3963
    %v3965 = vpop.f32.mrb[0].mxu0
    %v3966 = vadd.f32 %v3825, %v3965
    %3967 = vdwg.mxu0
    %v3968 = vand.u32 %v3023, 4294901760
    %v3969 = vsub.f32 %v3023, %v3968
    %v3970 = vand.u32 %v3969, 4294901760
    %3971 = vmatprep.subr.mxu0 %v3970
    %v3972 = vand.u32 %v3022, 4294901760
    %v3973 = vsub.f32 %v3022, %v3972
    %v3974 = vand.u32 %v3973, 4294901760
    %3975 = vmatpush1.msra.mxu0 %v3974
    %v3976 = vand.u32 %v3025, 4294901760
    %v3977 = vsub.f32 %v3025, %v3976
    %v3978 = vand.u32 %v3977, 4294901760
    %3979 = vmatprep.subr.mxu0 %v3978
    %v3980 = vand.u32 %v3024, 4294901760
    %v3981 = vsub.f32 %v3024, %v3980
    %v3982 = vand.u32 %v3981, 4294901760
    %3983 = vmatpush1.msra.mxu0 %v3982
    %v3984 = vand.u32 %v3027, 4294901760
    %v3985 = vsub.f32 %v3027, %v3984
    %v3986 = vand.u32 %v3985, 4294901760
    %3987 = vmatprep.subr.mxu0 %v3986
    %v3988 = vand.u32 %v3026, 4294901760
    %v3989 = vsub.f32 %v3026, %v3988
    %v3990 = vand.u32 %v3989, 4294901760
    %3991 = vmatpush1.msra.mxu0 %v3990
    %v3992 = vand.u32 %v3029, 4294901760
    %v3993 = vsub.f32 %v3029, %v3992
    %v3994 = vand.u32 %v3993, 4294901760
    %3995 = vmatprep.subr.mxu0 %v3994
    %v3996 = vand.u32 %v3028, 4294901760
    %v3997 = vsub.f32 %v3028, %v3996
    %v3998 = vand.u32 %v3997, 4294901760
    %3999 = vmatpush1.msra.mxu0 %v3998
    %v4000 = vand.u32 %v3031, 4294901760
    %v4001 = vsub.f32 %v3031, %v4000
    %v4002 = vand.u32 %v4001, 4294901760
    %4003 = vmatprep.subr.mxu0 %v4002
    %v4004 = vand.u32 %v3030, 4294901760
    %v4005 = vsub.f32 %v3030, %v4004
    %v4006 = vand.u32 %v4005, 4294901760
    %4007 = vmatpush1.msra.mxu0 %v4006
    %v4008 = vand.u32 %v3033, 4294901760
    %v4009 = vsub.f32 %v3033, %v4008
    %v4010 = vand.u32 %v4009, 4294901760
    %4011 = vmatprep.subr.mxu0 %v4010
    %v4012 = vand.u32 %v3032, 4294901760
    %v4013 = vsub.f32 %v3032, %v4012
    %v4014 = vand.u32 %v4013, 4294901760
    %4015 = vmatpush1.msra.mxu0 %v4014
    %v4016 = vand.u32 %v3035, 4294901760
    %v4017 = vsub.f32 %v3035, %v4016
    %v4018 = vand.u32 %v4017, 4294901760
    %4019 = vmatprep.subr.mxu0 %v4018
    %v4020 = vand.u32 %v3034, 4294901760
    %v4021 = vsub.f32 %v3034, %v4020
    %v4022 = vand.u32 %v4021, 4294901760
    %4023 = vmatpush1.msra.mxu0 %v4022
    %v4024 = vand.u32 %v3037, 4294901760
    %v4025 = vsub.f32 %v3037, %v4024
    %v4026 = vand.u32 %v4025, 4294901760
    %4027 = vmatprep.subr.mxu0 %v4026
    %v4028 = vand.u32 %v3036, 4294901760
    %v4029 = vsub.f32 %v3036, %v4028
    %v4030 = vand.u32 %v4029, 4294901760
    %4031 = vmatpush1.msra.mxu0 %v4030
    %v4032 = vand.u32 %v3039, 4294901760
    %v4033 = vsub.f32 %v3039, %v4032
    %v4034 = vand.u32 %v4033, 4294901760
    %4035 = vmatprep.subr.mxu0 %v4034
    %v4036 = vand.u32 %v3038, 4294901760
    %v4037 = vsub.f32 %v3038, %v4036
    %v4038 = vand.u32 %v4037, 4294901760
    %4039 = vmatpush1.msra.mxu0 %v4038
    %v4040 = vand.u32 %v3041, 4294901760
    %v4041 = vsub.f32 %v3041, %v4040
    %v4042 = vand.u32 %v4041, 4294901760
    %4043 = vmatprep.subr.mxu0 %v4042
    %v4044 = vand.u32 %v3040, 4294901760
    %v4045 = vsub.f32 %v3040, %v4044
    %v4046 = vand.u32 %v4045, 4294901760
    %4047 = vmatpush1.msra.mxu0 %v4046
    %v4048 = vand.u32 %v3043, 4294901760
    %v4049 = vsub.f32 %v3043, %v4048
    %v4050 = vand.u32 %v4049, 4294901760
    %4051 = vmatprep.subr.mxu0 %v4050
    %v4052 = vand.u32 %v3042, 4294901760
    %v4053 = vsub.f32 %v3042, %v4052
    %v4054 = vand.u32 %v4053, 4294901760
    %4055 = vmatpush1.msra.mxu0 %v4054
    %v4056 = vand.u32 %v3045, 4294901760
    %v4057 = vsub.f32 %v3045, %v4056
    %v4058 = vand.u32 %v4057, 4294901760
    %4059 = vmatprep.subr.mxu0 %v4058
    %v4060 = vand.u32 %v3044, 4294901760
    %v4061 = vsub.f32 %v3044, %v4060
    %v4062 = vand.u32 %v4061, 4294901760
    %4063 = vmatpush1.msra.mxu0 %v4062
    %v4064 = vand.u32 %v3047, 4294901760
    %v4065 = vsub.f32 %v3047, %v4064
    %v4066 = vand.u32 %v4065, 4294901760
    %4067 = vmatprep.subr.mxu0 %v4066
    %v4068 = vand.u32 %v3046, 4294901760
    %v4069 = vsub.f32 %v3046, %v4068
    %v4070 = vand.u32 %v4069, 4294901760
    %4071 = vmatpush1.msra.mxu0 %v4070
    %v4072 = vand.u32 %v3049, 4294901760
    %v4073 = vsub.f32 %v3049, %v4072
    %v4074 = vand.u32 %v4073, 4294901760
    %4075 = vmatprep.subr.mxu0 %v4074
    %v4076 = vand.u32 %v3048, 4294901760
    %v4077 = vsub.f32 %v3048, %v4076
    %v4078 = vand.u32 %v4077, 4294901760
    %4079 = vmatpush1.msra.mxu0 %v4078
    %v4080 = vand.u32 %v3051, 4294901760
    %v4081 = vsub.f32 %v3051, %v4080
    %v4082 = vand.u32 %v4081, 4294901760
    %4083 = vmatprep.subr.mxu0 %v4082
    %v4084 = vand.u32 %v3050, 4294901760
    %v4085 = vsub.f32 %v3050, %v4084
    %v4086 = vand.u32 %v4085, 4294901760
    %4087 = vmatpush1.msra.mxu0 %v4086
    %v4088 = vand.u32 %v3053, 4294901760
    %v4089 = vsub.f32 %v3053, %v4088
    %v4090 = vand.u32 %v4089, 4294901760
    %4091 = vmatprep.subr.mxu0 %v4090
    %v4092 = vand.u32 %v3052, 4294901760
    %v4093 = vsub.f32 %v3052, %v4092
    %v4094 = vand.u32 %v4093, 4294901760
    %4095 = vmatpush1.msra.mxu0 %v4094
    %v4096 = vand.u32 %v3055, 4294901760
    %v4097 = vsub.f32 %v3055, %v4096
    %v4098 = vand.u32 %v4097, 4294901760
    %4099 = vmatprep.subr.mxu0 %v4098
    %v4100 = vand.u32 %v3054, 4294901760
    %v4101 = vsub.f32 %v3054, %v4100
    %v4102 = vand.u32 %v4101, 4294901760
    %4103 = vmatpush1.msra.mxu0 %v4102
    %v4104 = vand.u32 %v3057, 4294901760
    %v4105 = vsub.f32 %v3057, %v4104
    %v4106 = vand.u32 %v4105, 4294901760
    %4107 = vmatprep.subr.mxu0 %v4106
    %v4108 = vand.u32 %v3056, 4294901760
    %v4109 = vsub.f32 %v3056, %v4108
    %v4110 = vand.u32 %v4109, 4294901760
    %4111 = vmatpush1.msra.mxu0 %v4110
    %v4112 = vand.u32 %v3059, 4294901760
    %v4113 = vsub.f32 %v3059, %v4112
    %v4114 = vand.u32 %v4113, 4294901760
    %4115 = vmatprep.subr.mxu0 %v4114
    %v4116 = vand.u32 %v3058, 4294901760
    %v4117 = vsub.f32 %v3058, %v4116
    %v4118 = vand.u32 %v4117, 4294901760
    %4119 = vmatpush1.msra.mxu0 %v4118
    %v4120 = vand.u32 %v3061, 4294901760
    %v4121 = vsub.f32 %v3061, %v4120
    %v4122 = vand.u32 %v4121, 4294901760
    %4123 = vmatprep.subr.mxu0 %v4122
    %v4124 = vand.u32 %v3060, 4294901760
    %v4125 = vsub.f32 %v3060, %v4124
    %v4126 = vand.u32 %v4125, 4294901760
    %4127 = vmatpush1.msra.mxu0 %v4126
    %v4128 = vand.u32 %v3063, 4294901760
    %v4129 = vsub.f32 %v3063, %v4128
    %v4130 = vand.u32 %v4129, 4294901760
    %4131 = vmatprep.subr.mxu0 %v4130
    %v4132 = vand.u32 %v3062, 4294901760
    %v4133 = vsub.f32 %v3062, %v4132
    %v4134 = vand.u32 %v4133, 4294901760
    %4135 = vmatpush1.msra.mxu0 %v4134
    %v4136 = vand.u32 %v3065, 4294901760
    %v4137 = vsub.f32 %v3065, %v4136
    %v4138 = vand.u32 %v4137, 4294901760
    %4139 = vmatprep.subr.mxu0 %v4138
    %v4140 = vand.u32 %v3064, 4294901760
    %v4141 = vsub.f32 %v3064, %v4140
    %v4142 = vand.u32 %v4141, 4294901760
    %4143 = vmatpush1.msra.mxu0 %v4142
    %v4144 = vand.u32 %v3067, 4294901760
    %v4145 = vsub.f32 %v3067, %v4144
    %v4146 = vand.u32 %v4145, 4294901760
    %4147 = vmatprep.subr.mxu0 %v4146
    %v4148 = vand.u32 %v3066, 4294901760
    %v4149 = vsub.f32 %v3066, %v4148
    %v4150 = vand.u32 %v4149, 4294901760
    %4151 = vmatpush1.msra.mxu0 %v4150
    %v4152 = vand.u32 %v3069, 4294901760
    %v4153 = vsub.f32 %v3069, %v4152
    %v4154 = vand.u32 %v4153, 4294901760
    %4155 = vmatprep.subr.mxu0 %v4154
    %v4156 = vand.u32 %v3068, 4294901760
    %v4157 = vsub.f32 %v3068, %v4156
    %v4158 = vand.u32 %v4157, 4294901760
    %4159 = vmatpush1.msra.mxu0 %v4158
    %v4160 = vand.u32 %v3071, 4294901760
    %v4161 = vsub.f32 %v3071, %v4160
    %v4162 = vand.u32 %v4161, 4294901760
    %4163 = vmatprep.subr.mxu0 %v4162
    %v4164 = vand.u32 %v3070, 4294901760
    %v4165 = vsub.f32 %v3070, %v4164
    %v4166 = vand.u32 %v4165, 4294901760
    %4167 = vmatpush1.msra.mxu0 %v4166
    %v4168 = vand.u32 %v3073, 4294901760
    %v4169 = vsub.f32 %v3073, %v4168
    %v4170 = vand.u32 %v4169, 4294901760
    %4171 = vmatprep.subr.mxu0 %v4170
    %v4172 = vand.u32 %v3072, 4294901760
    %v4173 = vsub.f32 %v3072, %v4172
    %v4174 = vand.u32 %v4173, 4294901760
    %4175 = vmatpush1.msra.mxu0 %v4174
    %v4176 = vand.u32 %v3075, 4294901760
    %v4177 = vsub.f32 %v3075, %v4176
    %v4178 = vand.u32 %v4177, 4294901760
    %4179 = vmatprep.subr.mxu0 %v4178
    %v4180 = vand.u32 %v3074, 4294901760
    %v4181 = vsub.f32 %v3074, %v4180
    %v4182 = vand.u32 %v4181, 4294901760
    %4183 = vmatpush1.msra.mxu0 %v4182
    %v4184 = vand.u32 %v3077, 4294901760
    %v4185 = vsub.f32 %v3077, %v4184
    %v4186 = vand.u32 %v4185, 4294901760
    %4187 = vmatprep.subr.mxu0 %v4186
    %v4188 = vand.u32 %v3076, 4294901760
    %v4189 = vsub.f32 %v3076, %v4188
    %v4190 = vand.u32 %v4189, 4294901760
    %4191 = vmatpush1.msra.mxu0 %v4190
    %v4192 = vand.u32 %v3079, 4294901760
    %v4193 = vsub.f32 %v3079, %v4192
    %v4194 = vand.u32 %v4193, 4294901760
    %4195 = vmatprep.subr.mxu0 %v4194
    %v4196 = vand.u32 %v3078, 4294901760
    %v4197 = vsub.f32 %v3078, %v4196
    %v4198 = vand.u32 %v4197, 4294901760
    %4199 = vmatpush1.msra.mxu0 %v4198
    %v4200 = vand.u32 %v3081, 4294901760
    %v4201 = vsub.f32 %v3081, %v4200
    %v4202 = vand.u32 %v4201, 4294901760
    %4203 = vmatprep.subr.mxu0 %v4202
    %v4204 = vand.u32 %v3080, 4294901760
    %v4205 = vsub.f32 %v3080, %v4204
    %v4206 = vand.u32 %v4205, 4294901760
    %4207 = vmatpush1.msra.mxu0 %v4206
    %v4208 = vand.u32 %v3083, 4294901760
    %v4209 = vsub.f32 %v3083, %v4208
    %v4210 = vand.u32 %v4209, 4294901760
    %4211 = vmatprep.subr.mxu0 %v4210
    %v4212 = vand.u32 %v3082, 4294901760
    %v4213 = vsub.f32 %v3082, %v4212
    %v4214 = vand.u32 %v4213, 4294901760
    %4215 = vmatpush1.msra.mxu0 %v4214
    %v4216 = vand.u32 %v3085, 4294901760
    %v4217 = vsub.f32 %v3085, %v4216
    %v4218 = vand.u32 %v4217, 4294901760
    %4219 = vmatprep.subr.mxu0 %v4218
    %v4220 = vand.u32 %v3084, 4294901760
    %v4221 = vsub.f32 %v3084, %v4220
    %v4222 = vand.u32 %v4221, 4294901760
    %4223 = vmatpush1.msra.mxu0 %v4222
    %v4224 = vand.u32 %v3020, 4294901760
    %4225 = vmatprep.mubr.f32.mxu0 %v4224
    %v4226 = vand.u32 %v2810, 4294901760
    %4227 = vmatmul.mubr.f32.gmra.mrb[0].mxu0 %v4226
    %v4228 = vpop.f32.mrb[0].mxu0
    %v4229 = vadd.f32 %v3964, %v4228
    %v4230 = vpop.f32.mrb[0].mxu0
    %v4231 = vadd.f32 %v3966, %v4230
    %4232 = vdwg.mxu0
    %v4233 = vand.u32 %v3023, 4294901760
    %4234 = vmatprep.subr.mxu0 %v4233
    %v4235 = vand.u32 %v3022, 4294901760
    %4236 = vmatpush1.msra.mxu0 %v4235
    %v4237 = vand.u32 %v3025, 4294901760
    %4238 = vmatprep.subr.mxu0 %v4237
    %v4239 = vand.u32 %v3024, 4294901760
    %4240 = vmatpush1.msra.mxu0 %v4239
    %v4241 = vand.u32 %v3027, 4294901760
    %4242 = vmatprep.subr.mxu0 %v4241
    %v4243 = vand.u32 %v3026, 4294901760
    %4244 = vmatpush1.msra.mxu0 %v4243
    %v4245 = vand.u32 %v3029, 4294901760
    %4246 = vmatprep.subr.mxu0 %v4245
    %v4247 = vand.u32 %v3028, 4294901760
    %4248 = vmatpush1.msra.mxu0 %v4247
    %v4249 = vand.u32 %v3031, 4294901760
    %4250 = vmatprep.subr.mxu0 %v4249
    %v4251 = vand.u32 %v3030, 4294901760
    %4252 = vmatpush1.msra.mxu0 %v4251
    %v4253 = vand.u32 %v3033, 4294901760
    %4254 = vmatprep.subr.mxu0 %v4253
    %v4255 = vand.u32 %v3032, 4294901760
    %4256 = vmatpush1.msra.mxu0 %v4255
    %v4257 = vand.u32 %v3035, 4294901760
    %4258 = vmatprep.subr.mxu0 %v4257
    %v4259 = vand.u32 %v3034, 4294901760
    %4260 = vmatpush1.msra.mxu0 %v4259
    %v4261 = vand.u32 %v3037, 4294901760
    %4262 = vmatprep.subr.mxu0 %v4261
    %v4263 = vand.u32 %v3036, 4294901760
    %4264 = vmatpush1.msra.mxu0 %v4263
    %v4265 = vand.u32 %v3039, 4294901760
    %4266 = vmatprep.subr.mxu0 %v4265
    %v4267 = vand.u32 %v3038, 4294901760
    %4268 = vmatpush1.msra.mxu0 %v4267
    %v4269 = vand.u32 %v3041, 4294901760
    %4270 = vmatprep.subr.mxu0 %v4269
    %v4271 = vand.u32 %v3040, 4294901760
    %4272 = vmatpush1.msra.mxu0 %v4271
    %v4273 = vand.u32 %v3043, 4294901760
    %4274 = vmatprep.subr.mxu0 %v4273
    %v4275 = vand.u32 %v3042, 4294901760
    %4276 = vmatpush1.msra.mxu0 %v4275
    %v4277 = vand.u32 %v3045, 4294901760
    %4278 = vmatprep.subr.mxu0 %v4277
    %v4279 = vand.u32 %v3044, 4294901760
    %4280 = vmatpush1.msra.mxu0 %v4279
    %v4281 = vand.u32 %v3047, 4294901760
    %4282 = vmatprep.subr.mxu0 %v4281
    %v4283 = vand.u32 %v3046, 4294901760
    %4284 = vmatpush1.msra.mxu0 %v4283
    %v4285 = vand.u32 %v3049, 4294901760
    %4286 = vmatprep.subr.mxu0 %v4285
    %v4287 = vand.u32 %v3048, 4294901760
    %4288 = vmatpush1.msra.mxu0 %v4287
    %v4289 = vand.u32 %v3051, 4294901760
    %4290 = vmatprep.subr.mxu0 %v4289
    %v4291 = vand.u32 %v3050, 4294901760
    %4292 = vmatpush1.msra.mxu0 %v4291
    %v4293 = vand.u32 %v3053, 4294901760
    %4294 = vmatprep.subr.mxu0 %v4293
    %v4295 = vand.u32 %v3052, 4294901760
    %4296 = vmatpush1.msra.mxu0 %v4295
    %v4297 = vand.u32 %v3055, 4294901760
    %4298 = vmatprep.subr.mxu0 %v4297
    %v4299 = vand.u32 %v3054, 4294901760
    %4300 = vmatpush1.msra.mxu0 %v4299
    %v4301 = vand.u32 %v3057, 4294901760
    %4302 = vmatprep.subr.mxu0 %v4301
    %v4303 = vand.u32 %v3056, 4294901760
    %4304 = vmatpush1.msra.mxu0 %v4303
    %v4305 = vand.u32 %v3059, 4294901760
    %4306 = vmatprep.subr.mxu0 %v4305
    %v4307 = vand.u32 %v3058, 4294901760
    %4308 = vmatpush1.msra.mxu0 %v4307
    %v4309 = vand.u32 %v3061, 4294901760
    %4310 = vmatprep.subr.mxu0 %v4309
    %v4311 = vand.u32 %v3060, 4294901760
    %4312 = vmatpush1.msra.mxu0 %v4311
    %v4313 = vand.u32 %v3063, 4294901760
    %4314 = vmatprep.subr.mxu0 %v4313
    %v4315 = vand.u32 %v3062, 4294901760
    %4316 = vmatpush1.msra.mxu0 %v4315
    %v4317 = vand.u32 %v3065, 4294901760
    %4318 = vmatprep.subr.mxu0 %v4317
    %v4319 = vand.u32 %v3064, 4294901760
    %4320 = vmatpush1.msra.mxu0 %v4319
    %v4321 = vand.u32 %v3067, 4294901760
    %4322 = vmatprep.subr.mxu0 %v4321
    %v4323 = vand.u32 %v3066, 4294901760
    %4324 = vmatpush1.msra.mxu0 %v4323
    %v4325 = vand.u32 %v3069, 4294901760
    %4326 = vmatprep.subr.mxu0 %v4325
    %v4327 = vand.u32 %v3068, 4294901760
    %4328 = vmatpush1.msra.mxu0 %v4327
    %v4329 = vand.u32 %v3071, 4294901760
    %4330 = vmatprep.subr.mxu0 %v4329
    %v4331 = vand.u32 %v3070, 4294901760
    %4332 = vmatpush1.msra.mxu0 %v4331
    %v4333 = vand.u32 %v3073, 4294901760
    %4334 = vmatprep.subr.mxu0 %v4333
    %v4335 = vand.u32 %v3072, 4294901760
    %4336 = vmatpush1.msra.mxu0 %v4335
    %v4337 = vand.u32 %v3075, 4294901760
    %4338 = vmatprep.subr.mxu0 %v4337
    %v4339 = vand.u32 %v3074, 4294901760
    %4340 = vmatpush1.msra.mxu0 %v4339
    %v4341 = vand.u32 %v3077, 4294901760
    %4342 = vmatprep.subr.mxu0 %v4341
    %v4343 = vand.u32 %v3076, 4294901760
    %4344 = vmatpush1.msra.mxu0 %v4343
    %v4345 = vand.u32 %v3079, 4294901760
    %4346 = vmatprep.subr.mxu0 %v4345
    %v4347 = vand.u32 %v3078, 4294901760
    %4348 = vmatpush1.msra.mxu0 %v4347
    %v4349 = vand.u32 %v3081, 4294901760
    %4350 = vmatprep.subr.mxu0 %v4349
    %v4351 = vand.u32 %v3080, 4294901760
    %4352 = vmatpush1.msra.mxu0 %v4351
    %v4353 = vand.u32 %v3083, 4294901760
    %4354 = vmatprep.subr.mxu0 %v4353
    %v4355 = vand.u32 %v3082, 4294901760
    %4356 = vmatpush1.msra.mxu0 %v4355
    %v4357 = vand.u32 %v3085, 4294901760
    %4358 = vmatprep.subr.mxu0 %v4357
    %v4359 = vand.u32 %v3084, 4294901760
    %4360 = vmatpush1.msra.mxu0 %v4359
    %v4361 = vand.u32 %v3020, 4294901760
    %4362 = vmatprep.mubr.f32.mxu0 %v4361
    %v4363 = vand.u32 %v2810, 4294901760
    %4364 = vmatmul.mubr.f32.gmra.mrb[0].mxu0 %v4363
    %v4365 = vpop.f32.mrb[0].mxu0
    %v4366 = vadd.f32 %v4229, %v4365
    %v4367 = vpop.f32.mrb[0].mxu0
    %v4368 = vadd.f32 %v4231, %v4367
    %4369 = vdwg.mxu0
    %v4370 = vmul.f32 %v4366, 0.0078125
    %v4371 = vmul.f32 %v4368, 0.0078125
    %v4372 = vmul.f32 %v4370, %v4370
    %v4373 = vmul.f32 %v4371, %v4371
    %v4374 = vadd.f32 %v4372, %v4373
    %v4375 = vrsqrt.pop %v4374
    %v4376 = vmul.f32 %v4374, %v4375
    %vm4377 = vcmp.eq.f32.partialorder %v4374, inf
    %v4378 = vsel %vm4377, %v4374, %v4376
    %vm4379 = vcmp.eq.f32.partialorder %v4374, 0.0
    %v4380 = vand.u32 %v4374, 2147483648
    %v4381 = vsel %vm4379, %v4380, %v4378
    %4382 = vst [vmem:[#allocation7] sm:$0xff] %v4381
    %v4383 = vand.u32 %v3023, 4294901760
    %4384 = vmatprep.subr.mxu0 %v4383
    %v4385 = vand.u32 %v3022, 4294901760
    %4386 = vmatpush1.msra.mxu0 %v4385
    %v4387 = vand.u32 %v3025, 4294901760
    %4388 = vmatprep.subr.mxu0 %v4387
    %v4389 = vand.u32 %v3024, 4294901760
    %4390 = vmatpush1.msra.mxu0 %v4389
    %v4391 = vand.u32 %v3027, 4294901760
    %4392 = vmatprep.subr.mxu0 %v4391
    %v4393 = vand.u32 %v3026, 4294901760
    %4394 = vmatpush1.msra.mxu0 %v4393
    %v4395 = vand.u32 %v3029, 4294901760
    %4396 = vmatprep.subr.mxu0 %v4395
    %v4397 = vand.u32 %v3028, 4294901760
    %4398 = vmatpush1.msra.mxu0 %v4397
    %v4399 = vand.u32 %v3031, 4294901760
    %4400 = vmatprep.subr.mxu0 %v4399
    %v4401 = vand.u32 %v3030, 4294901760
    %4402 = vmatpush1.msra.mxu0 %v4401
    %v4403 = vand.u32 %v3033, 4294901760
    %4404 = vmatprep.subr.mxu0 %v4403
    %v4405 = vand.u32 %v3032, 4294901760
    %4406 = vmatpush1.msra.mxu0 %v4405
    %v4407 = vand.u32 %v3035, 4294901760
    %4408 = vmatprep.subr.mxu0 %v4407
    %v4409 = vand.u32 %v3034, 4294901760
    %4410 = vmatpush1.msra.mxu0 %v4409
    %v4411 = vand.u32 %v3037, 4294901760
    %4412 = vmatprep.subr.mxu0 %v4411
    %v4413 = vand.u32 %v3036, 4294901760
    %4414 = vmatpush1.msra.mxu0 %v4413
    %v4415 = vand.u32 %v3039, 4294901760
    %4416 = vmatprep.subr.mxu0 %v4415
    %v4417 = vand.u32 %v3038, 4294901760
    %4418 = vmatpush1.msra.mxu0 %v4417
    %v4419 = vand.u32 %v3041, 4294901760
    %4420 = vmatprep.subr.mxu0 %v4419
    %v4421 = vand.u32 %v3040, 4294901760
    %4422 = vmatpush1.msra.mxu0 %v4421
    %v4423 = vand.u32 %v3043, 4294901760
    %4424 = vmatprep.subr.mxu0 %v4423
    %v4425 = vand.u32 %v3042, 4294901760
    %4426 = vmatpush1.msra.mxu0 %v4425
    %v4427 = vand.u32 %v3045, 4294901760
    %4428 = vmatprep.subr.mxu0 %v4427
    %v4429 = vand.u32 %v3044, 4294901760
    %4430 = vmatpush1.msra.mxu0 %v4429
    %v4431 = vand.u32 %v3047, 4294901760
    %4432 = vmatprep.subr.mxu0 %v4431
    %v4433 = vand.u32 %v3046, 4294901760
    %4434 = vmatpush1.msra.mxu0 %v4433
    %v4435 = vand.u32 %v3049, 4294901760
    %4436 = vmatprep.subr.mxu0 %v4435
    %v4437 = vand.u32 %v3048, 4294901760
    %4438 = vmatpush1.msra.mxu0 %v4437
    %v4439 = vand.u32 %v3051, 4294901760
    %4440 = vmatprep.subr.mxu0 %v4439
    %v4441 = vand.u32 %v3050, 4294901760
    %4442 = vmatpush1.msra.mxu0 %v4441
    %v4443 = vand.u32 %v3053, 4294901760
    %4444 = vmatprep.subr.mxu0 %v4443
    %v4445 = vand.u32 %v3052, 4294901760
    %4446 = vmatpush1.msra.mxu0 %v4445
    %v4447 = vand.u32 %v3055, 4294901760
    %4448 = vmatprep.subr.mxu0 %v4447
    %v4449 = vand.u32 %v3054, 4294901760
    %4450 = vmatpush1.msra.mxu0 %v4449
    %v4451 = vand.u32 %v3057, 4294901760
    %4452 = vmatprep.subr.mxu0 %v4451
    %v4453 = vand.u32 %v3056, 4294901760
    %4454 = vmatpush1.msra.mxu0 %v4453
    %v4455 = vand.u32 %v3059, 4294901760
    %4456 = vmatprep.subr.mxu0 %v4455
    %v4457 = vand.u32 %v3058, 4294901760
    %4458 = vmatpush1.msra.mxu0 %v4457
    %v4459 = vand.u32 %v3061, 4294901760
    %4460 = vmatprep.subr.mxu0 %v4459
    %v4461 = vand.u32 %v3060, 4294901760
    %4462 = vmatpush1.msra.mxu0 %v4461
    %v4463 = vand.u32 %v3063, 4294901760
    %4464 = vmatprep.subr.mxu0 %v4463
    %v4465 = vand.u32 %v3062, 4294901760
    %4466 = vmatpush1.msra.mxu0 %v4465
    %v4467 = vand.u32 %v3065, 4294901760
    %4468 = vmatprep.subr.mxu0 %v4467
    %v4469 = vand.u32 %v3064, 4294901760
    %4470 = vmatpush1.msra.mxu0 %v4469
    %v4471 = vand.u32 %v3067, 4294901760
    %4472 = vmatprep.subr.mxu0 %v4471
    %v4473 = vand.u32 %v3066, 4294901760
    %4474 = vmatpush1.msra.mxu0 %v4473
    %v4475 = vand.u32 %v3069, 4294901760
    %4476 = vmatprep.subr.mxu0 %v4475
    %v4477 = vand.u32 %v3068, 4294901760
    %4478 = vmatpush1.msra.mxu0 %v4477
    %v4479 = vand.u32 %v3071, 4294901760
    %4480 = vmatprep.subr.mxu0 %v4479
    %v4481 = vand.u32 %v3070, 4294901760
    %4482 = vmatpush1.msra.mxu0 %v4481
    %v4483 = vand.u32 %v3073, 4294901760
    %4484 = vmatprep.subr.mxu0 %v4483
    %v4485 = vand.u32 %v3072, 4294901760
    %4486 = vmatpush1.msra.mxu0 %v4485
    %v4487 = vand.u32 %v3075, 4294901760
    %4488 = vmatprep.subr.mxu0 %v4487
    %v4489 = vand.u32 %v3074, 4294901760
    %4490 = vmatpush1.msra.mxu0 %v4489
    %v4491 = vand.u32 %v3077, 4294901760
    %4492 = vmatprep.subr.mxu0 %v4491
    %v4493 = vand.u32 %v3076, 4294901760
    %4494 = vmatpush1.msra.mxu0 %v4493
    %v4495 = vand.u32 %v3079, 4294901760
    %4496 = vmatprep.subr.mxu0 %v4495
    %v4497 = vand.u32 %v3078, 4294901760
    %4498 = vmatpush1.msra.mxu0 %v4497
    %v4499 = vand.u32 %v3081, 4294901760
    %4500 = vmatprep.subr.mxu0 %v4499
    %v4501 = vand.u32 %v3080, 4294901760
    %4502 = vmatpush1.msra.mxu0 %v4501
    %v4503 = vand.u32 %v3083, 4294901760
    %4504 = vmatprep.subr.mxu0 %v4503
    %v4505 = vand.u32 %v3082, 4294901760
    %4506 = vmatpush1.msra.mxu0 %v4505
    %v4507 = vand.u32 %v3085, 4294901760
    %4508 = vmatprep.subr.mxu0 %v4507
    %v4509 = vand.u32 %v3084, 4294901760
    %4510 = vmatpush1.msra.mxu0 %v4509
    %v4511 = vand.u32 %v3021, 4294901760
    %v4512 = vsub.f32 %v3021, %v4511
    %v4513 = vand.u32 %v4512, 4294901760
    %v4514 = vsub.f32 %v4512, %v4513
    %v4515 = vand.u32 %v4514, 4294901760
    %4516 = vmatprep.mubr.f32.mxu0 %v4515
    %v4517 = vand.u32 %v2811, 4294901760
    %v4518 = vsub.f32 %v2811, %v4517
    %v4519 = vand.u32 %v4518, 4294901760
    %v4520 = vsub.f32 %v4518, %v4519
    %v4521 = vand.u32 %v4520, 4294901760
    %4522 = vmatmul.mubr.f32.gmra.mrb[0].mxu0 %v4521
    %v4523 = vpop.f32.mrb[0].mxu0
    %v4524 = vadd.f32 0.0, %v4523
    %v4525 = vpop.f32.mrb[0].mxu0
    %v4526 = vadd.f32 0.0, %v4525
    %4527 = vdwg.mxu0
    %v4528 = vand.u32 %v3023, 4294901760
    %v4529 = vsub.f32 %v3023, %v4528
    %v4530 = vand.u32 %v4529, 4294901760
    %v4531 = vsub.f32 %v4529, %v4530
    %v4532 = vand.u32 %v4531, 4294901760
    %4533 = vmatprep.subr.mxu0 %v4532
    %v4534 = vand.u32 %v3022, 4294901760
    %v4535 = vsub.f32 %v3022, %v4534
    %v4536 = vand.u32 %v4535, 4294901760
    %v4537 = vsub.f32 %v4535, %v4536
    %v4538 = vand.u32 %v4537, 4294901760
    %4539 = vmatpush1.msra.mxu0 %v4538
    %v4540 = vand.u32 %v3025, 4294901760
    %v4541 = vsub.f32 %v3025, %v4540
    %v4542 = vand.u32 %v4541, 4294901760
    %v4543 = vsub.f32 %v4541, %v4542
    %v4544 = vand.u32 %v4543, 4294901760
    %4545 = vmatprep.subr.mxu0 %v4544
    %v4546 = vand.u32 %v3024, 4294901760
    %v4547 = vsub.f32 %v3024, %v4546
    %v4548 = vand.u32 %v4547, 4294901760
    %v4549 = vsub.f32 %v4547, %v4548
    %v4550 = vand.u32 %v4549, 4294901760
    %4551 = vmatpush1.msra.mxu0 %v4550
    %v4552 = vand.u32 %v3027, 4294901760
    %v4553 = vsub.f32 %v3027, %v4552
    %v4554 = vand.u32 %v4553, 4294901760
    %v4555 = vsub.f32 %v4553, %v4554
    %v4556 = vand.u32 %v4555, 4294901760
    %4557 = vmatprep.subr.mxu0 %v4556
    %v4558 = vand.u32 %v3026, 4294901760
    %v4559 = vsub.f32 %v3026, %v4558
    %v4560 = vand.u32 %v4559, 4294901760
    %v4561 = vsub.f32 %v4559, %v4560
    %v4562 = vand.u32 %v4561, 4294901760
    %4563 = vmatpush1.msra.mxu0 %v4562
    %v4564 = vand.u32 %v3029, 4294901760
    %v4565 = vsub.f32 %v3029, %v4564
    %v4566 = vand.u32 %v4565, 4294901760
    %v4567 = vsub.f32 %v4565, %v4566
    %v4568 = vand.u32 %v4567, 4294901760
    %4569 = vmatprep.subr.mxu0 %v4568
    %v4570 = vand.u32 %v3028, 4294901760
    %v4571 = vsub.f32 %v3028, %v4570
    %v4572 = vand.u32 %v4571, 4294901760
    %v4573 = vsub.f32 %v4571, %v4572
    %v4574 = vand.u32 %v4573, 4294901760
    %4575 = vmatpush1.msra.mxu0 %v4574
    %v4576 = vand.u32 %v3031, 4294901760
    %v4577 = vsub.f32 %v3031, %v4576
    %v4578 = vand.u32 %v4577, 4294901760
    %v4579 = vsub.f32 %v4577, %v4578
    %v4580 = vand.u32 %v4579, 4294901760
    %4581 = vmatprep.subr.mxu0 %v4580
    %v4582 = vand.u32 %v3030, 4294901760
    %v4583 = vsub.f32 %v3030, %v4582
    %v4584 = vand.u32 %v4583, 4294901760
    %v4585 = vsub.f32 %v4583, %v4584
    %v4586 = vand.u32 %v4585, 4294901760
    %4587 = vmatpush1.msra.mxu0 %v4586
    %v4588 = vand.u32 %v3033, 4294901760
    %v4589 = vsub.f32 %v3033, %v4588
    %v4590 = vand.u32 %v4589, 4294901760
    %v4591 = vsub.f32 %v4589, %v4590
    %v4592 = vand.u32 %v4591, 4294901760
    %4593 = vmatprep.subr.mxu0 %v4592
    %v4594 = vand.u32 %v3032, 4294901760
    %v4595 = vsub.f32 %v3032, %v4594
    %v4596 = vand.u32 %v4595, 4294901760
    %v4597 = vsub.f32 %v4595, %v4596
    %v4598 = vand.u32 %v4597, 4294901760
    %4599 = vmatpush1.msra.mxu0 %v4598
    %v4600 = vand.u32 %v3035, 4294901760
    %v4601 = vsub.f32 %v3035, %v4600
    %v4602 = vand.u32 %v4601, 4294901760
    %v4603 = vsub.f32 %v4601, %v4602
    %v4604 = vand.u32 %v4603, 4294901760
    %4605 = vmatprep.subr.mxu0 %v4604
    %v4606 = vand.u32 %v3034, 4294901760
    %v4607 = vsub.f32 %v3034, %v4606
    %v4608 = vand.u32 %v4607, 4294901760
    %v4609 = vsub.f32 %v4607, %v4608
    %v4610 = vand.u32 %v4609, 4294901760
    %4611 = vmatpush1.msra.mxu0 %v4610
    %v4612 = vand.u32 %v3037, 4294901760
    %v4613 = vsub.f32 %v3037, %v4612
    %v4614 = vand.u32 %v4613, 4294901760
    %v4615 = vsub.f32 %v4613, %v4614
    %v4616 = vand.u32 %v4615, 4294901760
    %4617 = vmatprep.subr.mxu0 %v4616
    %v4618 = vand.u32 %v3036, 4294901760
    %v4619 = vsub.f32 %v3036, %v4618
    %v4620 = vand.u32 %v4619, 4294901760
    %v4621 = vsub.f32 %v4619, %v4620
    %v4622 = vand.u32 %v4621, 4294901760
    %4623 = vmatpush1.msra.mxu0 %v4622
    %v4624 = vand.u32 %v3039, 4294901760
    %v4625 = vsub.f32 %v3039, %v4624
    %v4626 = vand.u32 %v4625, 4294901760
    %v4627 = vsub.f32 %v4625, %v4626
    %v4628 = vand.u32 %v4627, 4294901760
    %4629 = vmatprep.subr.mxu0 %v4628
    %v4630 = vand.u32 %v3038, 4294901760
    %v4631 = vsub.f32 %v3038, %v4630
    %v4632 = vand.u32 %v4631, 4294901760
    %v4633 = vsub.f32 %v4631, %v4632
    %v4634 = vand.u32 %v4633, 4294901760
    %4635 = vmatpush1.msra.mxu0 %v4634
    %v4636 = vand.u32 %v3041, 4294901760
    %v4637 = vsub.f32 %v3041, %v4636
    %v4638 = vand.u32 %v4637, 4294901760
    %v4639 = vsub.f32 %v4637, %v4638
    %v4640 = vand.u32 %v4639, 4294901760
    %4641 = vmatprep.subr.mxu0 %v4640
    %v4642 = vand.u32 %v3040, 4294901760
    %v4643 = vsub.f32 %v3040, %v4642
    %v4644 = vand.u32 %v4643, 4294901760
    %v4645 = vsub.f32 %v4643, %v4644
    %v4646 = vand.u32 %v4645, 4294901760
    %4647 = vmatpush1.msra.mxu0 %v4646
    %v4648 = vand.u32 %v3043, 4294901760
    %v4649 = vsub.f32 %v3043, %v4648
    %v4650 = vand.u32 %v4649, 4294901760
    %v4651 = vsub.f32 %v4649, %v4650
    %v4652 = vand.u32 %v4651, 4294901760
    %4653 = vmatprep.subr.mxu0 %v4652
    %v4654 = vand.u32 %v3042, 4294901760
    %v4655 = vsub.f32 %v3042, %v4654
    %v4656 = vand.u32 %v4655, 4294901760
    %v4657 = vsub.f32 %v4655, %v4656
    %v4658 = vand.u32 %v4657, 4294901760
    %4659 = vmatpush1.msra.mxu0 %v4658
    %v4660 = vand.u32 %v3045, 4294901760
    %v4661 = vsub.f32 %v3045, %v4660
    %v4662 = vand.u32 %v4661, 4294901760
    %v4663 = vsub.f32 %v4661, %v4662
    %v4664 = vand.u32 %v4663, 4294901760
    %4665 = vmatprep.subr.mxu0 %v4664
    %v4666 = vand.u32 %v3044, 4294901760
    %v4667 = vsub.f32 %v3044, %v4666
    %v4668 = vand.u32 %v4667, 4294901760
    %v4669 = vsub.f32 %v4667, %v4668
    %v4670 = vand.u32 %v4669, 4294901760
    %4671 = vmatpush1.msra.mxu0 %v4670
    %v4672 = vand.u32 %v3047, 4294901760
    %v4673 = vsub.f32 %v3047, %v4672
    %v4674 = vand.u32 %v4673, 4294901760
    %v4675 = vsub.f32 %v4673, %v4674
    %v4676 = vand.u32 %v4675, 4294901760
    %4677 = vmatprep.subr.mxu0 %v4676
    %v4678 = vand.u32 %v3046, 4294901760
    %v4679 = vsub.f32 %v3046, %v4678
    %v4680 = vand.u32 %v4679, 4294901760
    %v4681 = vsub.f32 %v4679, %v4680
    %v4682 = vand.u32 %v4681, 4294901760
    %4683 = vmatpush1.msra.mxu0 %v4682
    %v4684 = vand.u32 %v3049, 4294901760
    %v4685 = vsub.f32 %v3049, %v4684
    %v4686 = vand.u32 %v4685, 4294901760
    %v4687 = vsub.f32 %v4685, %v4686
    %v4688 = vand.u32 %v4687, 4294901760
    %4689 = vmatprep.subr.mxu0 %v4688
    %v4690 = vand.u32 %v3048, 4294901760
    %v4691 = vsub.f32 %v3048, %v4690
    %v4692 = vand.u32 %v4691, 4294901760
    %v4693 = vsub.f32 %v4691, %v4692
    %v4694 = vand.u32 %v4693, 4294901760
    %4695 = vmatpush1.msra.mxu0 %v4694
    %v4696 = vand.u32 %v3051, 4294901760
    %v4697 = vsub.f32 %v3051, %v4696
    %v4698 = vand.u32 %v4697, 4294901760
    %v4699 = vsub.f32 %v4697, %v4698
    %v4700 = vand.u32 %v4699, 4294901760
    %4701 = vmatprep.subr.mxu0 %v4700
    %v4702 = vand.u32 %v3050, 4294901760
    %v4703 = vsub.f32 %v3050, %v4702
    %v4704 = vand.u32 %v4703, 4294901760
    %v4705 = vsub.f32 %v4703, %v4704
    %v4706 = vand.u32 %v4705, 4294901760
    %4707 = vmatpush1.msra.mxu0 %v4706
    %v4708 = vand.u32 %v3053, 4294901760
    %v4709 = vsub.f32 %v3053, %v4708
    %v4710 = vand.u32 %v4709, 4294901760
    %v4711 = vsub.f32 %v4709, %v4710
    %v4712 = vand.u32 %v4711, 4294901760
    %4713 = vmatprep.subr.mxu0 %v4712
    %v4714 = vand.u32 %v3052, 4294901760
    %v4715 = vsub.f32 %v3052, %v4714
    %v4716 = vand.u32 %v4715, 4294901760
    %v4717 = vsub.f32 %v4715, %v4716
    %v4718 = vand.u32 %v4717, 4294901760
    %4719 = vmatpush1.msra.mxu0 %v4718
    %v4720 = vand.u32 %v3055, 4294901760
    %v4721 = vsub.f32 %v3055, %v4720
    %v4722 = vand.u32 %v4721, 4294901760
    %v4723 = vsub.f32 %v4721, %v4722
    %v4724 = vand.u32 %v4723, 4294901760
    %4725 = vmatprep.subr.mxu0 %v4724
    %v4726 = vand.u32 %v3054, 4294901760
    %v4727 = vsub.f32 %v3054, %v4726
    %v4728 = vand.u32 %v4727, 4294901760
    %v4729 = vsub.f32 %v4727, %v4728
    %v4730 = vand.u32 %v4729, 4294901760
    %4731 = vmatpush1.msra.mxu0 %v4730
    %v4732 = vand.u32 %v3057, 4294901760
    %v4733 = vsub.f32 %v3057, %v4732
    %v4734 = vand.u32 %v4733, 4294901760
    %v4735 = vsub.f32 %v4733, %v4734
    %v4736 = vand.u32 %v4735, 4294901760
    %4737 = vmatprep.subr.mxu0 %v4736
    %v4738 = vand.u32 %v3056, 4294901760
    %v4739 = vsub.f32 %v3056, %v4738
    %v4740 = vand.u32 %v4739, 4294901760
    %v4741 = vsub.f32 %v4739, %v4740
    %v4742 = vand.u32 %v4741, 4294901760
    %4743 = vmatpush1.msra.mxu0 %v4742
    %v4744 = vand.u32 %v3059, 4294901760
    %v4745 = vsub.f32 %v3059, %v4744
    %v4746 = vand.u32 %v4745, 4294901760
    %v4747 = vsub.f32 %v4745, %v4746
    %v4748 = vand.u32 %v4747, 4294901760
    %4749 = vmatprep.subr.mxu0 %v4748
    %v4750 = vand.u32 %v3058, 4294901760
    %v4751 = vsub.f32 %v3058, %v4750
    %v4752 = vand.u32 %v4751, 4294901760
    %v4753 = vsub.f32 %v4751, %v4752
    %v4754 = vand.u32 %v4753, 4294901760
    %4755 = vmatpush1.msra.mxu0 %v4754
    %v4756 = vand.u32 %v3061, 4294901760
    %v4757 = vsub.f32 %v3061, %v4756
    %v4758 = vand.u32 %v4757, 4294901760
    %v4759 = vsub.f32 %v4757, %v4758
    %v4760 = vand.u32 %v4759, 4294901760
    %4761 = vmatprep.subr.mxu0 %v4760
    %v4762 = vand.u32 %v3060, 4294901760
    %v4763 = vsub.f32 %v3060, %v4762
    %v4764 = vand.u32 %v4763, 4294901760
    %v4765 = vsub.f32 %v4763, %v4764
    %v4766 = vand.u32 %v4765, 4294901760
    %4767 = vmatpush1.msra.mxu0 %v4766
    %v4768 = vand.u32 %v3063, 4294901760
    %v4769 = vsub.f32 %v3063, %v4768
    %v4770 = vand.u32 %v4769, 4294901760
    %v4771 = vsub.f32 %v4769, %v4770
    %v4772 = vand.u32 %v4771, 4294901760
    %4773 = vmatprep.subr.mxu0 %v4772
    %v4774 = vand.u32 %v3062, 4294901760
    %v4775 = vsub.f32 %v3062, %v4774
    %v4776 = vand.u32 %v4775, 4294901760
    %v4777 = vsub.f32 %v4775, %v4776
    %v4778 = vand.u32 %v4777, 4294901760
    %4779 = vmatpush1.msra.mxu0 %v4778
    %v4780 = vand.u32 %v3065, 4294901760
    %v4781 = vsub.f32 %v3065, %v4780
    %v4782 = vand.u32 %v4781, 4294901760
    %v4783 = vsub.f32 %v4781, %v4782
    %v4784 = vand.u32 %v4783, 4294901760
    %4785 = vmatprep.subr.mxu0 %v4784
    %v4786 = vand.u32 %v3064, 4294901760
    %v4787 = vsub.f32 %v3064, %v4786
    %v4788 = vand.u32 %v4787, 4294901760
    %v4789 = vsub.f32 %v4787, %v4788
    %v4790 = vand.u32 %v4789, 4294901760
    %4791 = vmatpush1.msra.mxu0 %v4790
    %v4792 = vand.u32 %v3067, 4294901760
    %v4793 = vsub.f32 %v3067, %v4792
    %v4794 = vand.u32 %v4793, 4294901760
    %v4795 = vsub.f32 %v4793, %v4794
    %v4796 = vand.u32 %v4795, 4294901760
    %4797 = vmatprep.subr.mxu0 %v4796
    %v4798 = vand.u32 %v3066, 4294901760
    %v4799 = vsub.f32 %v3066, %v4798
    %v4800 = vand.u32 %v4799, 4294901760
    %v4801 = vsub.f32 %v4799, %v4800
    %v4802 = vand.u32 %v4801, 4294901760
    %4803 = vmatpush1.msra.mxu0 %v4802
    %v4804 = vand.u32 %v3069, 4294901760
    %v4805 = vsub.f32 %v3069, %v4804
    %v4806 = vand.u32 %v4805, 4294901760
    %v4807 = vsub.f32 %v4805, %v4806
    %v4808 = vand.u32 %v4807, 4294901760
    %4809 = vmatprep.subr.mxu0 %v4808
    %v4810 = vand.u32 %v3068, 4294901760
    %v4811 = vsub.f32 %v3068, %v4810
    %v4812 = vand.u32 %v4811, 4294901760
    %v4813 = vsub.f32 %v4811, %v4812
    %v4814 = vand.u32 %v4813, 4294901760
    %4815 = vmatpush1.msra.mxu0 %v4814
    %v4816 = vand.u32 %v3071, 4294901760
    %v4817 = vsub.f32 %v3071, %v4816
    %v4818 = vand.u32 %v4817, 4294901760
    %v4819 = vsub.f32 %v4817, %v4818
    %v4820 = vand.u32 %v4819, 4294901760
    %4821 = vmatprep.subr.mxu0 %v4820
    %v4822 = vand.u32 %v3070, 4294901760
    %v4823 = vsub.f32 %v3070, %v4822
    %v4824 = vand.u32 %v4823, 4294901760
    %v4825 = vsub.f32 %v4823, %v4824
    %v4826 = vand.u32 %v4825, 4294901760
    %4827 = vmatpush1.msra.mxu0 %v4826
    %v4828 = vand.u32 %v3073, 4294901760
    %v4829 = vsub.f32 %v3073, %v4828
    %v4830 = vand.u32 %v4829, 4294901760
    %v4831 = vsub.f32 %v4829, %v4830
    %v4832 = vand.u32 %v4831, 4294901760
    %4833 = vmatprep.subr.mxu0 %v4832
    %v4834 = vand.u32 %v3072, 4294901760
    %v4835 = vsub.f32 %v3072, %v4834
    %v4836 = vand.u32 %v4835, 4294901760
    %v4837 = vsub.f32 %v4835, %v4836
    %v4838 = vand.u32 %v4837, 4294901760
    %4839 = vmatpush1.msra.mxu0 %v4838
    %v4840 = vand.u32 %v3075, 4294901760
    %v4841 = vsub.f32 %v3075, %v4840
    %v4842 = vand.u32 %v4841, 4294901760
    %v4843 = vsub.f32 %v4841, %v4842
    %v4844 = vand.u32 %v4843, 4294901760
    %4845 = vmatprep.subr.mxu0 %v4844
    %v4846 = vand.u32 %v3074, 4294901760
    %v4847 = vsub.f32 %v3074, %v4846
    %v4848 = vand.u32 %v4847, 4294901760
    %v4849 = vsub.f32 %v4847, %v4848
    %v4850 = vand.u32 %v4849, 4294901760
    %4851 = vmatpush1.msra.mxu0 %v4850
    %v4852 = vand.u32 %v3077, 4294901760
    %v4853 = vsub.f32 %v3077, %v4852
    %v4854 = vand.u32 %v4853, 4294901760
    %v4855 = vsub.f32 %v4853, %v4854
    %v4856 = vand.u32 %v4855, 4294901760
    %4857 = vmatprep.subr.mxu0 %v4856
    %v4858 = vand.u32 %v3076, 4294901760
    %v4859 = vsub.f32 %v3076, %v4858
    %v4860 = vand.u32 %v4859, 4294901760
    %v4861 = vsub.f32 %v4859, %v4860
    %v4862 = vand.u32 %v4861, 4294901760
    %4863 = vmatpush1.msra.mxu0 %v4862
    %v4864 = vand.u32 %v3079, 4294901760
    %v4865 = vsub.f32 %v3079, %v4864
    %v4866 = vand.u32 %v4865, 4294901760
    %v4867 = vsub.f32 %v4865, %v4866
    %v4868 = vand.u32 %v4867, 4294901760
    %4869 = vmatprep.subr.mxu0 %v4868
    %v4870 = vand.u32 %v3078, 4294901760
    %v4871 = vsub.f32 %v3078, %v4870
    %v4872 = vand.u32 %v4871, 4294901760
    %v4873 = vsub.f32 %v4871, %v4872
    %v4874 = vand.u32 %v4873, 4294901760
    %4875 = vmatpush1.msra.mxu0 %v4874
    %v4876 = vand.u32 %v3081, 4294901760
    %v4877 = vsub.f32 %v3081, %v4876
    %v4878 = vand.u32 %v4877, 4294901760
    %v4879 = vsub.f32 %v4877, %v4878
    %v4880 = vand.u32 %v4879, 4294901760
    %4881 = vmatprep.subr.mxu0 %v4880
    %v4882 = vand.u32 %v3080, 4294901760
    %v4883 = vsub.f32 %v3080, %v4882
    %v4884 = vand.u32 %v4883, 4294901760
    %v4885 = vsub.f32 %v4883, %v4884
    %v4886 = vand.u32 %v4885, 4294901760
    %4887 = vmatpush1.msra.mxu0 %v4886
    %v4888 = vand.u32 %v3083, 4294901760
    %v4889 = vsub.f32 %v3083, %v4888
    %v4890 = vand.u32 %v4889, 4294901760
    %v4891 = vsub.f32 %v4889, %v4890
    %v4892 = vand.u32 %v4891, 4294901760
    %4893 = vmatprep.subr.mxu0 %v4892
    %v4894 = vand.u32 %v3082, 4294901760
    %v4895 = vsub.f32 %v3082, %v4894
    %v4896 = vand.u32 %v4895, 4294901760
    %v4897 = vsub.f32 %v4895, %v4896
    %v4898 = vand.u32 %v4897, 4294901760
    %4899 = vmatpush1.msra.mxu0 %v4898
    %v4900 = vand.u32 %v3085, 4294901760
    %v4901 = vsub.f32 %v3085, %v4900
    %v4902 = vand.u32 %v4901, 4294901760
    %v4903 = vsub.f32 %v4901, %v4902
    %v4904 = vand.u32 %v4903, 4294901760
    %4905 = vmatprep.subr.mxu0 %v4904
    %v4906 = vand.u32 %v3084, 4294901760
    %v4907 = vsub.f32 %v3084, %v4906
    %v4908 = vand.u32 %v4907, 4294901760
    %v4909 = vsub.f32 %v4907, %v4908
    %v4910 = vand.u32 %v4909, 4294901760
    %4911 = vmatpush1.msra.mxu0 %v4910
    %v4912 = vand.u32 %v3021, 4294901760
    %4913 = vmatprep.mubr.f32.mxu0 %v4912
    %v4914 = vand.u32 %v2811, 4294901760
    %4915 = vmatmul.mubr.f32.gmra.mrb[0].mxu0 %v4914
    %v4916 = vpop.f32.mrb[0].mxu0
    %v4917 = vadd.f32 %v4524, %v4916
    %v4918 = vpop.f32.mrb[0].mxu0
    %v4919 = vadd.f32 %v4526, %v4918
    %4920 = vdwg.mxu0
    %v4921 = vand.u32 %v3023, 4294901760
    %v4922 = vsub.f32 %v3023, %v4921
    %4923 = vmatprep.subr.mxu0 %v4922
    %v4924 = vand.u32 %v3022, 4294901760
    %v4925 = vsub.f32 %v3022, %v4924
    %4926 = vmatpush1.msra.mxu0 %v4925
    %v4927 = vand.u32 %v3025, 4294901760
    %v4928 = vsub.f32 %v3025, %v4927
    %4929 = vmatprep.subr.mxu0 %v4928
    %v4930 = vand.u32 %v3024, 4294901760
    %v4931 = vsub.f32 %v3024, %v4930
    %4932 = vmatpush1.msra.mxu0 %v4931
    %v4933 = vand.u32 %v3027, 4294901760
    %v4934 = vsub.f32 %v3027, %v4933
    %4935 = vmatprep.subr.mxu0 %v4934
    %v4936 = vand.u32 %v3026, 4294901760
    %v4937 = vsub.f32 %v3026, %v4936
    %4938 = vmatpush1.msra.mxu0 %v4937
    %v4939 = vand.u32 %v3029, 4294901760
    %v4940 = vsub.f32 %v3029, %v4939
    %4941 = vmatprep.subr.mxu0 %v4940
    %v4942 = vand.u32 %v3028, 4294901760
    %v4943 = vsub.f32 %v3028, %v4942
    %4944 = vmatpush1.msra.mxu0 %v4943
    %v4945 = vand.u32 %v3031, 4294901760
    %v4946 = vsub.f32 %v3031, %v4945
    %4947 = vmatprep.subr.mxu0 %v4946
    %v4948 = vand.u32 %v3030, 4294901760
    %v4949 = vsub.f32 %v3030, %v4948
    %4950 = vmatpush1.msra.mxu0 %v4949
    %v4951 = vand.u32 %v3033, 4294901760
    %v4952 = vsub.f32 %v3033, %v4951
    %4953 = vmatprep.subr.mxu0 %v4952
    %v4954 = vand.u32 %v3032, 4294901760
    %v4955 = vsub.f32 %v3032, %v4954
    %4956 = vmatpush1.msra.mxu0 %v4955
    %v4957 = vand.u32 %v3035, 4294901760
    %v4958 = vsub.f32 %v3035, %v4957
    %4959 = vmatprep.subr.mxu0 %v4958
    %v4960 = vand.u32 %v3034, 4294901760
    %v4961 = vsub.f32 %v3034, %v4960
    %4962 = vmatpush1.msra.mxu0 %v4961
    %v4963 = vand.u32 %v3037, 4294901760
    %v4964 = vsub.f32 %v3037, %v4963
    %4965 = vmatprep.subr.mxu0 %v4964
    %v4966 = vand.u32 %v3036, 4294901760
    %v4967 = vsub.f32 %v3036, %v4966
    %4968 = vmatpush1.msra.mxu0 %v4967
    %v4969 = vand.u32 %v3039, 4294901760
    %v4970 = vsub.f32 %v3039, %v4969
    %4971 = vmatprep.subr.mxu0 %v4970
    %v4972 = vand.u32 %v3038, 4294901760
    %v4973 = vsub.f32 %v3038, %v4972
    %4974 = vmatpush1.msra.mxu0 %v4973
    %v4975 = vand.u32 %v3041, 4294901760
    %v4976 = vsub.f32 %v3041, %v4975
    %4977 = vmatprep.subr.mxu0 %v4976
    %v4978 = vand.u32 %v3040, 4294901760
    %v4979 = vsub.f32 %v3040, %v4978
    %4980 = vmatpush1.msra.mxu0 %v4979
    %v4981 = vand.u32 %v3043, 4294901760
    %v4982 = vsub.f32 %v3043, %v4981
    %4983 = vmatprep.subr.mxu0 %v4982
    %v4984 = vand.u32 %v3042, 4294901760
    %v4985 = vsub.f32 %v3042, %v4984
    %4986 = vmatpush1.msra.mxu0 %v4985
    %v4987 = vand.u32 %v3045, 4294901760
    %v4988 = vsub.f32 %v3045, %v4987
    %4989 = vmatprep.subr.mxu0 %v4988
    %v4990 = vand.u32 %v3044, 4294901760
    %v4991 = vsub.f32 %v3044, %v4990
    %4992 = vmatpush1.msra.mxu0 %v4991
    %v4993 = vand.u32 %v3047, 4294901760
    %v4994 = vsub.f32 %v3047, %v4993
    %4995 = vmatprep.subr.mxu0 %v4994
    %v4996 = vand.u32 %v3046, 4294901760
    %v4997 = vsub.f32 %v3046, %v4996
    %4998 = vmatpush1.msra.mxu0 %v4997
    %v4999 = vand.u32 %v3049, 4294901760
    %v5000 = vsub.f32 %v3049, %v4999
    %5001 = vmatprep.subr.mxu0 %v5000
    %v5002 = vand.u32 %v3048, 4294901760
    %v5003 = vsub.f32 %v3048, %v5002
    %5004 = vmatpush1.msra.mxu0 %v5003
    %v5005 = vand.u32 %v3051, 4294901760
    %v5006 = vsub.f32 %v3051, %v5005
    %5007 = vmatprep.subr.mxu0 %v5006
    %v5008 = vand.u32 %v3050, 4294901760
    %v5009 = vsub.f32 %v3050, %v5008
    %5010 = vmatpush1.msra.mxu0 %v5009
    %v5011 = vand.u32 %v3053, 4294901760
    %v5012 = vsub.f32 %v3053, %v5011
    %5013 = vmatprep.subr.mxu0 %v5012
    %v5014 = vand.u32 %v3052, 4294901760
    %v5015 = vsub.f32 %v3052, %v5014
    %5016 = vmatpush1.msra.mxu0 %v5015
    %v5017 = vand.u32 %v3055, 4294901760
    %v5018 = vsub.f32 %v3055, %v5017
    %5019 = vmatprep.subr.mxu0 %v5018
    %v5020 = vand.u32 %v3054, 4294901760
    %v5021 = vsub.f32 %v3054, %v5020
    %5022 = vmatpush1.msra.mxu0 %v5021
    %v5023 = vand.u32 %v3057, 4294901760
    %v5024 = vsub.f32 %v3057, %v5023
    %5025 = vmatprep.subr.mxu0 %v5024
    %v5026 = vand.u32 %v3056, 4294901760
    %v5027 = vsub.f32 %v3056, %v5026
    %5028 = vmatpush1.msra.mxu0 %v5027
    %v5029 = vand.u32 %v3059, 4294901760
    %v5030 = vsub.f32 %v3059, %v5029
    %5031 = vmatprep.subr.mxu0 %v5030
    %v5032 = vand.u32 %v3058, 4294901760
    %v5033 = vsub.f32 %v3058, %v5032
    %5034 = vmatpush1.msra.mxu0 %v5033
    %v5035 = vand.u32 %v3061, 4294901760
    %v5036 = vsub.f32 %v3061, %v5035
    %5037 = vmatprep.subr.mxu0 %v5036
    %v5038 = vand.u32 %v3060, 4294901760
    %v5039 = vsub.f32 %v3060, %v5038
    %5040 = vmatpush1.msra.mxu0 %v5039
    %v5041 = vand.u32 %v3063, 4294901760
    %v5042 = vsub.f32 %v3063, %v5041
    %5043 = vmatprep.subr.mxu0 %v5042
    %v5044 = vand.u32 %v3062, 4294901760
    %v5045 = vsub.f32 %v3062, %v5044
    %5046 = vmatpush1.msra.mxu0 %v5045
    %v5047 = vand.u32 %v3065, 4294901760
    %v5048 = vsub.f32 %v3065, %v5047
    %5049 = vmatprep.subr.mxu0 %v5048
    %v5050 = vand.u32 %v3064, 4294901760
    %v5051 = vsub.f32 %v3064, %v5050
    %5052 = vmatpush1.msra.mxu0 %v5051
    %v5053 = vand.u32 %v3067, 4294901760
    %v5054 = vsub.f32 %v3067, %v5053
    %5055 = vmatprep.subr.mxu0 %v5054
    %v5056 = vand.u32 %v3066, 4294901760
    %v5057 = vsub.f32 %v3066, %v5056
    %5058 = vmatpush1.msra.mxu0 %v5057
    %v5059 = vand.u32 %v3069, 4294901760
    %v5060 = vsub.f32 %v3069, %v5059
    %5061 = vmatprep.subr.mxu0 %v5060
    %v5062 = vand.u32 %v3068, 4294901760
    %v5063 = vsub.f32 %v3068, %v5062
    %5064 = vmatpush1.msra.mxu0 %v5063
    %v5065 = vand.u32 %v3071, 4294901760
    %v5066 = vsub.f32 %v3071, %v5065
    %5067 = vmatprep.subr.mxu0 %v5066
    %v5068 = vand.u32 %v3070, 4294901760
    %v5069 = vsub.f32 %v3070, %v5068
    %5070 = vmatpush1.msra.mxu0 %v5069
    %v5071 = vand.u32 %v3073, 4294901760
    %v5072 = vsub.f32 %v3073, %v5071
    %5073 = vmatprep.subr.mxu0 %v5072
    %v5074 = vand.u32 %v3072, 4294901760
    %v5075 = vsub.f32 %v3072, %v5074
    %5076 = vmatpush1.msra.mxu0 %v5075
    %v5077 = vand.u32 %v3075, 4294901760
    %v5078 = vsub.f32 %v3075, %v5077
    %5079 = vmatprep.subr.mxu0 %v5078
    %v5080 = vand.u32 %v3074, 4294901760
    %v5081 = vsub.f32 %v3074, %v5080
    %5082 = vmatpush1.msra.mxu0 %v5081
    %v5083 = vand.u32 %v3077, 4294901760
    %v5084 = vsub.f32 %v3077, %v5083
    %5085 = vmatprep.subr.mxu0 %v5084
    %v5086 = vand.u32 %v3076, 4294901760
    %v5087 = vsub.f32 %v3076, %v5086
    %5088 = vmatpush1.msra.mxu0 %v5087
    %v5089 = vand.u32 %v3079, 4294901760
    %v5090 = vsub.f32 %v3079, %v5089
    %5091 = vmatprep.subr.mxu0 %v5090
    %v5092 = vand.u32 %v3078, 4294901760
    %v5093 = vsub.f32 %v3078, %v5092
    %5094 = vmatpush1.msra.mxu0 %v5093
    %v5095 = vand.u32 %v3081, 4294901760
    %v5096 = vsub.f32 %v3081, %v5095
    %5097 = vmatprep.subr.mxu0 %v5096
    %v5098 = vand.u32 %v3080, 4294901760
    %v5099 = vsub.f32 %v3080, %v5098
    %5100 = vmatpush1.msra.mxu0 %v5099
    %v5101 = vand.u32 %v3083, 4294901760
    %v5102 = vsub.f32 %v3083, %v5101
    %5103 = vmatprep.subr.mxu0 %v5102
    %v5104 = vand.u32 %v3082, 4294901760
    %v5105 = vsub.f32 %v3082, %v5104
    %5106 = vmatpush1.msra.mxu0 %v5105
    %v5107 = vand.u32 %v3085, 4294901760
    %v5108 = vsub.f32 %v3085, %v5107
    %5109 = vmatprep.subr.mxu0 %v5108
    %v5110 = vand.u32 %v3084, 4294901760
    %v5111 = vsub.f32 %v3084, %v5110
    %5112 = vmatpush1.msra.mxu0 %v5111
    %v5113 = vand.u32 %v3021, 4294901760
    %v5114 = vsub.f32 %v3021, %v5113
    %5115 = vmatprep.mubr.f32.mxu0 %v5114
    %v5116 = vand.u32 %v2811, 4294901760
    %v5117 = vsub.f32 %v2811, %v5116
    %5118 = vmatmul.mubr.f32.gmra.mrb[0].mxu0 %v5117
    %v5119 = vpop.f32.mrb[0].mxu0
    %v5120 = vadd.f32 %v4917, %v5119
    %v5121 = vpop.f32.mrb[0].mxu0
    %v5122 = vadd.f32 %v4919, %v5121
    %5123 = vdwg.mxu0
    %v5124 = vand.u32 %v3023, 4294901760
    %5125 = vmatprep.subr.mxu0 %v5124
    %v5126 = vand.u32 %v3022, 4294901760
    %5127 = vmatpush1.msra.mxu0 %v5126
    %v5128 = vand.u32 %v3025, 4294901760
    %5129 = vmatprep.subr.mxu0 %v5128
    %v5130 = vand.u32 %v3024, 4294901760
    %5131 = vmatpush1.msra.mxu0 %v5130
    %v5132 = vand.u32 %v3027, 4294901760
    %5133 = vmatprep.subr.mxu0 %v5132
    %v5134 = vand.u32 %v3026, 4294901760
    %5135 = vmatpush1.msra.mxu0 %v5134
    %v5136 = vand.u32 %v3029, 4294901760
    %5137 = vmatprep.subr.mxu0 %v5136
    %v5138 = vand.u32 %v3028, 4294901760
    %5139 = vmatpush1.msra.mxu0 %v5138
    %v5140 = vand.u32 %v3031, 4294901760
    %5141 = vmatprep.subr.mxu0 %v5140
    %v5142 = vand.u32 %v3030, 4294901760
    %5143 = vmatpush1.msra.mxu0 %v5142
    %v5144 = vand.u32 %v3033, 4294901760
    %5145 = vmatprep.subr.mxu0 %v5144
    %v5146 = vand.u32 %v3032, 4294901760
    %5147 = vmatpush1.msra.mxu0 %v5146
    %v5148 = vand.u32 %v3035, 4294901760
    %5149 = vmatprep.subr.mxu0 %v5148
    %v5150 = vand.u32 %v3034, 4294901760
    %5151 = vmatpush1.msra.mxu0 %v5150
    %v5152 = vand.u32 %v3037, 4294901760
    %5153 = vmatprep.subr.mxu0 %v5152
    %v5154 = vand.u32 %v3036, 4294901760
    %5155 = vmatpush1.msra.mxu0 %v5154
    %v5156 = vand.u32 %v3039, 4294901760
    %5157 = vmatprep.subr.mxu0 %v5156
    %v5158 = vand.u32 %v3038, 4294901760
    %5159 = vmatpush1.msra.mxu0 %v5158
    %v5160 = vand.u32 %v3041, 4294901760
    %5161 = vmatprep.subr.mxu0 %v5160
    %v5162 = vand.u32 %v3040, 4294901760
    %5163 = vmatpush1.msra.mxu0 %v5162
    %v5164 = vand.u32 %v3043, 4294901760
    %5165 = vmatprep.subr.mxu0 %v5164
    %v5166 = vand.u32 %v3042, 4294901760
    %5167 = vmatpush1.msra.mxu0 %v5166
    %v5168 = vand.u32 %v3045, 4294901760
    %5169 = vmatprep.subr.mxu0 %v5168
    %v5170 = vand.u32 %v3044, 4294901760
    %5171 = vmatpush1.msra.mxu0 %v5170
    %v5172 = vand.u32 %v3047, 4294901760
    %5173 = vmatprep.subr.mxu0 %v5172
    %v5174 = vand.u32 %v3046, 4294901760
    %5175 = vmatpush1.msra.mxu0 %v5174
    %v5176 = vand.u32 %v3049, 4294901760
    %5177 = vmatprep.subr.mxu0 %v5176
    %v5178 = vand.u32 %v3048, 4294901760
    %5179 = vmatpush1.msra.mxu0 %v5178
    %v5180 = vand.u32 %v3051, 4294901760
    %5181 = vmatprep.subr.mxu0 %v5180
    %v5182 = vand.u32 %v3050, 4294901760
    %5183 = vmatpush1.msra.mxu0 %v5182
    %v5184 = vand.u32 %v3053, 4294901760
    %5185 = vmatprep.subr.mxu0 %v5184
    %v5186 = vand.u32 %v3052, 4294901760
    %5187 = vmatpush1.msra.mxu0 %v5186
    %v5188 = vand.u32 %v3055, 4294901760
    %5189 = vmatprep.subr.mxu0 %v5188
    %v5190 = vand.u32 %v3054, 4294901760
    %5191 = vmatpush1.msra.mxu0 %v5190
    %v5192 = vand.u32 %v3057, 4294901760
    %5193 = vmatprep.subr.mxu0 %v5192
    %v5194 = vand.u32 %v3056, 4294901760
    %5195 = vmatpush1.msra.mxu0 %v5194
    %v5196 = vand.u32 %v3059, 4294901760
    %5197 = vmatprep.subr.mxu0 %v5196
    %v5198 = vand.u32 %v3058, 4294901760
    %5199 = vmatpush1.msra.mxu0 %v5198
    %v5200 = vand.u32 %v3061, 4294901760
    %5201 = vmatprep.subr.mxu0 %v5200
    %v5202 = vand.u32 %v3060, 4294901760
    %5203 = vmatpush1.msra.mxu0 %v5202
    %v5204 = vand.u32 %v3063, 4294901760
    %5205 = vmatprep.subr.mxu0 %v5204
    %v5206 = vand.u32 %v3062, 4294901760
    %5207 = vmatpush1.msra.mxu0 %v5206
    %v5208 = vand.u32 %v3065, 4294901760
    %5209 = vmatprep.subr.mxu0 %v5208
    %v5210 = vand.u32 %v3064, 4294901760
    %5211 = vmatpush1.msra.mxu0 %v5210
    %v5212 = vand.u32 %v3067, 4294901760
    %5213 = vmatprep.subr.mxu0 %v5212
    %v5214 = vand.u32 %v3066, 4294901760
    %5215 = vmatpush1.msra.mxu0 %v5214
    %v5216 = vand.u32 %v3069, 4294901760
    %5217 = vmatprep.subr.mxu0 %v5216
    %v5218 = vand.u32 %v3068, 4294901760
    %5219 = vmatpush1.msra.mxu0 %v5218
    %v5220 = vand.u32 %v3071, 4294901760
    %5221 = vmatprep.subr.mxu0 %v5220
    %v5222 = vand.u32 %v3070, 4294901760
    %5223 = vmatpush1.msra.mxu0 %v5222
    %v5224 = vand.u32 %v3073, 4294901760
    %5225 = vmatprep.subr.mxu0 %v5224
    %v5226 = vand.u32 %v3072, 4294901760
    %5227 = vmatpush1.msra.mxu0 %v5226
    %v5228 = vand.u32 %v3075, 4294901760
    %5229 = vmatprep.subr.mxu0 %v5228
    %v5230 = vand.u32 %v3074, 4294901760
    %5231 = vmatpush1.msra.mxu0 %v5230
    %v5232 = vand.u32 %v3077, 4294901760
    %5233 = vmatprep.subr.mxu0 %v5232
    %v5234 = vand.u32 %v3076, 4294901760
    %5235 = vmatpush1.msra.mxu0 %v5234
    %v5236 = vand.u32 %v3079, 4294901760
    %5237 = vmatprep.subr.mxu0 %v5236
    %v5238 = vand.u32 %v3078, 4294901760
    %5239 = vmatpush1.msra.mxu0 %v5238
    %v5240 = vand.u32 %v3081, 4294901760
    %5241 = vmatprep.subr.mxu0 %v5240
    %v5242 = vand.u32 %v3080, 4294901760
    %5243 = vmatpush1.msra.mxu0 %v5242
    %v5244 = vand.u32 %v3083, 4294901760
    %5245 = vmatprep.subr.mxu0 %v5244
    %v5246 = vand.u32 %v3082, 4294901760
    %5247 = vmatpush1.msra.mxu0 %v5246
    %v5248 = vand.u32 %v3085, 4294901760
    %5249 = vmatprep.subr.mxu0 %v5248
    %v5250 = vand.u32 %v3084, 4294901760
    %5251 = vmatpush1.msra.mxu0 %v5250
    %v5252 = vand.u32 %v3021, 4294901760
    %v5253 = vsub.f32 %v3021, %v5252
    %v5254 = vand.u32 %v5253, 4294901760
    %5255 = vmatprep.mubr.f32.mxu0 %v5254
    %v5256 = vand.u32 %v2811, 4294901760
    %v5257 = vsub.f32 %v2811, %v5256
    %v5258 = vand.u32 %v5257, 4294901760
    %5259 = vmatmul.mubr.f32.gmra.mrb[0].mxu0 %v5258
    %v5260 = vpop.f32.mrb[0].mxu0
    %v5261 = vadd.f32 %v5120, %v5260
    %v5262 = vpop.f32.mrb[0].mxu0
    %v5263 = vadd.f32 %v5122, %v5262
    %5264 = vdwg.mxu0
    %v5265 = vand.u32 %v3023, 4294901760
    %v5266 = vsub.f32 %v3023, %v5265
    %v5267 = vand.u32 %v5266, 4294901760
    %5268 = vmatprep.subr.mxu0 %v5267
    %v5269 = vand.u32 %v3022, 4294901760
    %v5270 = vsub.f32 %v3022, %v5269
    %v5271 = vand.u32 %v5270, 4294901760
    %5272 = vmatpush1.msra.mxu0 %v5271
    %v5273 = vand.u32 %v3025, 4294901760
    %v5274 = vsub.f32 %v3025, %v5273
    %v5275 = vand.u32 %v5274, 4294901760
    %5276 = vmatprep.subr.mxu0 %v5275
    %v5277 = vand.u32 %v3024, 4294901760
    %v5278 = vsub.f32 %v3024, %v5277
    %v5279 = vand.u32 %v5278, 4294901760
    %5280 = vmatpush1.msra.mxu0 %v5279
    %v5281 = vand.u32 %v3027, 4294901760
    %v5282 = vsub.f32 %v3027, %v5281
    %v5283 = vand.u32 %v5282, 4294901760
    %5284 = vmatprep.subr.mxu0 %v5283
    %v5285 = vand.u32 %v3026, 4294901760
    %v5286 = vsub.f32 %v3026, %v5285
    %v5287 = vand.u32 %v5286, 4294901760
    %5288 = vmatpush1.msra.mxu0 %v5287
    %v5289 = vand.u32 %v3029, 4294901760
    %v5290 = vsub.f32 %v3029, %v5289
    %v5291 = vand.u32 %v5290, 4294901760
    %5292 = vmatprep.subr.mxu0 %v5291
    %v5293 = vand.u32 %v3028, 4294901760
    %v5294 = vsub.f32 %v3028, %v5293
    %v5295 = vand.u32 %v5294, 4294901760
    %5296 = vmatpush1.msra.mxu0 %v5295
    %v5297 = vand.u32 %v3031, 4294901760
    %v5298 = vsub.f32 %v3031, %v5297
    %v5299 = vand.u32 %v5298, 4294901760
    %5300 = vmatprep.subr.mxu0 %v5299
    %v5301 = vand.u32 %v3030, 4294901760
    %v5302 = vsub.f32 %v3030, %v5301
    %v5303 = vand.u32 %v5302, 4294901760
    %5304 = vmatpush1.msra.mxu0 %v5303
    %v5305 = vand.u32 %v3033, 4294901760
    %v5306 = vsub.f32 %v3033, %v5305
    %v5307 = vand.u32 %v5306, 4294901760
    %5308 = vmatprep.subr.mxu0 %v5307
    %v5309 = vand.u32 %v3032, 4294901760
    %v5310 = vsub.f32 %v3032, %v5309
    %v5311 = vand.u32 %v5310, 4294901760
    %5312 = vmatpush1.msra.mxu0 %v5311
    %v5313 = vand.u32 %v3035, 4294901760
    %v5314 = vsub.f32 %v3035, %v5313
    %v5315 = vand.u32 %v5314, 4294901760
    %5316 = vmatprep.subr.mxu0 %v5315
    %v5317 = vand.u32 %v3034, 4294901760
    %v5318 = vsub.f32 %v3034, %v5317
    %v5319 = vand.u32 %v5318, 4294901760
    %5320 = vmatpush1.msra.mxu0 %v5319
    %v5321 = vand.u32 %v3037, 4294901760
    %v5322 = vsub.f32 %v3037, %v5321
    %v5323 = vand.u32 %v5322, 4294901760
    %5324 = vmatprep.subr.mxu0 %v5323
    %v5325 = vand.u32 %v3036, 4294901760
    %v5326 = vsub.f32 %v3036, %v5325
    %v5327 = vand.u32 %v5326, 4294901760
    %5328 = vmatpush1.msra.mxu0 %v5327
    %v5329 = vand.u32 %v3039, 4294901760
    %v5330 = vsub.f32 %v3039, %v5329
    %v5331 = vand.u32 %v5330, 4294901760
    %5332 = vmatprep.subr.mxu0 %v5331
    %v5333 = vand.u32 %v3038, 4294901760
    %v5334 = vsub.f32 %v3038, %v5333
    %v5335 = vand.u32 %v5334, 4294901760
    %5336 = vmatpush1.msra.mxu0 %v5335
    %v5337 = vand.u32 %v3041, 4294901760
    %v5338 = vsub.f32 %v3041, %v5337
    %v5339 = vand.u32 %v5338, 4294901760
    %5340 = vmatprep.subr.mxu0 %v5339
    %v5341 = vand.u32 %v3040, 4294901760
    %v5342 = vsub.f32 %v3040, %v5341
    %v5343 = vand.u32 %v5342, 4294901760
    %5344 = vmatpush1.msra.mxu0 %v5343
    %v5345 = vand.u32 %v3043, 4294901760
    %v5346 = vsub.f32 %v3043, %v5345
    %v5347 = vand.u32 %v5346, 4294901760
    %5348 = vmatprep.subr.mxu0 %v5347
    %v5349 = vand.u32 %v3042, 4294901760
    %v5350 = vsub.f32 %v3042, %v5349
    %v5351 = vand.u32 %v5350, 4294901760
    %5352 = vmatpush1.msra.mxu0 %v5351
    %v5353 = vand.u32 %v3045, 4294901760
    %v5354 = vsub.f32 %v3045, %v5353
    %v5355 = vand.u32 %v5354, 4294901760
    %5356 = vmatprep.subr.mxu0 %v5355
    %v5357 = vand.u32 %v3044, 4294901760
    %v5358 = vsub.f32 %v3044, %v5357
    %v5359 = vand.u32 %v5358, 4294901760
    %5360 = vmatpush1.msra.mxu0 %v5359
    %v5361 = vand.u32 %v3047, 4294901760
    %v5362 = vsub.f32 %v3047, %v5361
    %v5363 = vand.u32 %v5362, 4294901760
    %5364 = vmatprep.subr.mxu0 %v5363
    %v5365 = vand.u32 %v3046, 4294901760
    %v5366 = vsub.f32 %v3046, %v5365
    %v5367 = vand.u32 %v5366, 4294901760
    %5368 = vmatpush1.msra.mxu0 %v5367
    %v5369 = vand.u32 %v3049, 4294901760
    %v5370 = vsub.f32 %v3049, %v5369
    %v5371 = vand.u32 %v5370, 4294901760
    %5372 = vmatprep.subr.mxu0 %v5371
    %v5373 = vand.u32 %v3048, 4294901760
    %v5374 = vsub.f32 %v3048, %v5373
    %v5375 = vand.u32 %v5374, 4294901760
    %5376 = vmatpush1.msra.mxu0 %v5375
    %v5377 = vand.u32 %v3051, 4294901760
    %v5378 = vsub.f32 %v3051, %v5377
    %v5379 = vand.u32 %v5378, 4294901760
    %5380 = vmatprep.subr.mxu0 %v5379
    %v5381 = vand.u32 %v3050, 4294901760
    %v5382 = vsub.f32 %v3050, %v5381
    %v5383 = vand.u32 %v5382, 4294901760
    %5384 = vmatpush1.msra.mxu0 %v5383
    %v5385 = vand.u32 %v3053, 4294901760
    %v5386 = vsub.f32 %v3053, %v5385
    %v5387 = vand.u32 %v5386, 4294901760
    %5388 = vmatprep.subr.mxu0 %v5387
    %v5389 = vand.u32 %v3052, 4294901760
    %v5390 = vsub.f32 %v3052, %v5389
    %v5391 = vand.u32 %v5390, 4294901760
    %5392 = vmatpush1.msra.mxu0 %v5391
    %v5393 = vand.u32 %v3055, 4294901760
    %v5394 = vsub.f32 %v3055, %v5393
    %v5395 = vand.u32 %v5394, 4294901760
    %5396 = vmatprep.subr.mxu0 %v5395
    %v5397 = vand.u32 %v3054, 4294901760
    %v5398 = vsub.f32 %v3054, %v5397
    %v5399 = vand.u32 %v5398, 4294901760
    %5400 = vmatpush1.msra.mxu0 %v5399
    %v5401 = vand.u32 %v3057, 4294901760
    %v5402 = vsub.f32 %v3057, %v5401
    %v5403 = vand.u32 %v5402, 4294901760
    %5404 = vmatprep.subr.mxu0 %v5403
    %v5405 = vand.u32 %v3056, 4294901760
    %v5406 = vsub.f32 %v3056, %v5405
    %v5407 = vand.u32 %v5406, 4294901760
    %5408 = vmatpush1.msra.mxu0 %v5407
    %v5409 = vand.u32 %v3059, 4294901760
    %v5410 = vsub.f32 %v3059, %v5409
    %v5411 = vand.u32 %v5410, 4294901760
    %5412 = vmatprep.subr.mxu0 %v5411
    %v5413 = vand.u32 %v3058, 4294901760
    %v5414 = vsub.f32 %v3058, %v5413
    %v5415 = vand.u32 %v5414, 4294901760
    %5416 = vmatpush1.msra.mxu0 %v5415
    %v5417 = vand.u32 %v3061, 4294901760
    %v5418 = vsub.f32 %v3061, %v5417
    %v5419 = vand.u32 %v5418, 4294901760
    %5420 = vmatprep.subr.mxu0 %v5419
    %v5421 = vand.u32 %v3060, 4294901760
    %v5422 = vsub.f32 %v3060, %v5421
    %v5423 = vand.u32 %v5422, 4294901760
    %5424 = vmatpush1.msra.mxu0 %v5423
    %v5425 = vand.u32 %v3063, 4294901760
    %v5426 = vsub.f32 %v3063, %v5425
    %v5427 = vand.u32 %v5426, 4294901760
    %5428 = vmatprep.subr.mxu0 %v5427
    %v5429 = vand.u32 %v3062, 4294901760
    %v5430 = vsub.f32 %v3062, %v5429
    %v5431 = vand.u32 %v5430, 4294901760
    %5432 = vmatpush1.msra.mxu0 %v5431
    %v5433 = vand.u32 %v3065, 4294901760
    %v5434 = vsub.f32 %v3065, %v5433
    %v5435 = vand.u32 %v5434, 4294901760
    %5436 = vmatprep.subr.mxu0 %v5435
    %v5437 = vand.u32 %v3064, 4294901760
    %v5438 = vsub.f32 %v3064, %v5437
    %v5439 = vand.u32 %v5438, 4294901760
    %5440 = vmatpush1.msra.mxu0 %v5439
    %v5441 = vand.u32 %v3067, 4294901760
    %v5442 = vsub.f32 %v3067, %v5441
    %v5443 = vand.u32 %v5442, 4294901760
    %5444 = vmatprep.subr.mxu0 %v5443
    %v5445 = vand.u32 %v3066, 4294901760
    %v5446 = vsub.f32 %v3066, %v5445
    %v5447 = vand.u32 %v5446, 4294901760
    %5448 = vmatpush1.msra.mxu0 %v5447
    %v5449 = vand.u32 %v3069, 4294901760
    %v5450 = vsub.f32 %v3069, %v5449
    %v5451 = vand.u32 %v5450, 4294901760
    %5452 = vmatprep.subr.mxu0 %v5451
    %v5453 = vand.u32 %v3068, 4294901760
    %v5454 = vsub.f32 %v3068, %v5453
    %v5455 = vand.u32 %v5454, 4294901760
    %5456 = vmatpush1.msra.mxu0 %v5455
    %v5457 = vand.u32 %v3071, 4294901760
    %v5458 = vsub.f32 %v3071, %v5457
    %v5459 = vand.u32 %v5458, 4294901760
    %5460 = vmatprep.subr.mxu0 %v5459
    %v5461 = vand.u32 %v3070, 4294901760
    %v5462 = vsub.f32 %v3070, %v5461
    %v5463 = vand.u32 %v5462, 4294901760
    %5464 = vmatpush1.msra.mxu0 %v5463
    %v5465 = vand.u32 %v3073, 4294901760
    %v5466 = vsub.f32 %v3073, %v5465
    %v5467 = vand.u32 %v5466, 4294901760
    %5468 = vmatprep.subr.mxu0 %v5467
    %v5469 = vand.u32 %v3072, 4294901760
    %v5470 = vsub.f32 %v3072, %v5469
    %v5471 = vand.u32 %v5470, 4294901760
    %5472 = vmatpush1.msra.mxu0 %v5471
    %v5473 = vand.u32 %v3075, 4294901760
    %v5474 = vsub.f32 %v3075, %v5473
    %v5475 = vand.u32 %v5474, 4294901760
    %5476 = vmatprep.subr.mxu0 %v5475
    %v5477 = vand.u32 %v3074, 4294901760
    %v5478 = vsub.f32 %v3074, %v5477
    %v5479 = vand.u32 %v5478, 4294901760
    %5480 = vmatpush1.msra.mxu0 %v5479
    %v5481 = vand.u32 %v3077, 4294901760
    %v5482 = vsub.f32 %v3077, %v5481
    %v5483 = vand.u32 %v5482, 4294901760
    %5484 = vmatprep.subr.mxu0 %v5483
    %v5485 = vand.u32 %v3076, 4294901760
    %v5486 = vsub.f32 %v3076, %v5485
    %v5487 = vand.u32 %v5486, 4294901760
    %5488 = vmatpush1.msra.mxu0 %v5487
    %v5489 = vand.u32 %v3079, 4294901760
    %v5490 = vsub.f32 %v3079, %v5489
    %v5491 = vand.u32 %v5490, 4294901760
    %5492 = vmatprep.subr.mxu0 %v5491
    %v5493 = vand.u32 %v3078, 4294901760
    %v5494 = vsub.f32 %v3078, %v5493
    %v5495 = vand.u32 %v5494, 4294901760
    %5496 = vmatpush1.msra.mxu0 %v5495
    %v5497 = vand.u32 %v3081, 4294901760
    %v5498 = vsub.f32 %v3081, %v5497
    %v5499 = vand.u32 %v5498, 4294901760
    %5500 = vmatprep.subr.mxu0 %v5499
    %v5501 = vand.u32 %v3080, 4294901760
    %v5502 = vsub.f32 %v3080, %v5501
    %v5503 = vand.u32 %v5502, 4294901760
    %5504 = vmatpush1.msra.mxu0 %v5503
    %v5505 = vand.u32 %v3083, 4294901760
    %v5506 = vsub.f32 %v3083, %v5505
    %v5507 = vand.u32 %v5506, 4294901760
    %5508 = vmatprep.subr.mxu0 %v5507
    %v5509 = vand.u32 %v3082, 4294901760
    %v5510 = vsub.f32 %v3082, %v5509
    %v5511 = vand.u32 %v5510, 4294901760
    %5512 = vmatpush1.msra.mxu0 %v5511
    %v5513 = vand.u32 %v3085, 4294901760
    %v5514 = vsub.f32 %v3085, %v5513
    %v5515 = vand.u32 %v5514, 4294901760
    %5516 = vmatprep.subr.mxu0 %v5515
    %v5517 = vand.u32 %v3084, 4294901760
    %v5518 = vsub.f32 %v3084, %v5517
    %v5519 = vand.u32 %v5518, 4294901760
    %5520 = vmatpush1.msra.mxu0 %v5519
    %v5521 = vand.u32 %v3021, 4294901760
    %5522 = vmatprep.mubr.f32.mxu0 %v5521
    %v5523 = vand.u32 %v2811, 4294901760
    %5524 = vmatmul.mubr.f32.gmra.mrb[0].mxu0 %v5523
    %v5525 = vpop.f32.mrb[0].mxu0
    %v5526 = vadd.f32 %v5261, %v5525
    %v5527 = vpop.f32.mrb[0].mxu0
    %v5528 = vadd.f32 %v5263, %v5527
    %5529 = vdwg.mxu0
    %v5530 = vand.u32 %v3023, 4294901760
    %5531 = vmatprep.subr.mxu0 %v5530
    %v5532 = vand.u32 %v3022, 4294901760
    %5533 = vmatpush1.msra.mxu0 %v5532
    %v5534 = vand.u32 %v3025, 4294901760
    %5535 = vmatprep.subr.mxu0 %v5534
    %v5536 = vand.u32 %v3024, 4294901760
    %5537 = vmatpush1.msra.mxu0 %v5536
    %v5538 = vand.u32 %v3027, 4294901760
    %5539 = vmatprep.subr.mxu0 %v5538
    %v5540 = vand.u32 %v3026, 4294901760
    %5541 = vmatpush1.msra.mxu0 %v5540
    %v5542 = vand.u32 %v3029, 4294901760
    %5543 = vmatprep.subr.mxu0 %v5542
    %v5544 = vand.u32 %v3028, 4294901760
    %5545 = vmatpush1.msra.mxu0 %v5544
    %v5546 = vand.u32 %v3031, 4294901760
    %5547 = vmatprep.subr.mxu0 %v5546
    %v5548 = vand.u32 %v3030, 4294901760
    %5549 = vmatpush1.msra.mxu0 %v5548
    %v5550 = vand.u32 %v3033, 4294901760
    %5551 = vmatprep.subr.mxu0 %v5550
    %v5552 = vand.u32 %v3032, 4294901760
    %5553 = vmatpush1.msra.mxu0 %v5552
    %v5554 = vand.u32 %v3035, 4294901760
    %5555 = vmatprep.subr.mxu0 %v5554
    %v5556 = vand.u32 %v3034, 4294901760
    %5557 = vmatpush1.msra.mxu0 %v5556
    %v5558 = vand.u32 %v3037, 4294901760
    %5559 = vmatprep.subr.mxu0 %v5558
    %v5560 = vand.u32 %v3036, 4294901760
    %5561 = vmatpush1.msra.mxu0 %v5560
    %v5562 = vand.u32 %v3039, 4294901760
    %5563 = vmatprep.subr.mxu0 %v5562
    %v5564 = vand.u32 %v3038, 4294901760
    %5565 = vmatpush1.msra.mxu0 %v5564
    %v5566 = vand.u32 %v3041, 4294901760
    %5567 = vmatprep.subr.mxu0 %v5566
    %v5568 = vand.u32 %v3040, 4294901760
    %5569 = vmatpush1.msra.mxu0 %v5568
    %v5570 = vand.u32 %v3043, 4294901760
    %5571 = vmatprep.subr.mxu0 %v5570
    %v5572 = vand.u32 %v3042, 4294901760
    %5573 = vmatpush1.msra.mxu0 %v5572
    %v5574 = vand.u32 %v3045, 4294901760
    %5575 = vmatprep.subr.mxu0 %v5574
    %v5576 = vand.u32 %v3044, 4294901760
    %5577 = vmatpush1.msra.mxu0 %v5576
    %v5578 = vand.u32 %v3047, 4294901760
    %5579 = vmatprep.subr.mxu0 %v5578
    %v5580 = vand.u32 %v3046, 4294901760
    %5581 = vmatpush1.msra.mxu0 %v5580
    %v5582 = vand.u32 %v3049, 4294901760
    %5583 = vmatprep.subr.mxu0 %v5582
    %v5584 = vand.u32 %v3048, 4294901760
    %5585 = vmatpush1.msra.mxu0 %v5584
    %v5586 = vand.u32 %v3051, 4294901760
    %5587 = vmatprep.subr.mxu0 %v5586
    %v5588 = vand.u32 %v3050, 4294901760
    %5589 = vmatpush1.msra.mxu0 %v5588
    %v5590 = vand.u32 %v3053, 4294901760
    %5591 = vmatprep.subr.mxu0 %v5590
    %v5592 = vand.u32 %v3052, 4294901760
    %5593 = vmatpush1.msra.mxu0 %v5592
    %v5594 = vand.u32 %v3055, 4294901760
    %5595 = vmatprep.subr.mxu0 %v5594
    %v5596 = vand.u32 %v3054, 4294901760
    %5597 = vmatpush1.msra.mxu0 %v5596
    %v5598 = vand.u32 %v3057, 4294901760
    %5599 = vmatprep.subr.mxu0 %v5598
    %v5600 = vand.u32 %v3056, 4294901760
    %5601 = vmatpush1.msra.mxu0 %v5600
    %v5602 = vand.u32 %v3059, 4294901760
    %5603 = vmatprep.subr.mxu0 %v5602
    %v5604 = vand.u32 %v3058, 4294901760
    %5605 = vmatpush1.msra.mxu0 %v5604
    %v5606 = vand.u32 %v3061, 4294901760
    %5607 = vmatprep.subr.mxu0 %v5606
    %v5608 = vand.u32 %v3060, 4294901760
    %5609 = vmatpush1.msra.mxu0 %v5608
    %v5610 = vand.u32 %v3063, 4294901760
    %5611 = vmatprep.subr.mxu0 %v5610
    %v5612 = vand.u32 %v3062, 4294901760
    %5613 = vmatpush1.msra.mxu0 %v5612
    %v5614 = vand.u32 %v3065, 4294901760
    %5615 = vmatprep.subr.mxu0 %v5614
    %v5616 = vand.u32 %v3064, 4294901760
    %5617 = vmatpush1.msra.mxu0 %v5616
    %v5618 = vand.u32 %v3067, 4294901760
    %5619 = vmatprep.subr.mxu0 %v5618
    %v5620 = vand.u32 %v3066, 4294901760
    %5621 = vmatpush1.msra.mxu0 %v5620
    %v5622 = vand.u32 %v3069, 4294901760
    %5623 = vmatprep.subr.mxu0 %v5622
    %v5624 = vand.u32 %v3068, 4294901760
    %5625 = vmatpush1.msra.mxu0 %v5624
    %v5626 = vand.u32 %v3071, 4294901760
    %5627 = vmatprep.subr.mxu0 %v5626
    %v5628 = vand.u32 %v3070, 4294901760
    %5629 = vmatpush1.msra.mxu0 %v5628
    %v5630 = vand.u32 %v3073, 4294901760
    %5631 = vmatprep.subr.mxu0 %v5630
    %v5632 = vand.u32 %v3072, 4294901760
    %5633 = vmatpush1.msra.mxu0 %v5632
    %v5634 = vand.u32 %v3075, 4294901760
    %5635 = vmatprep.subr.mxu0 %v5634
    %v5636 = vand.u32 %v3074, 4294901760
    %5637 = vmatpush1.msra.mxu0 %v5636
    %v5638 = vand.u32 %v3077, 4294901760
    %5639 = vmatprep.subr.mxu0 %v5638
    %v5640 = vand.u32 %v3076, 4294901760
    %5641 = vmatpush1.msra.mxu0 %v5640
    %v5642 = vand.u32 %v3079, 4294901760
    %5643 = vmatprep.subr.mxu0 %v5642
    %v5644 = vand.u32 %v3078, 4294901760
    %5645 = vmatpush1.msra.mxu0 %v5644
    %v5646 = vand.u32 %v3081, 4294901760
    %5647 = vmatprep.subr.mxu0 %v5646
    %v5648 = vand.u32 %v3080, 4294901760
    %5649 = vmatpush1.msra.mxu0 %v5648
    %v5650 = vand.u32 %v3083, 4294901760
    %5651 = vmatprep.subr.mxu0 %v5650
    %v5652 = vand.u32 %v3082, 4294901760
    %5653 = vmatpush1.msra.mxu0 %v5652
    %v5654 = vand.u32 %v3085, 4294901760
    %5655 = vmatprep.subr.mxu0 %v5654
    %v5656 = vand.u32 %v3084, 4294901760
    %5657 = vmatpush1.msra.mxu0 %v5656
    %v5658 = vand.u32 %v3021, 4294901760
    %5659 = vmatprep.mubr.f32.mxu0 %v5658
    %v5660 = vand.u32 %v2811, 4294901760
    %5661 = vmatmul.mubr.f32.gmra.mrb[0].mxu0 %v5660
    %v5662 = vpop.f32.mrb[0].mxu0
    %v5663 = vadd.f32 %v5526, %v5662
    %v5664 = vpop.f32.mrb[0].mxu0
    %v5665 = vadd.f32 %v5528, %v5664
    %5666 = vdwg.mxu0
    %v5667 = vmul.f32 %v5663, 0.0078125
    %v5668 = vmul.f32 %v5665, 0.0078125
    %v5669 = vmul.f32 %v5667, %v5667
    %v5670 = vmul.f32 %v5668, %v5668
    %v5671 = vadd.f32 %v5669, %v5670
    %v5672 = vrsqrt.pop %v5671
    %v5673 = vmul.f32 %v5671, %v5672
    %vm5674 = vcmp.eq.f32.partialorder %v5671, inf
    %v5675 = vsel %vm5674, %v5671, %v5673
    %vm5676 = vcmp.eq.f32.partialorder %v5671, 0.0
    %v5677 = vand.u32 %v5671, 2147483648
    %v5678 = vsel %vm5676, %v5677, %v5675
    %s5679 = scalar_lea.vmem [#allocation7], 8
    %5680 = vst [vmem:[%s5679] sm:$0xff] %v5678
    // Predicated region
    $region54: #{tpu_custom_call.1} parent=1 // pred_check
      _
    $region55: #{tpu_custom_call.1} parent=1 // pred_check_branch
      %5682 = sbr.rel (0) target = $region57
    $region56: #{tpu_custom_call.1} parent=1 // pred_region
      %s5684 = ssub.s32 256, 256
      %5685 = vsyncadd [#allocation4], %s5684
      %s5686 = sshll.u32 [#allocation7], 4
      %s5687 = int_to_ptr.vmem [resolvable:$true] %s5686
      %5692 = dma.vmem_to_hbm [thread:$0]  %s5687, 256, %s11, [#allocation4], 128, 128, 8
    $region57: #{tpu_custom_call.1} parent=1 // pred_fallthru
      _
    // Predicated region
    $region58: #{tpu_custom_call.1} parent=1 // pred_check
      _
    $region59: #{tpu_custom_call.1} parent=1 // pred_check_branch
      %5694 = sbr.rel (0) target = $region61
    $region60: #{tpu_custom_call.1} parent=1 // pred_region
      %5695 = dma.done [#allocation4], 256
    $region61: #{tpu_custom_call.1} parent=1 // pred_fallthru
      _
    %5696 = vsyncpa [#allocation3], 1
    %5697 = vsyncpa [#allocation6], 1
    %5698 = vsyncpa [#allocation4], 1

</llo_original>
